<compile_context>
chip_gen: v7x
topology: tpu7x:2x2x1
jax: 0.10.0
libtpu: 0.0.40
codegen_flags: <defaults>
</compile_context>

<pallas_src>
import functools

import jax
import jax.numpy as jnp
from jax.experimental import pallas as pl
from jax.experimental.pallas import tpu as pltpu


def _gelu_exact(x):
    # exact (erf-based) GELU, matching torch.nn.GELU() default
    inv_sqrt2 = jnp.float32(0.7071067811865476)
    return 0.5 * x * (1.0 + jax.lax.erf(x * inv_sqrt2))


def fan_gated_kernel(x_ref, w_emb_ref, b_emb_ref,
                     w1_ref, b1_ref,
                     w2g_ref, w2t_ref, b2_ref,
                     wfg_ref, wft_ref, bf_ref, out_ref,
                     *, g_dim, final_reduce):
    f32 = jnp.float32
    hi = jax.lax.Precision.HIGHEST

    x = x_ref[...]
    if x_ref.shape[1] == 1:
        # K=1 "matmul" is an outer product: VPU broadcast multiply, no MXU pass.
        h = x * w_emb_ref[...] + b_emb_ref[...]
    else:
        h = jnp.dot(x, w_emb_ref[...], preferred_element_type=f32,
                    precision=hi) + b_emb_ref[...]

    # ---- FAN layer 1: one fused matmul, columns [wg | wp | wp - pi/2 bias] ----
    pg1 = jnp.dot(h, w1_ref[...], preferred_element_type=f32,
                  precision=hi) + b1_ref[...]
    g1 = _gelu_exact(pg1[:, :g_dim])
    t1 = jnp.cos(pg1[:, g_dim:])          # lanes are [cos(p1) | sin(p1)]

    # ---- FAN layer 2: split consumer dot (layer-1 gate folded into w2g/w2t),
    #      no concatenate, no gate multiplies ----
    pg2 = (jnp.dot(g1, w2g_ref[...], preferred_element_type=f32, precision=hi)
           + jnp.dot(t1, w2t_ref[...], preferred_element_type=f32, precision=hi)
           + b2_ref[...])
    g2 = _gelu_exact(pg2[:, :g_dim])
    t2 = jnp.cos(pg2[:, g_dim:])          # [cos(p2) | sin(p2)]

    # ---- output projection (layer-2 gate folded into wfg/wft) ----
    if final_reduce:
        # out_dim == 1: N=1 matmul wastes the MXU; VPU multiply + lane reduce.
        out = (jnp.sum(g2 * wfg_ref[...], axis=-1, keepdims=True)
               + jnp.sum(t2 * wft_ref[...], axis=-1, keepdims=True)
               + bf_ref[...])
    else:
        out = (jnp.dot(g2, wfg_ref[...], preferred_element_type=f32, precision=hi)
               + jnp.dot(t2, wft_ref[...], preferred_element_type=f32, precision=hi)
               + bf_ref[...])
    out_ref[...] = out.astype(out_ref.dtype)


def _pack_params(params):
    """One-time host-side fusion / permutation / gate-folding of the params."""
    (w_emb, b_emb,
     wp1, bp1, wg1, bg1, gate1,
     wp2, bp2, wg2, bg2, gate2,
     wf, bf) = params

    hidden = w_emb.shape[1]
    p_dim = hidden // 4
    g_dim = hidden - hidden // 2
    half_pi = jnp.float32(jnp.pi / 2)

    s1 = jax.nn.sigmoid(gate1[0, 0])
    s2 = jax.nn.sigmoid(gate2[0, 0])

    # Layer 1 fused projection: columns [wg | wp | wp], bias [bg | bp | bp-pi/2],
    # so cos() of the last 2*p_dim lanes directly yields [cos(p) | sin(p)].
    w1 = jnp.concatenate([wg1, wp1, wp1], axis=1)
    b1 = jnp.concatenate([bg1, bp1, bp1 - half_pi], axis=1)

    # Layer 2 fused projection, rows split by which layer-1 half feeds them.
    # PyTorch layer-1 output order is [cos | sin | g]; kernel order is [g | cos | sin]:
    #   rows [2*p_dim:]  <- g features       (scaled by 1 - sigmoid(gate1))
    #   rows [:2*p_dim]  <- [cos | sin]      (scaled by sigmoid(gate1))
    w2_full = jnp.concatenate([wg2, wp2, wp2], axis=1)
    b2 = jnp.concatenate([bg2, bp2, bp2 - half_pi], axis=1)
    w2g = (1.0 - s1) * w2_full[2 * p_dim:]          # (g_dim, hidden)
    w2t = s1 * w2_full[:2 * p_dim]                  # (2*p_dim, hidden)

    # Output projection rows split the same way, with layer-2's gate folded in.
    wf_g = (1.0 - s2) * wf[2 * p_dim:]              # (g_dim, out)
    wf_t = s2 * wf[:2 * p_dim]                      # (2*p_dim, out)

    out_dim = wf.shape[1]
    final_reduce = (out_dim == 1)
    if final_reduce:
        wf_g = wf_g.T                               # (1, g_dim) for VPU mul+reduce
        wf_t = wf_t.T                               # (1, 2*p_dim)

    return (w_emb, b_emb, w1, b1, w2g, w2t, b2, wf_g, wf_t, bf,
            g_dim, final_reduce)


def _choose_tile_b(batch, preferred=1024):
    """VMEM-aware, divisibility-free batch tile.

    Large tiles amortize the ~0.35 us per-grid-step overhead; cap at `preferred`
    so ~5 live (tile_b, hidden) f32 temporaries stay well under v5e's 16 MiB
    scoped-VMEM default (and v7x's 32 MiB).  Keep at least two grid steps so the
    "parallel" batch axis occupies both v7x TensorCores.
    """
    half = -(-batch // 2)                 # ceil(batch / 2)
    tile = max(8, min(preferred, half))
    tile = -(-tile // 8) * 8              # round up to a sublane multiple
    return tile


def fan_gated_forward(x, params, *, tile_b=None):
    (w_emb, b_emb, w1, b1, w2g, w2t, b2, wf_g, wf_t, bf,
     g_dim, final_reduce) = _pack_params(params)

    B, in_dim = x.shape
    out_dim = bf.shape[1]

    if tile_b is None:
        tile_b = _choose_tile_b(B)
    grid_n = pl.cdiv(B, tile_b)
    b_pad = grid_n * tile_b
    if b_pad != B:
        x = jnp.pad(x, ((0, b_pad - B), (0, 0)))    # padded rows are harmless

    def resident(arr):
        # full array, same block every grid step -> stays VMEM-resident
        return pl.BlockSpec(arr.shape, lambda i, _nd=arr.ndim: (0,) * _nd)

    in_specs = [
        pl.BlockSpec((tile_b, in_dim), lambda i: (i, 0)),   # x: pipelined batch tiles
        resident(w_emb), resident(b_emb),
        resident(w1), resident(b1),
        resident(w2g), resident(w2t), resident(b2),
        resident(wf_g), resident(wf_t), resident(bf),
    ]
    out_specs = pl.BlockSpec((tile_b, out_dim), lambda i: (i, 0))

    kernel = functools.partial(fan_gated_kernel,
                               g_dim=g_dim, final_reduce=final_reduce)

    out = pl.pallas_call(
        kernel,
        out_shape=jax.ShapeDtypeStruct((b_pad, out_dim), jnp.float32),
        grid=(grid_n,),
        in_specs=in_specs,
        out_specs=out_specs,
        compiler_params=pltpu.CompilerParams(
            dimension_semantics=("parallel",),   # v7x: shard batch steps across 2 TCs
        ),
    )(x, w_emb, b_emb, w1, b1, w2g, w2t, b2, wf_g, wf_t, bf)

    return out[:B] if b_pad != B else out


def init_params(key, input_dim, hidden_dim, output_dim):
    """Deterministic synthetic parameters matching FANGated(num_layers=3, gated=True)."""
    ks = jax.random.split(key, 16)
    p_dim = hidden_dim // 4
    g_dim = hidden_dim - hidden_dim // 2

    def lin(kw, kb, fan_in, fan_out):
        scale = 1.0 / jnp.sqrt(jnp.float32(fan_in))
        w = jax.random.normal(kw, (fan_in, fan_out), jnp.float32) * scale
        b = jax.random.normal(kb, (1, fan_out), jnp.float32) * scale
        return w, b

    w_emb, b_emb = lin(ks[0], ks[1], input_dim, hidden_dim)

    wp1, bp1 = lin(ks[2], ks[3], hidden_dim, p_dim)
    wg1, bg1 = lin(ks[4], ks[5], hidden_dim, g_dim)
    gate1 = jax.random.normal(ks[6], (1, 1), jnp.float32)

    wp2, bp2 = lin(ks[7], ks[8], hidden_dim, p_dim)
    wg2, bg2 = lin(ks[9], ks[10], hidden_dim, g_dim)
    gate2 = jax.random.normal(ks[11], (1, 1), jnp.float32)

    wf, bf = lin(ks[12], ks[13], hidden_dim, output_dim)

    return (w_emb, b_emb,
            wp1, bp1, wg1, bg1, gate1,
            wp2, bp2, wg2, bg2, gate2,
            wf, bf)


def fan_gated_reference(x, params):
    """Pure-JAX reference mirroring the PyTorch forward pass (original layout)."""
    (w_emb, b_emb,
     wp1, bp1, wg1, bg1, gate1,
     wp2, bp2, wg2, bg2, gate2,
     wf, bf) = params

    hi = jax.lax.Precision.HIGHEST

    def gelu(v):
        return 0.5 * v * (1.0 + jax.lax.erf(v / jnp.sqrt(jnp.float32(2.0))))

    def fan_layer(h, wp, bp, wg, bg, gate):
        p = jnp.dot(h, wp, precision=hi) + bp
        g = gelu(jnp.dot(h, wg, precision=hi) + bg)
        s = jax.nn.sigmoid(gate[0, 0])
        return jnp.concatenate([s * jnp.cos(p), s * jnp.sin(p), (1.0 - s) * g], axis=-1)

    h = jnp.dot(x, w_emb, precision=hi) + b_emb
    h = fan_layer(h, wp1, bp1, wg1, bg1, gate1)
    h = fan_layer(h, wp2, bp2, wg2, bg2, gate2)
    return jnp.dot(h, wf, precision=hi) + bf


if __name__ == "__main__":
    # Small config consistent with FANGated(input_dim=1, output_dim=1,
    # hidden_dim=256, num_layers=3, gated=True).
    INPUT_DIM, HIDDEN_DIM, OUTPUT_DIM = 1, 256, 1

    key = jax.random.PRNGKey(0)
    k_x, k_p, k_x2 = jax.random.split(key, 3)
    params = init_params(k_p, INPUT_DIM, HIDDEN_DIM, OUTPUT_DIM)

    # 1) even batch: auto tile picks tile_b=32 -> grid of 2 (exercises pipeline
    #    and the v7x two-TC "parallel" split).
    B1 = 64
    x1 = jax.random.normal(k_x, (B1, INPUT_DIM), jnp.float32)
    out1 = jax.block_until_ready(fan_gated_forward(x1, params))
    ref1 = fan_gated_reference(x1, params)
    assert out1.shape == (B1, OUTPUT_DIM)
    assert jnp.allclose(out1, ref1, rtol=1e-4, atol=1e-4)

    # 2) ragged batch: exercises the pad-and-slice path (no divisibility assert).
    B2 = 100
    x2 = jax.random.normal(k_x2, (B2, INPUT_DIM), jnp.float32)
    out2 = jax.block_until_ready(fan_gated_forward(x2, params))
    ref2 = fan_gated_reference(x2, params)
    assert out2.shape == (B2, OUTPUT_DIM)
    assert jnp.allclose(out2, ref2, rtol=1e-4, atol=1e-4)

    print("KERNEL_OK")
</pallas_src>

<mosaic_0001>
module attributes {stable_mosaic.version = 11 : i64} {
  func.func @fan_gated_kernel(%arg0: i32, %arg1: memref<32x1xf32, #tpu.memory_space<vmem>>, %arg2: memref<1x256xf32, #tpu.memory_space<vmem>>, %arg3: memref<1x256xf32, #tpu.memory_space<vmem>>, %arg4: memref<256x256xf32, #tpu.memory_space<vmem>>, %arg5: memref<1x256xf32, #tpu.memory_space<vmem>>, %arg6: memref<128x256xf32, #tpu.memory_space<vmem>>, %arg7: memref<128x256xf32, #tpu.memory_space<vmem>>, %arg8: memref<1x256xf32, #tpu.memory_space<vmem>>, %arg9: memref<1x128xf32, #tpu.memory_space<vmem>>, %arg10: memref<1x128xf32, #tpu.memory_space<vmem>>, %arg11: memref<1x1xf32, #tpu.memory_space<vmem>>, %arg12: memref<32x1xf32, #tpu.memory_space<vmem>>) attributes {dimension_semantics = [#tpu.dimension_semantics<parallel>], iteration_bounds = array<i64: 2>, scalar_prefetch = 0 : i64, scratch_operands = 0 : i64, tpu.core_type = #tpu.core_type<tc>, window_params = [{transform_indices = @transform_0, window_bounds = array<i64: 32, 1>}, {pipeline_mode = #tpu.pipeline_mode<synchronous>, transform_indices = @transform_1, window_bounds = array<i64: 1, 256>}, {pipeline_mode = #tpu.pipeline_mode<synchronous>, transform_indices = @transform_2, window_bounds = array<i64: 1, 256>}, {pipeline_mode = #tpu.pipeline_mode<synchronous>, transform_indices = @transform_3, window_bounds = array<i64: 256, 256>}, {pipeline_mode = #tpu.pipeline_mode<synchronous>, transform_indices = @transform_4, window_bounds = array<i64: 1, 256>}, {pipeline_mode = #tpu.pipeline_mode<synchronous>, transform_indices = @transform_5, window_bounds = array<i64: 128, 256>}, {pipeline_mode = #tpu.pipeline_mode<synchronous>, transform_indices = @transform_6, window_bounds = array<i64: 128, 256>}, {pipeline_mode = #tpu.pipeline_mode<synchronous>, transform_indices = @transform_7, window_bounds = array<i64: 1, 256>}, {pipeline_mode = #tpu.pipeline_mode<synchronous>, transform_indices = @transform_8, window_bounds = array<i64: 1, 128>}, {pipeline_mode = #tpu.pipeline_mode<synchronous>, transform_indices = @transform_9, window_bounds = array<i64: 1, 128>}, {pipeline_mode = #tpu.pipeline_mode<synchronous>, transform_indices = @transform_10, window_bounds = array<i64: 1, 1>}, {transform_indices = @transform_11, window_bounds = array<i64: 32, 1>}]} {
    %c0 = arith.constant 0 : index
    %c0_0 = arith.constant 0 : index
    %0 = vector.load %arg1[%c0, %c0_0] : memref<32x1xf32, #tpu.memory_space<vmem>>, vector<32x1xf32>
    %c0_1 = arith.constant 0 : index
    %c0_2 = arith.constant 0 : index
    %1 = vector.load %arg2[%c0_1, %c0_2] : memref<1x256xf32, #tpu.memory_space<vmem>>, vector<1x256xf32>
    %2 = vector.broadcast %0 : vector<32x1xf32> to vector<32x256xf32>
    %3 = vector.broadcast %1 : vector<1x256xf32> to vector<32x256xf32>
    %4 = arith.mulf %2, %3 : vector<32x256xf32>
    %c0_3 = arith.constant 0 : index
    %c0_4 = arith.constant 0 : index
    %5 = vector.load %arg3[%c0_3, %c0_4] : memref<1x256xf32, #tpu.memory_space<vmem>>, vector<1x256xf32>
    %6 = vector.broadcast %5 : vector<1x256xf32> to vector<32x256xf32>
    %7 = arith.addf %4, %6 : vector<32x256xf32>
    %c0_5 = arith.constant 0 : index
    %c0_6 = arith.constant 0 : index
    %8 = vector.load %arg4[%c0_5, %c0_6] : memref<256x256xf32, #tpu.memory_space<vmem>>, vector<256x256xf32>
    %cst = arith.constant dense<0.000000e+00> : vector<32x256xf32>
    %9 = tpu.matmul %7, %8, %cst {dimension_numbers = #tpu.dot_dimension_numbers<[1], [0], [0], [1], [0, 0, 1, 1], [], []>, precision = #tpu.contract_precision<fp32>} : vector<32x256xf32>, vector<256x256xf32>, vector<32x256xf32> -> vector<32x256xf32>
    %c0_7 = arith.constant 0 : index
    %c0_8 = arith.constant 0 : index
    %10 = vector.load %arg5[%c0_7, %c0_8] : memref<1x256xf32, #tpu.memory_space<vmem>>, vector<1x256xf32>
    %11 = vector.broadcast %10 : vector<1x256xf32> to vector<32x256xf32>
    %12 = arith.addf %9, %11 : vector<32x256xf32>
    %13 = vector.extract_strided_slice %12 {offsets = [0, 0], sizes = [32, 128], strides = [1, 1]} : vector<32x256xf32> to vector<32x128xf32>
    %cst_9 = arith.constant 5.000000e-01 : f32
    %14 = vector.broadcast %cst_9 : f32 to vector<32x128xf32>
    %15 = arith.mulf %14, %13 : vector<32x128xf32>
    %cst_10 = arith.constant 0.707106769 : f32
    %16 = vector.broadcast %cst_10 : f32 to vector<32x128xf32>
    %17 = arith.mulf %13, %16 : vector<32x128xf32>
    %18 = math.erf %17 : vector<32x128xf32>
    %cst_11 = arith.constant 1.000000e+00 : f32
    %19 = vector.broadcast %cst_11 : f32 to vector<32x128xf32>
    %20 = arith.addf %19, %18 : vector<32x128xf32>
    %21 = arith.mulf %15, %20 : vector<32x128xf32>
    %22 = vector.extract_strided_slice %12 {offsets = [0, 128], sizes = [32, 128], strides = [1, 1]} : vector<32x256xf32> to vector<32x128xf32>
    %23 = math.cos %22 : vector<32x128xf32>
    %c0_12 = arith.constant 0 : index
    %c0_13 = arith.constant 0 : index
    %24 = vector.load %arg6[%c0_12, %c0_13] : memref<128x256xf32, #tpu.memory_space<vmem>>, vector<128x256xf32>
    %cst_14 = arith.constant dense<0.000000e+00> : vector<32x256xf32>
    %25 = tpu.matmul %21, %24, %cst_14 {dimension_numbers = #tpu.dot_dimension_numbers<[1], [0], [0], [1], [0, 0, 1, 1], [], []>, precision = #tpu.contract_precision<fp32>} : vector<32x128xf32>, vector<128x256xf32>, vector<32x256xf32> -> vector<32x256xf32>
    %c0_15 = arith.constant 0 : index
    %c0_16 = arith.constant 0 : index
    %26 = vector.load %arg7[%c0_15, %c0_16] : memref<128x256xf32, #tpu.memory_space<vmem>>, vector<128x256xf32>
    %cst_17 = arith.constant dense<0.000000e+00> : vector<32x256xf32>
    %27 = tpu.matmul %23, %26, %cst_17 {dimension_numbers = #tpu.dot_dimension_numbers<[1], [0], [0], [1], [0, 0, 1, 1], [], []>, precision = #tpu.contract_precision<fp32>} : vector<32x128xf32>, vector<128x256xf32>, vector<32x256xf32> -> vector<32x256xf32>
    %28 = arith.addf %25, %27 : vector<32x256xf32>
    %c0_18 = arith.constant 0 : index
    %c0_19 = arith.constant 0 : index
    %29 = vector.load %arg8[%c0_18, %c0_19] : memref<1x256xf32, #tpu.memory_space<vmem>>, vector<1x256xf32>
    %30 = vector.broadcast %29 : vector<1x256xf32> to vector<32x256xf32>
    %31 = arith.addf %28, %30 : vector<32x256xf32>
    %32 = vector.extract_strided_slice %31 {offsets = [0, 0], sizes = [32, 128], strides = [1, 1]} : vector<32x256xf32> to vector<32x128xf32>
    %cst_20 = arith.constant 5.000000e-01 : f32
    %33 = vector.broadcast %cst_20 : f32 to vector<32x128xf32>
    %34 = arith.mulf %33, %32 : vector<32x128xf32>
    %cst_21 = arith.constant 0.707106769 : f32
    %35 = vector.broadcast %cst_21 : f32 to vector<32x128xf32>
    %36 = arith.mulf %32, %35 : vector<32x128xf32>
    %37 = math.erf %36 : vector<32x128xf32>
    %cst_22 = arith.constant 1.000000e+00 : f32
    %38 = vector.broadcast %cst_22 : f32 to vector<32x128xf32>
    %39 = arith.addf %38, %37 : vector<32x128xf32>
    %40 = arith.mulf %34, %39 : vector<32x128xf32>
    %41 = vector.extract_strided_slice %31 {offsets = [0, 128], sizes = [32, 128], strides = [1, 1]} : vector<32x256xf32> to vector<32x128xf32>
    %42 = math.cos %41 : vector<32x128xf32>
    %c0_23 = arith.constant 0 : index
    %c0_24 = arith.constant 0 : index
    %43 = vector.load %arg9[%c0_23, %c0_24] : memref<1x128xf32, #tpu.memory_space<vmem>>, vector<1x128xf32>
    %44 = vector.broadcast %43 : vector<1x128xf32> to vector<32x128xf32>
    %45 = arith.mulf %40, %44 : vector<32x128xf32>
    %cst_25 = arith.constant dense<0.000000e+00> : vector<32xf32>
    %46 = vector.multi_reduction <add>, %45, %cst_25 [1] : vector<32x128xf32> to vector<32xf32>
    %47 = vector.shape_cast %46 : vector<32xf32> to vector<32x1xf32>
    %c0_26 = arith.constant 0 : index
    %c0_27 = arith.constant 0 : index
    %48 = vector.load %arg10[%c0_26, %c0_27] : memref<1x128xf32, #tpu.memory_space<vmem>>, vector<1x128xf32>
    %49 = vector.broadcast %48 : vector<1x128xf32> to vector<32x128xf32>
    %50 = arith.mulf %42, %49 : vector<32x128xf32>
    %cst_28 = arith.constant dense<0.000000e+00> : vector<32xf32>
    %51 = vector.multi_reduction <add>, %50, %cst_28 [1] : vector<32x128xf32> to vector<32xf32>
    %52 = vector.shape_cast %51 : vector<32xf32> to vector<32x1xf32>
    %53 = arith.addf %47, %52 : vector<32x1xf32>
    %c0_29 = arith.constant 0 : index
    %c0_30 = arith.constant 0 : index
    %54 = vector.load %arg11[%c0_29, %c0_30] : memref<1x1xf32, #tpu.memory_space<vmem>>, vector<1x1xf32>
    %55 = vector.broadcast %54 : vector<1x1xf32> to vector<32x1xf32>
    %56 = arith.addf %53, %55 : vector<32x1xf32>
    %c0_31 = arith.constant 0 : index
    %c0_32 = arith.constant 0 : index
    %57 = vector.load %arg12[%c0_31, %c0_32] : memref<32x1xf32, #tpu.memory_space<vmem>>, vector<32x1xf32>
    tpu.vector_store %arg12[%c0_31, %c0_32], %56 {strides = array<i32>} : memref<32x1xf32, #tpu.memory_space<vmem>>, vector<32x1xf32>,
    return
  }
  func.func @transform_0(%arg0: i32) -> (i32, i32) {
    %c0_i32 = arith.constant 0 : i32
    %c0_i32_0 = arith.constant 0 : i32
    return %arg0, %c0_i32 : i32, i32
  }
  func.func @transform_1(%arg0: i32) -> (i32, i32) {
    %c0_i32 = arith.constant 0 : i32
    %c0_i32_0 = arith.constant 0 : i32
    %c0_i32_1 = arith.constant 0 : i32
    return %c0_i32, %c0_i32_0 : i32, i32
  }
  func.func @transform_2(%arg0: i32) -> (i32, i32) {
    %c0_i32 = arith.constant 0 : i32
    %c0_i32_0 = arith.constant 0 : i32
    %c0_i32_1 = arith.constant 0 : i32
    return %c0_i32, %c0_i32_0 : i32, i32
  }
  func.func @transform_3(%arg0: i32) -> (i32, i32) {
    %c0_i32 = arith.constant 0 : i32
    %c0_i32_0 = arith.constant 0 : i32
    %c0_i32_1 = arith.constant 0 : i32
    return %c0_i32, %c0_i32_0 : i32, i32
  }
  func.func @transform_4(%arg0: i32) -> (i32, i32) {
    %c0_i32 = arith.constant 0 : i32
    %c0_i32_0 = arith.constant 0 : i32
    %c0_i32_1 = arith.constant 0 : i32
    return %c0_i32, %c0_i32_0 : i32, i32
  }
  func.func @transform_5(%arg0: i32) -> (i32, i32) {
    %c0_i32 = arith.constant 0 : i32
    %c0_i32_0 = arith.constant 0 : i32
    %c0_i32_1 = arith.constant 0 : i32
    return %c0_i32, %c0_i32_0 : i32, i32
  }
  func.func @transform_6(%arg0: i32) -> (i32, i32) {
    %c0_i32 = arith.constant 0 : i32
    %c0_i32_0 = arith.constant 0 : i32
    %c0_i32_1 = arith.constant 0 : i32
    return %c0_i32, %c0_i32_0 : i32, i32
  }
  func.func @transform_7(%arg0: i32) -> (i32, i32) {
    %c0_i32 = arith.constant 0 : i32
    %c0_i32_0 = arith.constant 0 : i32
    %c0_i32_1 = arith.constant 0 : i32
    return %c0_i32, %c0_i32_0 : i32, i32
  }
  func.func @transform_8(%arg0: i32) -> (i32, i32) {
    %c0_i32 = arith.constant 0 : i32
    %c0_i32_0 = arith.constant 0 : i32
    %c0_i32_1 = arith.constant 0 : i32
    return %c0_i32, %c0_i32_0 : i32, i32
  }
  func.func @transform_9(%arg0: i32) -> (i32, i32) {
    %c0_i32 = arith.constant 0 : i32
    %c0_i32_0 = arith.constant 0 : i32
    %c0_i32_1 = arith.constant 0 : i32
    return %c0_i32, %c0_i32_0 : i32, i32
  }
  func.func @transform_10(%arg0: i32) -> (i32, i32) {
    %c0_i32 = arith.constant 0 : i32
    %c0_i32_0 = arith.constant 0 : i32
    %c0_i32_1 = arith.constant 0 : i32
    return %c0_i32, %c0_i32_0 : i32, i32
  }
  func.func @transform_11(%arg0: i32) -> (i32, i32) {
    %c0_i32 = arith.constant 0 : i32
    %c0_i32_0 = arith.constant 0 : i32
    return %arg0, %c0_i32 : i32, i32
  }
}

</mosaic_0001>

<llo_original>
// kernel: tpu_custom_call.1
$region0: #{tpu_custom_call.1}
  #allocation0 [shape = 'u32[]', space=smem, size = 0x4, offset = 0x4, fixed_abs, tag = 'smem constant byte address 0x4 - core index']
  #allocation1 [shape = 'u32[144,128]{1,0:T(1,128)}', space=vmem, size = 0x12000, scoped, tag = 'internal scratch']
  #allocation2 [shape = 'f32[1,1]{1,0:T(1,128)S(1)}', space=vmem, size = 0x200, scoped, tag = 'scoped memory for tpu_custom_call.1']
  %s0 = inlined_call_operand.vmem [shape: f32[64,1], index: 0, kind: input, shape index: {}]
  %s1 = inlined_call_operand.vmem [shape: f32[1,256], index: 1, kind: input, shape index: {}]
  %s2 = inlined_call_operand.vmem [shape: f32[1,256], index: 2, kind: input, shape index: {}]
  %s3 = inlined_call_operand.hbm [shape: f32[256,256], index: 3, kind: input, shape index: {}]
  %s4 = inlined_call_operand.vmem [shape: f32[1,256], index: 4, kind: input, shape index: {}]
  %s5 = inlined_call_operand.hbm [shape: f32[128,256], index: 5, kind: input, shape index: {}]
  %s6 = inlined_call_operand.hbm [shape: f32[128,256], index: 6, kind: input, shape index: {}]
  %s7 = inlined_call_operand.vmem [shape: f32[1,256], index: 7, kind: input, shape index: {}]
  %s8 = inlined_call_operand.vmem [shape: f32[1,128], index: 8, kind: input, shape index: {}]
  %s9 = inlined_call_operand.vmem [shape: f32[1,128], index: 9, kind: input, shape index: {}]
  %s10 = inlined_call_operand.<no memory space> [shape: f32[1,1], index: 10, kind: input, shape index: {}]
  %s11 = inlined_call_operand.vmem [shape: f32[64,1], index: 11, kind: output, shape index: {}]
  %s12 = sld [smem:[#allocation0]]
  $region89: #{tpu_custom_call.1} parent=0
    _
  %s14 = ssub.s32 1, %s12
  %s15 = scalar_select 0, %s14, %s12
  %v16 = vstv %s10
  %17 = vst [vmem:[#allocation2] sm:$0x1] %v16
  $region1: #{tpu_custom_call.1} parent=0
    #allocation3 [shape = 'u8[262144]{0}', space=vmem, size = 0x40000, scoped, tag = 'input window, operand 3, single buffered']
    #allocation4 [shape = 's32[2]{0}', space=sflag, size = 0x8, scoped, tag = 'scoped memory for tpu_custom_call.1']
    #allocation5 [shape = 'u8[131072]{0}', space=vmem, size = 0x20000, scoped, tag = 'input window, operand 5, single buffered']
    #allocation6 [shape = 's32[1]{0}', space=sflag, size = 0x4, scoped, tag = 'scoped memory for tpu_custom_call.1']
    #allocation7 [shape = 'u8[131072]{0}', space=vmem, size = 0x20000, scoped, tag = 'input window, operand 6, single buffered']
    %18 = vsyncpa [#allocation4], 0
    %19 = vsyncpa [#allocation6], 0
    loop: start=0, step=1, limit=4
    $region2: #{tpu_custom_call.1} parent=1 // loop_pre_header
      _
    $region3: #{tpu_custom_call.1} parent=1 // loop_header
      %s21 = sphi 0, %s25
      %p22 = scmp.ge.s32.totalorder %s21, 4
      %s31 = sphi 0, %s33
      %s34 = sphi 0, %s31
      %s35 = sphi 0, %s34
      %s51 = sphi 0, %s35
      %s55 = sphi 0, %s55
      %s57 = sphi 0, %s55
      %s58 = sphi 0, %s57
      %s72 = sphi 0, %s58
      %s76 = sphi 0, %s76
      %s78 = sphi 0, %s76
      %s79 = sphi 0, %s78
      %s93 = sphi 0, %s79
      %s97 = sphi 0, %s97
      %s99 = sphi 0, %s97
      %s100 = sphi 0, %s99
      %s114 = sphi 0, %s100
      %s118 = sphi 0, %s118
      %s120 = sphi 0, %s118
      %s121 = sphi 0, %s120
      %s135 = sphi 0, %s121
      %s139 = sphi 0, %s139
      %s141 = sphi 0, %s139
      %s142 = sphi 0, %s141
      %s156 = sphi 0, %s142
      %s160 = sphi 0, %s160
      %s162 = sphi 0, %s160
      %s163 = sphi 0, %s162
      %s177 = sphi 0, %s163
      %s181 = sphi 0, %s181
      %s183 = sphi 0, %s181
      %s184 = sphi 0, %s183
      %s198 = sphi 0, %s184
      %s202 = sphi 0, %s202
      %s204 = sphi 0, %s202
      %s205 = sphi 0, %s204
      %s219 = sphi 0, %s205
      %s223 = sphi 0, %s223
      %s225 = sphi 0, %s223
      %s226 = sphi 0, %s225
      %s240 = sphi 0, %s226
      %s244 = sphi 0, %s244
      %s246 = sphi 0, %s244
      %s247 = sphi 0, %s246
      %s261 = sphi 0, %s247
      %s267 = sphi 0, %s269
      %s270 = sphi 0, %s267
      %s271 = sphi 0, %s270
      %s287 = sphi 0, %s271
    $region4: #{tpu_custom_call.1} parent=1 // loop_header_branch
      %24 = sbr.rel (%p22) target = $region8
    $region5: #{tpu_custom_call.1} parent=1 // loop_body
      %s26 = ssub.s32 %s21, 1
      %s27 = ssub.s32 %s21, 2
      %s28 = sadd.s32 %s21, 1
      %s29 = ssub.s32 %s21, %s28
      %p30 = scmp.eq.s32.totalorder %s29, 0
      %s32 = sadd.s32 %s31, 1
      %s33 = scalar_select %p30, %s31, %s32
      %p36 = pneg %p30
      %p37 = scmp.eq.s32.totalorder %s21, 1
      %p38 = por %p36, %p37
      %p39 = scmp.ne.s32.totalorder %s31, %s34
      %p40 = scmp.eq.s32.totalorder %s21, 0
      %p41 = por %p39, %p40
      %p42 = scmp.ne.s32.totalorder %s31, %s34
      %p43 = scmp.eq.s32.totalorder %s26, 1
      %p44 = por %p42, %p43
      %p45 = scmp.ne.s32.totalorder %s34, %s35
      %p46 = scmp.eq.s32.totalorder %s26, 0
      %p47 = por %p45, %p46
      %p48 = scmp.ne.s32.totalorder %s34, %s35
      %p49 = scmp.eq.s32.totalorder %s27, 1
      %p50 = por %p48, %p49
      %p52 = scmp.ne.s32.totalorder %s35, %s51
      %p53 = scmp.eq.s32.totalorder %s27, 0
      %p54 = por %p52, %p53
      %s56 = sadd.s32 %s55, 1
      %p59 = scmp.eq.s32.totalorder %s21, 1
      %p60 = scmp.ne.s32.totalorder %s55, %s57
      %p61 = scmp.eq.s32.totalorder %s21, 0
      %p62 = por %p60, %p61
      %p63 = scmp.ne.s32.totalorder %s55, %s57
      %p64 = scmp.eq.s32.totalorder %s26, 1
      %p65 = por %p63, %p64
      %p66 = scmp.ne.s32.totalorder %s57, %s58
      %p67 = scmp.eq.s32.totalorder %s26, 0
      %p68 = por %p66, %p67
      %p69 = scmp.ne.s32.totalorder %s57, %s58
      %p70 = scmp.eq.s32.totalorder %s27, 1
      %p71 = por %p69, %p70
      %p73 = scmp.ne.s32.totalorder %s58, %s72
      %p74 = scmp.eq.s32.totalorder %s27, 0
      %p75 = por %p73, %p74
      %s77 = sadd.s32 %s76, 1
      %p80 = scmp.eq.s32.totalorder %s21, 1
      %p81 = scmp.ne.s32.totalorder %s76, %s78
      %p82 = scmp.eq.s32.totalorder %s21, 0
      %p83 = por %p81, %p82
      %p84 = scmp.ne.s32.totalorder %s76, %s78
      %p85 = scmp.eq.s32.totalorder %s26, 1
      %p86 = por %p84, %p85
      %p87 = scmp.ne.s32.totalorder %s78, %s79
      %p88 = scmp.eq.s32.totalorder %s26, 0
      %p89 = por %p87, %p88
      %p90 = scmp.ne.s32.totalorder %s78, %s79
      %p91 = scmp.eq.s32.totalorder %s27, 1
      %p92 = por %p90, %p91
      %p94 = scmp.ne.s32.totalorder %s79, %s93
      %p95 = scmp.eq.s32.totalorder %s27, 0
      %p96 = por %p94, %p95
      %s98 = sadd.s32 %s97, 1
      %p101 = scmp.eq.s32.totalorder %s21, 1
      %p102 = scmp.ne.s32.totalorder %s97, %s99
      %p103 = scmp.eq.s32.totalorder %s21, 0
      %p104 = por %p102, %p103
      %p105 = scmp.ne.s32.totalorder %s97, %s99
      %p106 = scmp.eq.s32.totalorder %s26, 1
      %p107 = por %p105, %p106
      %p108 = scmp.ne.s32.totalorder %s99, %s100
      %p109 = scmp.eq.s32.totalorder %s26, 0
      %p110 = por %p108, %p109
      %p111 = scmp.ne.s32.totalorder %s99, %s100
      %p112 = scmp.eq.s32.totalorder %s27, 1
      %p113 = por %p111, %p112
      %p115 = scmp.ne.s32.totalorder %s100, %s114
      %p116 = scmp.eq.s32.totalorder %s27, 0
      %p117 = por %p115, %p116
      %s119 = sadd.s32 %s118, 1
      %p122 = scmp.eq.s32.totalorder %s21, 1
      %p123 = scmp.ne.s32.totalorder %s118, %s120
      %p124 = scmp.eq.s32.totalorder %s21, 0
      %p125 = por %p123, %p124
      %p126 = scmp.ne.s32.totalorder %s118, %s120
      %p127 = scmp.eq.s32.totalorder %s26, 1
      %p128 = por %p126, %p127
      %p129 = scmp.ne.s32.totalorder %s120, %s121
      %p130 = scmp.eq.s32.totalorder %s26, 0
      %p131 = por %p129, %p130
      %p132 = scmp.ne.s32.totalorder %s120, %s121
      %p133 = scmp.eq.s32.totalorder %s27, 1
      %p134 = por %p132, %p133
      %p136 = scmp.ne.s32.totalorder %s121, %s135
      %p137 = scmp.eq.s32.totalorder %s27, 0
      %p138 = por %p136, %p137
      %s140 = sadd.s32 %s139, 1
      %p143 = scmp.eq.s32.totalorder %s21, 1
      %p144 = scmp.ne.s32.totalorder %s139, %s141
      %p145 = scmp.eq.s32.totalorder %s21, 0
      %p146 = por %p144, %p145
      %p147 = scmp.ne.s32.totalorder %s139, %s141
      %p148 = scmp.eq.s32.totalorder %s26, 1
      %p149 = por %p147, %p148
      %p150 = scmp.ne.s32.totalorder %s141, %s142
      %p151 = scmp.eq.s32.totalorder %s26, 0
      %p152 = por %p150, %p151
      %p153 = scmp.ne.s32.totalorder %s141, %s142
      %p154 = scmp.eq.s32.totalorder %s27, 1
      %p155 = por %p153, %p154
      %p157 = scmp.ne.s32.totalorder %s142, %s156
      %p158 = scmp.eq.s32.totalorder %s27, 0
      %p159 = por %p157, %p158
      %s161 = sadd.s32 %s160, 1
      %p164 = scmp.eq.s32.totalorder %s21, 1
      %p165 = scmp.ne.s32.totalorder %s160, %s162
      %p166 = scmp.eq.s32.totalorder %s21, 0
      %p167 = por %p165, %p166
      %p168 = scmp.ne.s32.totalorder %s160, %s162
      %p169 = scmp.eq.s32.totalorder %s26, 1
      %p170 = por %p168, %p169
      %p171 = scmp.ne.s32.totalorder %s162, %s163
      %p172 = scmp.eq.s32.totalorder %s26, 0
      %p173 = por %p171, %p172
      %p174 = scmp.ne.s32.totalorder %s162, %s163
      %p175 = scmp.eq.s32.totalorder %s27, 1
      %p176 = por %p174, %p175
      %p178 = scmp.ne.s32.totalorder %s163, %s177
      %p179 = scmp.eq.s32.totalorder %s27, 0
      %p180 = por %p178, %p179
      %s182 = sadd.s32 %s181, 1
      %p185 = scmp.eq.s32.totalorder %s21, 1
      %p186 = scmp.ne.s32.totalorder %s181, %s183
      %p187 = scmp.eq.s32.totalorder %s21, 0
      %p188 = por %p186, %p187
      %p189 = scmp.ne.s32.totalorder %s181, %s183
      %p190 = scmp.eq.s32.totalorder %s26, 1
      %p191 = por %p189, %p190
      %p192 = scmp.ne.s32.totalorder %s183, %s184
      %p193 = scmp.eq.s32.totalorder %s26, 0
      %p194 = por %p192, %p193
      %p195 = scmp.ne.s32.totalorder %s183, %s184
      %p196 = scmp.eq.s32.totalorder %s27, 1
      %p197 = por %p195, %p196
      %p199 = scmp.ne.s32.totalorder %s184, %s198
      %p200 = scmp.eq.s32.totalorder %s27, 0
      %p201 = por %p199, %p200
      %s203 = sadd.s32 %s202, 1
      %p206 = scmp.eq.s32.totalorder %s21, 1
      %p207 = scmp.ne.s32.totalorder %s202, %s204
      %p208 = scmp.eq.s32.totalorder %s21, 0
      %p209 = por %p207, %p208
      %p210 = scmp.ne.s32.totalorder %s202, %s204
      %p211 = scmp.eq.s32.totalorder %s26, 1
      %p212 = por %p210, %p211
      %p213 = scmp.ne.s32.totalorder %s204, %s205
      %p214 = scmp.eq.s32.totalorder %s26, 0
      %p215 = por %p213, %p214
      %p216 = scmp.ne.s32.totalorder %s204, %s205
      %p217 = scmp.eq.s32.totalorder %s27, 1
      %p218 = por %p216, %p217
      %p220 = scmp.ne.s32.totalorder %s205, %s219
      %p221 = scmp.eq.s32.totalorder %s27, 0
      %p222 = por %p220, %p221
      %s224 = sadd.s32 %s223, 1
      %p227 = scmp.eq.s32.totalorder %s21, 1
      %p228 = scmp.ne.s32.totalorder %s223, %s225
      %p229 = scmp.eq.s32.totalorder %s21, 0
      %p230 = por %p228, %p229
      %p231 = scmp.ne.s32.totalorder %s223, %s225
      %p232 = scmp.eq.s32.totalorder %s26, 1
      %p233 = por %p231, %p232
      %p234 = scmp.ne.s32.totalorder %s225, %s226
      %p235 = scmp.eq.s32.totalorder %s26, 0
      %p236 = por %p234, %p235
      %p237 = scmp.ne.s32.totalorder %s225, %s226
      %p238 = scmp.eq.s32.totalorder %s27, 1
      %p239 = por %p237, %p238
      %p241 = scmp.ne.s32.totalorder %s226, %s240
      %p242 = scmp.eq.s32.totalorder %s27, 0
      %p243 = por %p241, %p242
      %s245 = sadd.s32 %s244, 1
      %p248 = scmp.eq.s32.totalorder %s21, 1
      %p249 = scmp.ne.s32.totalorder %s244, %s246
      %p250 = scmp.eq.s32.totalorder %s21, 0
      %p251 = por %p249, %p250
      %p252 = scmp.ne.s32.totalorder %s244, %s246
      %p253 = scmp.eq.s32.totalorder %s26, 1
      %p254 = por %p252, %p253
      %p255 = scmp.ne.s32.totalorder %s246, %s247
      %p256 = scmp.eq.s32.totalorder %s26, 0
      %p257 = por %p255, %p256
      %p258 = scmp.ne.s32.totalorder %s246, %s247
      %p259 = scmp.eq.s32.totalorder %s27, 1
      %p260 = por %p258, %p259
      %p262 = scmp.ne.s32.totalorder %s247, %s261
      %p263 = scmp.eq.s32.totalorder %s27, 0
      %p264 = por %p262, %p263
      %s265 = ssub.s32 %s21, %s28
      %p266 = scmp.eq.s32.totalorder %s265, 0
      %s268 = sadd.s32 %s267, 1
      %s269 = scalar_select %p266, %s267, %s268
      %p272 = pneg %p266
      %p273 = scmp.eq.s32.totalorder %s21, 1
      %p274 = por %p272, %p273
      %p275 = scmp.ne.s32.totalorder %s267, %s270
      %p276 = scmp.eq.s32.totalorder %s21, 0
      %p277 = por %p275, %p276
      %p278 = scmp.ne.s32.totalorder %s267, %s270
      %p279 = scmp.eq.s32.totalorder %s26, 1
      %p280 = por %p278, %p279
      %p281 = scmp.ne.s32.totalorder %s270, %s271
      %p282 = scmp.eq.s32.totalorder %s26, 0
      %p283 = por %p281, %p282
      %p284 = scmp.ne.s32.totalorder %s270, %s271
      %p285 = scmp.eq.s32.totalorder %s27, 1
      %p286 = por %p284, %p285
      %p288 = scmp.ne.s32.totalorder %s271, %s287
      %p289 = scmp.eq.s32.totalorder %s27, 0
      %p290 = por %p288, %p289
      %p291 = scmp.le.s32.totalorder 1, %s21
      %p292 = scmp.lt.s32.totalorder %s21, 3
      %p293 = pnand %p291, %p292
      %p294 = pneg %p293
      // Predicated region
      $region9: #{tpu_custom_call.1} parent=5 // pred_check
        _
      $region10: #{tpu_custom_call.1} parent=5 // pred_check_branch
        %296 = sbr.rel (%p293) target = $region12
      $region11: #{tpu_custom_call.1} parent=5 // pred_region
        %s297 = ssub.s32 %s21, 1
        // Predicated region
        $region13: #{tpu_custom_call.1} parent=11 // pred_check
          %p298 = pneg %p68
        $region14: #{tpu_custom_call.1} parent=11 // pred_check_branch
          %300 = sbr.rel (%p298) target = $region16
        $region15: #{tpu_custom_call.1} parent=11 // pred_region
          _
        $region16: #{tpu_custom_call.1} parent=11 // pred_fallthru
          _
        // Predicated region
        $region17: #{tpu_custom_call.1} parent=11 // pred_check
          %p301 = pneg %p89
        $region18: #{tpu_custom_call.1} parent=11 // pred_check_branch
          %303 = sbr.rel (%p301) target = $region20
        $region19: #{tpu_custom_call.1} parent=11 // pred_region
          _
        $region20: #{tpu_custom_call.1} parent=11 // pred_fallthru
          _
        // Predicated region
        $region21: #{tpu_custom_call.1} parent=11 // pred_check
          %p304 = pneg %p110
        $region22: #{tpu_custom_call.1} parent=11 // pred_check_branch
          %306 = sbr.rel (%p304) target = $region24
        $region23: #{tpu_custom_call.1} parent=11 // pred_region
          %s308 = ssub.s32 8192, 8192
          %309 = vsyncadd [#allocation4], %s308
          %s310 = sshll.u32 [#allocation3], 4
          %s311 = int_to_ptr.vmem [resolvable:$true] %s310
          %316 = dma.hbm_to_vmem [thread:$0]  %s3, 8192, %s311, [#allocation4], 256, 256, 16
        $region24: #{tpu_custom_call.1} parent=11 // pred_fallthru
          _
        // Predicated region
        $region25: #{tpu_custom_call.1} parent=11 // pred_check
          %p317 = pneg %p131
        $region26: #{tpu_custom_call.1} parent=11 // pred_check_branch
          %319 = sbr.rel (%p317) target = $region28
        $region27: #{tpu_custom_call.1} parent=11 // pred_region
          _
        $region28: #{tpu_custom_call.1} parent=11 // pred_fallthru
          _
        // Predicated region
        $region29: #{tpu_custom_call.1} parent=11 // pred_check
          %p320 = pneg %p152
        $region30: #{tpu_custom_call.1} parent=11 // pred_check_branch
          %322 = sbr.rel (%p320) target = $region32
        $region31: #{tpu_custom_call.1} parent=11 // pred_region
          %s324 = ssub.s32 4096, 4096
          %325 = vsyncadd [#allocation6], %s324
          %s326 = sshll.u32 [#allocation5], 4
          %s327 = int_to_ptr.vmem [resolvable:$true] %s326
          %332 = dma.hbm_to_vmem [thread:$0]  %s5, 4096, %s327, [#allocation6], 256, 256, 16
        $region32: #{tpu_custom_call.1} parent=11 // pred_fallthru
          _
        // Predicated region
        $region33: #{tpu_custom_call.1} parent=11 // pred_check
          %p333 = pneg %p173
        $region34: #{tpu_custom_call.1} parent=11 // pred_check_branch
          %335 = sbr.rel (%p333) target = $region36
        $region35: #{tpu_custom_call.1} parent=11 // pred_region
          %s337 = ssub.s32 4096, 4096
          %338 = vsyncadd [#allocation6], %s337
          %s339 = sshll.u32 [#allocation7], 4
          %s340 = int_to_ptr.vmem [resolvable:$true] %s339
          %345 = dma.hbm_to_vmem [thread:$0]  %s6, 4096, %s340, [#allocation6], 256, 256, 16
        $region36: #{tpu_custom_call.1} parent=11 // pred_fallthru
          _
        // Predicated region
        $region37: #{tpu_custom_call.1} parent=11 // pred_check
          %p346 = pneg %p194
        $region38: #{tpu_custom_call.1} parent=11 // pred_check_branch
          %348 = sbr.rel (%p346) target = $region40
        $region39: #{tpu_custom_call.1} parent=11 // pred_region
          _
        $region40: #{tpu_custom_call.1} parent=11 // pred_fallthru
          _
        // Predicated region
        $region41: #{tpu_custom_call.1} parent=11 // pred_check
          %p349 = pneg %p215
        $region42: #{tpu_custom_call.1} parent=11 // pred_check_branch
          %351 = sbr.rel (%p349) target = $region44
        $region43: #{tpu_custom_call.1} parent=11 // pred_region
          _
        $region44: #{tpu_custom_call.1} parent=11 // pred_fallthru
          _
        // Predicated region
        $region45: #{tpu_custom_call.1} parent=11 // pred_check
          %p352 = pneg %p236
        $region46: #{tpu_custom_call.1} parent=11 // pred_check_branch
          %354 = sbr.rel (%p352) target = $region48
        $region47: #{tpu_custom_call.1} parent=11 // pred_region
          _
        $region48: #{tpu_custom_call.1} parent=11 // pred_fallthru
          _
        // Predicated region
        $region49: #{tpu_custom_call.1} parent=11 // pred_check
          %p355 = pneg %p257
        $region50: #{tpu_custom_call.1} parent=11 // pred_check_branch
          %357 = sbr.rel (%p355) target = $region52
        $region51: #{tpu_custom_call.1} parent=11 // pred_region
          _
        $region52: #{tpu_custom_call.1} parent=11 // pred_fallthru
          _
      $region12: #{tpu_custom_call.1} parent=5 // pred_fallthru
        _
      %p358 = scmp.lt.s32.totalorder %s21, 2
      // Predicated region
      $region53: #{tpu_custom_call.1} parent=5 // pred_check
        %p359 = pneg %p358
      $region54: #{tpu_custom_call.1} parent=5 // pred_check_branch
        %361 = sbr.rel (%p359) target = $region56
      $region55: #{tpu_custom_call.1} parent=5 // pred_region
        // Predicated region
        $region57: #{tpu_custom_call.1} parent=55 // pred_check
          %p362 = pneg %p41
        $region58: #{tpu_custom_call.1} parent=55 // pred_check_branch
          %364 = sbr.rel (%p362) target = $region60
        $region59: #{tpu_custom_call.1} parent=55 // pred_region
          %s365 = smul.u32 4, %s21
          %p366 = scmp.lt.s32.totalorder %s365, 7
          %s367 = scalar_select %p366, %s365, 7
          %s368 = smul.addr %s367, 8
          %s369 = scalar_lea.vmem %s0, %s368
          %s370 = smul.u32 4, %s21
        $region60: #{tpu_custom_call.1} parent=55 // pred_fallthru
          _
      $region56: #{tpu_custom_call.1} parent=5 // pred_fallthru
        _
      %p371 = scmp.le.s32.totalorder 1, %s21
      %p372 = scmp.lt.s32.totalorder %s21, 3
      %p373 = pnand %p371, %p372
      %p374 = pneg %p373
      // Predicated region
      $region61: #{tpu_custom_call.1} parent=5 // pred_check
        _
      $region62: #{tpu_custom_call.1} parent=5 // pred_check_branch
        %376 = sbr.rel (%p373) target = $region64
      $region63: #{tpu_custom_call.1} parent=5 // pred_region
        %s377 = ssub.s32 %s21, 1
        // Predicated region
        $region65: #{tpu_custom_call.1} parent=63 // pred_check
          %p378 = pneg %p110
        $region66: #{tpu_custom_call.1} parent=63 // pred_check_branch
          %380 = sbr.rel (%p378) target = $region68
        $region67: #{tpu_custom_call.1} parent=63 // pred_region
          %381 = dma.done [#allocation4], 8192
        $region68: #{tpu_custom_call.1} parent=63 // pred_fallthru
          _
        // Predicated region
        $region69: #{tpu_custom_call.1} parent=63 // pred_check
          %p382 = pneg %p152
        $region70: #{tpu_custom_call.1} parent=63 // pred_check_branch
          %384 = sbr.rel (%p382) target = $region72
        $region71: #{tpu_custom_call.1} parent=63 // pred_region
          %385 = dma.done [#allocation6], 4096
        $region72: #{tpu_custom_call.1} parent=63 // pred_fallthru
          _
        // Predicated region
        $region73: #{tpu_custom_call.1} parent=63 // pred_check
          %p386 = pneg %p173
        $region74: #{tpu_custom_call.1} parent=63 // pred_check_branch
          %388 = sbr.rel (%p386) target = $region76
        $region75: #{tpu_custom_call.1} parent=63 // pred_region
          %389 = dma.done [#allocation6], 4096
        $region76: #{tpu_custom_call.1} parent=63 // pred_fallthru
          _
        %s390 = smul.u32 4, %s26
        %p391 = scmp.lt.s32.totalorder %s390, 7
        %s392 = scalar_select %p391, %s390, 7
        %s393 = smul.addr %s392, 8
        %s394 = scalar_lea.vmem %s0, %s393
        %p395 = pneg %p47
        %p396 = pneg %p44
        %p397 = pneg %p68
        %p398 = pneg %p65
        %p399 = pneg %p89
        %p400 = pneg %p86
        %p401 = pneg %p110
        %p402 = pneg %p107
        %p403 = pneg %p131
        %p404 = pneg %p128
        %p405 = pneg %p152
        %p406 = pneg %p149
        %p407 = pneg %p173
        %p408 = pneg %p170
        %p409 = pneg %p194
        %p410 = pneg %p191
        %p411 = pneg %p215
        %p412 = pneg %p212
        %p413 = pneg %p236
        %p414 = pneg %p233
        %p415 = pneg %p257
        %p416 = pneg %p254
        %p417 = pneg %p283
        %p418 = pneg %p280
        %s419 = smul.u32 4, %s26
        %p420 = scmp.lt.s32.totalorder %s419, 7
        %s421 = scalar_select %p420, %s419, 7
        %s422 = smul.addr %s421, 8
        %s423 = scalar_lea.vmem %s11, %s422
        %s424 = smul.u32 4, %s26
        %p425 = scmp.lt.s32.totalorder %s424, 7
        %s426 = scalar_select %p425, %s424, 7
        %s427 = smul.addr %s426, 8
        %s428 = scalar_lea.vmem %s0, %s427
        %s429 = smul.u32 4, %s26
        %s430 = smul.u32 4, %s26
        %p431 = scmp.lt.s32.totalorder %s430, 7
        %s432 = scalar_select %p431, %s430, 7
        %s433 = smul.addr %s432, 8
        %s434 = scalar_lea.vmem %s11, %s433
        %s435 = smul.u32 4, %s26
        %v436 = vld [vmem:[%s428] sm:$0xff]
        %v437 = vld [vmem:[%s428 + $0x8] sm:$0xff]
        %v438 = vld [vmem:[%s428 + $0x10] sm:$0xff]
        %v439 = vld [vmem:[%s428 + $0x18] sm:$0xff]
        %v440 = vld [vmem:[%s1] sm:$0x3]
        %442 = vset.pattern.permute.xlu0 0
        %443 = vperm.xlu0 %442, %v436
        %v444 = vpop.permute.xlu0 %443
        %447 = vset.pattern.permute.xlu0 0
        %448 = vperm.xlu0 %447, %v437
        %v449 = vpop.permute.xlu0 %448
        %452 = vset.pattern.permute.xlu0 0
        %453 = vperm.xlu0 %452, %v438
        %v454 = vpop.permute.xlu0 %453
        %457 = vset.pattern.permute.xlu0 0
        %458 = vperm.xlu0 %457, %v439
        %v459 = vpop.permute.xlu0 %458
        %v462 = vlaneseq
        %v463 = vshrl.u32 %v462, 7
        %v464 = vsub.s32 0, %v463
        %v465 = vrot.slane %v440, %v464
        %v466 = vlaneseq
        %v467 = vshrl.u32 %v466, 7
        %v468 = vsub.s32 1, %v467
        %v469 = vrot.slane %v440, %v468
        %v472 = vmul.f32 %v444, %v465
        %v473 = vmul.f32 %v444, %v469
        %v474 = vmul.f32 %v449, %v465
        %v475 = vmul.f32 %v449, %v469
        %v476 = vmul.f32 %v454, %v465
        %v477 = vmul.f32 %v454, %v469
        %v478 = vmul.f32 %v459, %v465
        %v479 = vmul.f32 %v459, %v469
        %v480 = vld [vmem:[%s2] sm:$0x3]
        %v482 = vlaneseq
        %v483 = vshrl.u32 %v482, 7
        %v484 = vsub.s32 0, %v483
        %v485 = vrot.slane %v480, %v484
        %v486 = vlaneseq
        %v487 = vshrl.u32 %v486, 7
        %v488 = vsub.s32 1, %v487
        %v489 = vrot.slane %v480, %v488
        %v492 = vadd.f32 %v472, %v485
        %v493 = vadd.f32 %v473, %v489
        %v494 = vadd.f32 %v474, %v485
        %v495 = vadd.f32 %v475, %v489
        %v496 = vadd.f32 %v476, %v485
        %v497 = vadd.f32 %v477, %v489
        %v498 = vadd.f32 %v478, %v485
        %v499 = vadd.f32 %v479, %v489
        %v500 = vld [vmem:[#allocation3] sm:$0xff]
        %v501 = vld [vmem:[#allocation3 + $0x8] sm:$0xff]
        %v502 = vld [vmem:[#allocation3 + $0x10] sm:$0xff]
        %v503 = vld [vmem:[#allocation3 + $0x18] sm:$0xff]
        %v504 = vld [vmem:[#allocation3 + $0x20] sm:$0xff]
        %v505 = vld [vmem:[#allocation3 + $0x28] sm:$0xff]
        %v506 = vld [vmem:[#allocation3 + $0x30] sm:$0xff]
        %v507 = vld [vmem:[#allocation3 + $0x38] sm:$0xff]
        %v508 = vld [vmem:[#allocation3 + $0x40] sm:$0xff]
        %v509 = vld [vmem:[#allocation3 + $0x48] sm:$0xff]
        %v510 = vld [vmem:[#allocation3 + $0x50] sm:$0xff]
        %v511 = vld [vmem:[#allocation3 + $0x58] sm:$0xff]
        %v512 = vld [vmem:[#allocation3 + $0x60] sm:$0xff]
        %v513 = vld [vmem:[#allocation3 + $0x68] sm:$0xff]
        %v514 = vld [vmem:[#allocation3 + $0x70] sm:$0xff]
        %v515 = vld [vmem:[#allocation3 + $0x78] sm:$0xff]
        %v516 = vld [vmem:[#allocation3 + $0x80] sm:$0xff]
        %v517 = vld [vmem:[#allocation3 + $0x88] sm:$0xff]
        %v518 = vld [vmem:[#allocation3 + $0x90] sm:$0xff]
        %v519 = vld [vmem:[#allocation3 + $0x98] sm:$0xff]
        %v520 = vld [vmem:[#allocation3 + $0xa0] sm:$0xff]
        %v521 = vld [vmem:[#allocation3 + $0xa8] sm:$0xff]
        %v522 = vld [vmem:[#allocation3 + $0xb0] sm:$0xff]
        %v523 = vld [vmem:[#allocation3 + $0xb8] sm:$0xff]
        %v524 = vld [vmem:[#allocation3 + $0xc0] sm:$0xff]
        %v525 = vld [vmem:[#allocation3 + $0xc8] sm:$0xff]
        %v526 = vld [vmem:[#allocation3 + $0xd0] sm:$0xff]
        %v527 = vld [vmem:[#allocation3 + $0xd8] sm:$0xff]
        %v528 = vld [vmem:[#allocation3 + $0xe0] sm:$0xff]
        %v529 = vld [vmem:[#allocation3 + $0xe8] sm:$0xff]
        %v530 = vld [vmem:[#allocation3 + $0xf0] sm:$0xff]
        %v531 = vld [vmem:[#allocation3 + $0xf8] sm:$0xff]
        %v532 = vld [vmem:[#allocation3 + $0x100] sm:$0xff]
        %v533 = vld [vmem:[#allocation3 + $0x108] sm:$0xff]
        %v534 = vld [vmem:[#allocation3 + $0x110] sm:$0xff]
        %v535 = vld [vmem:[#allocation3 + $0x118] sm:$0xff]
        %v536 = vld [vmem:[#allocation3 + $0x120] sm:$0xff]
        %v537 = vld [vmem:[#allocation3 + $0x128] sm:$0xff]
        %v538 = vld [vmem:[#allocation3 + $0x130] sm:$0xff]
        %v539 = vld [vmem:[#allocation3 + $0x138] sm:$0xff]
        %v540 = vld [vmem:[#allocation3 + $0x140] sm:$0xff]
        %v541 = vld [vmem:[#allocation3 + $0x148] sm:$0xff]
        %v542 = vld [vmem:[#allocation3 + $0x150] sm:$0xff]
        %v543 = vld [vmem:[#allocation3 + $0x158] sm:$0xff]
        %v544 = vld [vmem:[#allocation3 + $0x160] sm:$0xff]
        %v545 = vld [vmem:[#allocation3 + $0x168] sm:$0xff]
        %v546 = vld [vmem:[#allocation3 + $0x170] sm:$0xff]
        %v547 = vld [vmem:[#allocation3 + $0x178] sm:$0xff]
        %v548 = vld [vmem:[#allocation3 + $0x180] sm:$0xff]
        %v549 = vld [vmem:[#allocation3 + $0x188] sm:$0xff]
        %v550 = vld [vmem:[#allocation3 + $0x190] sm:$0xff]
        %v551 = vld [vmem:[#allocation3 + $0x198] sm:$0xff]
        %v552 = vld [vmem:[#allocation3 + $0x1a0] sm:$0xff]
        %v553 = vld [vmem:[#allocation3 + $0x1a8] sm:$0xff]
        %v554 = vld [vmem:[#allocation3 + $0x1b0] sm:$0xff]
        %v555 = vld [vmem:[#allocation3 + $0x1b8] sm:$0xff]
        %v556 = vld [vmem:[#allocation3 + $0x1c0] sm:$0xff]
        %v557 = vld [vmem:[#allocation3 + $0x1c8] sm:$0xff]
        %v558 = vld [vmem:[#allocation3 + $0x1d0] sm:$0xff]
        %v559 = vld [vmem:[#allocation3 + $0x1d8] sm:$0xff]
        %v560 = vld [vmem:[#allocation3 + $0x1e0] sm:$0xff]
        %v561 = vld [vmem:[#allocation3 + $0x1e8] sm:$0xff]
        %v562 = vld [vmem:[#allocation3 + $0x1f0] sm:$0xff]
        %v563 = vld [vmem:[#allocation3 + $0x1f8] sm:$0xff]
        %v564 = vld [vmem:[%s4] sm:$0x3]
        %v566 = vlaneseq
        %v567 = vshrl.u32 %v566, 7
        %v568 = vsub.s32 0, %v567
        %v569 = vrot.slane %v564, %v568
        %v570 = vlaneseq
        %v571 = vshrl.u32 %v570, 7
        %v572 = vsub.s32 1, %v571
        %v573 = vrot.slane %v564, %v572
        %v576 = vand.u32 %v501, 4294901760
        %577 = vmatprep.subr.mxu0 %v576
        %v578 = vand.u32 %v500, 4294901760
        %579 = vmatpush1.msra.mxu0 %v578
        %v580 = vand.u32 %v503, 4294901760
        %581 = vmatprep.subr.mxu0 %v580
        %v582 = vand.u32 %v502, 4294901760
        %583 = vmatpush1.msra.mxu0 %v582
        %v584 = vand.u32 %v505, 4294901760
        %585 = vmatprep.subr.mxu0 %v584
        %v586 = vand.u32 %v504, 4294901760
        %587 = vmatpush1.msra.mxu0 %v586
        %v588 = vand.u32 %v507, 4294901760
        %589 = vmatprep.subr.mxu0 %v588
        %v590 = vand.u32 %v506, 4294901760
        %591 = vmatpush1.msra.mxu0 %v590
        %v592 = vand.u32 %v509, 4294901760
        %593 = vmatprep.subr.mxu0 %v592
        %v594 = vand.u32 %v508, 4294901760
        %595 = vmatpush1.msra.mxu0 %v594
        %v596 = vand.u32 %v511, 4294901760
        %597 = vmatprep.subr.mxu0 %v596
        %v598 = vand.u32 %v510, 4294901760
        %599 = vmatpush1.msra.mxu0 %v598
        %v600 = vand.u32 %v513, 4294901760
        %601 = vmatprep.subr.mxu0 %v600
        %v602 = vand.u32 %v512, 4294901760
        %603 = vmatpush1.msra.mxu0 %v602
        %v604 = vand.u32 %v515, 4294901760
        %605 = vmatprep.subr.mxu0 %v604
        %v606 = vand.u32 %v514, 4294901760
        %607 = vmatpush1.msra.mxu0 %v606
        %v608 = vand.u32 %v517, 4294901760
        %609 = vmatprep.subr.mxu0 %v608
        %v610 = vand.u32 %v516, 4294901760
        %611 = vmatpush1.msra.mxu0 %v610
        %v612 = vand.u32 %v519, 4294901760
        %613 = vmatprep.subr.mxu0 %v612
        %v614 = vand.u32 %v518, 4294901760
        %615 = vmatpush1.msra.mxu0 %v614
        %v616 = vand.u32 %v521, 4294901760
        %617 = vmatprep.subr.mxu0 %v616
        %v618 = vand.u32 %v520, 4294901760
        %619 = vmatpush1.msra.mxu0 %v618
        %v620 = vand.u32 %v523, 4294901760
        %621 = vmatprep.subr.mxu0 %v620
        %v622 = vand.u32 %v522, 4294901760
        %623 = vmatpush1.msra.mxu0 %v622
        %v624 = vand.u32 %v525, 4294901760
        %625 = vmatprep.subr.mxu0 %v624
        %v626 = vand.u32 %v524, 4294901760
        %627 = vmatpush1.msra.mxu0 %v626
        %v628 = vand.u32 %v527, 4294901760
        %629 = vmatprep.subr.mxu0 %v628
        %v630 = vand.u32 %v526, 4294901760
        %631 = vmatpush1.msra.mxu0 %v630
        %v632 = vand.u32 %v529, 4294901760
        %633 = vmatprep.subr.mxu0 %v632
        %v634 = vand.u32 %v528, 4294901760
        %635 = vmatpush1.msra.mxu0 %v634
        %v636 = vand.u32 %v531, 4294901760
        %637 = vmatprep.subr.mxu0 %v636
        %v638 = vand.u32 %v530, 4294901760
        %639 = vmatpush1.msra.mxu0 %v638
        %v640 = vand.u32 %v533, 4294901760
        %641 = vmatprep.subr.mxu0 %v640
        %v642 = vand.u32 %v532, 4294901760
        %643 = vmatpush1.msra.mxu0 %v642
        %v644 = vand.u32 %v535, 4294901760
        %645 = vmatprep.subr.mxu0 %v644
        %v646 = vand.u32 %v534, 4294901760
        %647 = vmatpush1.msra.mxu0 %v646
        %v648 = vand.u32 %v537, 4294901760
        %649 = vmatprep.subr.mxu0 %v648
        %v650 = vand.u32 %v536, 4294901760
        %651 = vmatpush1.msra.mxu0 %v650
        %v652 = vand.u32 %v539, 4294901760
        %653 = vmatprep.subr.mxu0 %v652
        %v654 = vand.u32 %v538, 4294901760
        %655 = vmatpush1.msra.mxu0 %v654
        %v656 = vand.u32 %v541, 4294901760
        %657 = vmatprep.subr.mxu0 %v656
        %v658 = vand.u32 %v540, 4294901760
        %659 = vmatpush1.msra.mxu0 %v658
        %v660 = vand.u32 %v543, 4294901760
        %661 = vmatprep.subr.mxu0 %v660
        %v662 = vand.u32 %v542, 4294901760
        %663 = vmatpush1.msra.mxu0 %v662
        %v664 = vand.u32 %v545, 4294901760
        %665 = vmatprep.subr.mxu0 %v664
        %v666 = vand.u32 %v544, 4294901760
        %667 = vmatpush1.msra.mxu0 %v666
        %v668 = vand.u32 %v547, 4294901760
        %669 = vmatprep.subr.mxu0 %v668
        %v670 = vand.u32 %v546, 4294901760
        %671 = vmatpush1.msra.mxu0 %v670
        %v672 = vand.u32 %v549, 4294901760
        %673 = vmatprep.subr.mxu0 %v672
        %v674 = vand.u32 %v548, 4294901760
        %675 = vmatpush1.msra.mxu0 %v674
        %v676 = vand.u32 %v551, 4294901760
        %677 = vmatprep.subr.mxu0 %v676
        %v678 = vand.u32 %v550, 4294901760
        %679 = vmatpush1.msra.mxu0 %v678
        %v680 = vand.u32 %v553, 4294901760
        %681 = vmatprep.subr.mxu0 %v680
        %v682 = vand.u32 %v552, 4294901760
        %683 = vmatpush1.msra.mxu0 %v682
        %v684 = vand.u32 %v555, 4294901760
        %685 = vmatprep.subr.mxu0 %v684
        %v686 = vand.u32 %v554, 4294901760
        %687 = vmatpush1.msra.mxu0 %v686
        %v688 = vand.u32 %v557, 4294901760
        %689 = vmatprep.subr.mxu0 %v688
        %v690 = vand.u32 %v556, 4294901760
        %691 = vmatpush1.msra.mxu0 %v690
        %v692 = vand.u32 %v559, 4294901760
        %693 = vmatprep.subr.mxu0 %v692
        %v694 = vand.u32 %v558, 4294901760
        %695 = vmatpush1.msra.mxu0 %v694
        %v696 = vand.u32 %v561, 4294901760
        %697 = vmatprep.subr.mxu0 %v696
        %v698 = vand.u32 %v560, 4294901760
        %699 = vmatpush1.msra.mxu0 %v698
        %v700 = vand.u32 %v563, 4294901760
        %701 = vmatprep.subr.mxu0 %v700
        %v702 = vand.u32 %v562, 4294901760
        %703 = vmatpush1.msra.mxu0 %v702
        %v704 = vand.u32 %v493, 4294901760
        %v705 = vsub.f32 %v493, %v704
        %v706 = vand.u32 %v705, 4294901760
        %v707 = vsub.f32 %v705, %v706
        %v708 = vand.u32 %v707, 4294901760
        %709 = vmatprep.mubr.f32.mxu0 %v708
        %v710 = vand.u32 %v492, 4294901760
        %v711 = vsub.f32 %v492, %v710
        %v712 = vand.u32 %v711, 4294901760
        %v713 = vsub.f32 %v711, %v712
        %v714 = vand.u32 %v713, 4294901760
        %715 = vmatmul.mubr.f32.gmra.mrb[0].mxu0 %v714
        %v716 = vpop.f32.mrb[0].mxu0
        %v717 = vadd.f32 %v569, %v716
        %v718 = vpop.f32.mrb[0].mxu0
        %v719 = vadd.f32 %v573, %v718
        %v720 = vand.u32 %v495, 4294901760
        %v721 = vsub.f32 %v495, %v720
        %v722 = vand.u32 %v721, 4294901760
        %v723 = vsub.f32 %v721, %v722
        %v724 = vand.u32 %v723, 4294901760
        %725 = vmatprep.mubr.f32.mxu0 %v724
        %v726 = vand.u32 %v494, 4294901760
        %v727 = vsub.f32 %v494, %v726
        %v728 = vand.u32 %v727, 4294901760
        %v729 = vsub.f32 %v727, %v728
        %v730 = vand.u32 %v729, 4294901760
        %731 = vmatmul.mubr.f32.gmra.mrb[0].mxu0 %v730
        %v732 = vpop.f32.mrb[0].mxu0
        %v733 = vadd.f32 %v569, %v732
        %v734 = vpop.f32.mrb[0].mxu0
        %v735 = vadd.f32 %v573, %v734
        %v736 = vand.u32 %v497, 4294901760
        %v737 = vsub.f32 %v497, %v736
        %v738 = vand.u32 %v737, 4294901760
        %v739 = vsub.f32 %v737, %v738
        %v740 = vand.u32 %v739, 4294901760
        %741 = vmatprep.mubr.f32.mxu0 %v740
        %v742 = vand.u32 %v496, 4294901760
        %v743 = vsub.f32 %v496, %v742
        %v744 = vand.u32 %v743, 4294901760
        %v745 = vsub.f32 %v743, %v744
        %v746 = vand.u32 %v745, 4294901760
        %747 = vmatmul.mubr.f32.gmra.mrb[0].mxu0 %v746
        %v748 = vpop.f32.mrb[0].mxu0
        %v749 = vadd.f32 %v569, %v748
        %v750 = vpop.f32.mrb[0].mxu0
        %v751 = vadd.f32 %v573, %v750
        %v752 = vand.u32 %v499, 4294901760
        %v753 = vsub.f32 %v499, %v752
        %v754 = vand.u32 %v753, 4294901760
        %v755 = vsub.f32 %v753, %v754
        %v756 = vand.u32 %v755, 4294901760
        %757 = vmatprep.mubr.f32.mxu0 %v756
        %v758 = vand.u32 %v498, 4294901760
        %v759 = vsub.f32 %v498, %v758
        %v760 = vand.u32 %v759, 4294901760
        %v761 = vsub.f32 %v759, %v760
        %v762 = vand.u32 %v761, 4294901760
        %763 = vmatmul.mubr.f32.gmra.mrb[0].mxu0 %v762
        %v764 = vpop.f32.mrb[0].mxu0
        %v765 = vadd.f32 %v569, %v764
        %v766 = vpop.f32.mrb[0].mxu0
        %v767 = vadd.f32 %v573, %v766
        %768 = vdwg.mxu0
        %v769 = vand.u32 %v501, 4294901760
        %v770 = vsub.f32 %v501, %v769
        %v771 = vand.u32 %v770, 4294901760
        %v772 = vsub.f32 %v770, %v771
        %v773 = vand.u32 %v772, 4294901760
        %774 = vmatprep.subr.mxu0 %v773
        %v775 = vand.u32 %v500, 4294901760
        %v776 = vsub.f32 %v500, %v775
        %v777 = vand.u32 %v776, 4294901760
        %v778 = vsub.f32 %v776, %v777
        %v779 = vand.u32 %v778, 4294901760
        %780 = vmatpush1.msra.mxu0 %v779
        %v781 = vand.u32 %v503, 4294901760
        %v782 = vsub.f32 %v503, %v781
        %v783 = vand.u32 %v782, 4294901760
        %v784 = vsub.f32 %v782, %v783
        %v785 = vand.u32 %v784, 4294901760
        %786 = vmatprep.subr.mxu0 %v785
        %v787 = vand.u32 %v502, 4294901760
        %v788 = vsub.f32 %v502, %v787
        %v789 = vand.u32 %v788, 4294901760
        %v790 = vsub.f32 %v788, %v789
        %v791 = vand.u32 %v790, 4294901760
        %792 = vmatpush1.msra.mxu0 %v791
        %v793 = vand.u32 %v505, 4294901760
        %v794 = vsub.f32 %v505, %v793
        %v795 = vand.u32 %v794, 4294901760
        %v796 = vsub.f32 %v794, %v795
        %v797 = vand.u32 %v796, 4294901760
        %798 = vmatprep.subr.mxu0 %v797
        %v799 = vand.u32 %v504, 4294901760
        %v800 = vsub.f32 %v504, %v799
        %v801 = vand.u32 %v800, 4294901760
        %v802 = vsub.f32 %v800, %v801
        %v803 = vand.u32 %v802, 4294901760
        %804 = vmatpush1.msra.mxu0 %v803
        %v805 = vand.u32 %v507, 4294901760
        %v806 = vsub.f32 %v507, %v805
        %v807 = vand.u32 %v806, 4294901760
        %v808 = vsub.f32 %v806, %v807
        %v809 = vand.u32 %v808, 4294901760
        %810 = vmatprep.subr.mxu0 %v809
        %v811 = vand.u32 %v506, 4294901760
        %v812 = vsub.f32 %v506, %v811
        %v813 = vand.u32 %v812, 4294901760
        %v814 = vsub.f32 %v812, %v813
        %v815 = vand.u32 %v814, 4294901760
        %816 = vmatpush1.msra.mxu0 %v815
        %v817 = vand.u32 %v509, 4294901760
        %v818 = vsub.f32 %v509, %v817
        %v819 = vand.u32 %v818, 4294901760
        %v820 = vsub.f32 %v818, %v819
        %v821 = vand.u32 %v820, 4294901760
        %822 = vmatprep.subr.mxu0 %v821
        %v823 = vand.u32 %v508, 4294901760
        %v824 = vsub.f32 %v508, %v823
        %v825 = vand.u32 %v824, 4294901760
        %v826 = vsub.f32 %v824, %v825
        %v827 = vand.u32 %v826, 4294901760
        %828 = vmatpush1.msra.mxu0 %v827
        %v829 = vand.u32 %v511, 4294901760
        %v830 = vsub.f32 %v511, %v829
        %v831 = vand.u32 %v830, 4294901760
        %v832 = vsub.f32 %v830, %v831
        %v833 = vand.u32 %v832, 4294901760
        %834 = vmatprep.subr.mxu0 %v833
        %v835 = vand.u32 %v510, 4294901760
        %v836 = vsub.f32 %v510, %v835
        %v837 = vand.u32 %v836, 4294901760
        %v838 = vsub.f32 %v836, %v837
        %v839 = vand.u32 %v838, 4294901760
        %840 = vmatpush1.msra.mxu0 %v839
        %v841 = vand.u32 %v513, 4294901760
        %v842 = vsub.f32 %v513, %v841
        %v843 = vand.u32 %v842, 4294901760
        %v844 = vsub.f32 %v842, %v843
        %v845 = vand.u32 %v844, 4294901760
        %846 = vmatprep.subr.mxu0 %v845
        %v847 = vand.u32 %v512, 4294901760
        %v848 = vsub.f32 %v512, %v847
        %v849 = vand.u32 %v848, 4294901760
        %v850 = vsub.f32 %v848, %v849
        %v851 = vand.u32 %v850, 4294901760
        %852 = vmatpush1.msra.mxu0 %v851
        %v853 = vand.u32 %v515, 4294901760
        %v854 = vsub.f32 %v515, %v853
        %v855 = vand.u32 %v854, 4294901760
        %v856 = vsub.f32 %v854, %v855
        %v857 = vand.u32 %v856, 4294901760
        %858 = vmatprep.subr.mxu0 %v857
        %v859 = vand.u32 %v514, 4294901760
        %v860 = vsub.f32 %v514, %v859
        %v861 = vand.u32 %v860, 4294901760
        %v862 = vsub.f32 %v860, %v861
        %v863 = vand.u32 %v862, 4294901760
        %864 = vmatpush1.msra.mxu0 %v863
        %v865 = vand.u32 %v517, 4294901760
        %v866 = vsub.f32 %v517, %v865
        %v867 = vand.u32 %v866, 4294901760
        %v868 = vsub.f32 %v866, %v867
        %v869 = vand.u32 %v868, 4294901760
        %870 = vmatprep.subr.mxu0 %v869
        %v871 = vand.u32 %v516, 4294901760
        %v872 = vsub.f32 %v516, %v871
        %v873 = vand.u32 %v872, 4294901760
        %v874 = vsub.f32 %v872, %v873
        %v875 = vand.u32 %v874, 4294901760
        %876 = vmatpush1.msra.mxu0 %v875
        %v877 = vand.u32 %v519, 4294901760
        %v878 = vsub.f32 %v519, %v877
        %v879 = vand.u32 %v878, 4294901760
        %v880 = vsub.f32 %v878, %v879
        %v881 = vand.u32 %v880, 4294901760
        %882 = vmatprep.subr.mxu0 %v881
        %v883 = vand.u32 %v518, 4294901760
        %v884 = vsub.f32 %v518, %v883
        %v885 = vand.u32 %v884, 4294901760
        %v886 = vsub.f32 %v884, %v885
        %v887 = vand.u32 %v886, 4294901760
        %888 = vmatpush1.msra.mxu0 %v887
        %v889 = vand.u32 %v521, 4294901760
        %v890 = vsub.f32 %v521, %v889
        %v891 = vand.u32 %v890, 4294901760
        %v892 = vsub.f32 %v890, %v891
        %v893 = vand.u32 %v892, 4294901760
        %894 = vmatprep.subr.mxu0 %v893
        %v895 = vand.u32 %v520, 4294901760
        %v896 = vsub.f32 %v520, %v895
        %v897 = vand.u32 %v896, 4294901760
        %v898 = vsub.f32 %v896, %v897
        %v899 = vand.u32 %v898, 4294901760
        %900 = vmatpush1.msra.mxu0 %v899
        %v901 = vand.u32 %v523, 4294901760
        %v902 = vsub.f32 %v523, %v901
        %v903 = vand.u32 %v902, 4294901760
        %v904 = vsub.f32 %v902, %v903
        %v905 = vand.u32 %v904, 4294901760
        %906 = vmatprep.subr.mxu0 %v905
        %v907 = vand.u32 %v522, 4294901760
        %v908 = vsub.f32 %v522, %v907
        %v909 = vand.u32 %v908, 4294901760
        %v910 = vsub.f32 %v908, %v909
        %v911 = vand.u32 %v910, 4294901760
        %912 = vmatpush1.msra.mxu0 %v911
        %v913 = vand.u32 %v525, 4294901760
        %v914 = vsub.f32 %v525, %v913
        %v915 = vand.u32 %v914, 4294901760
        %v916 = vsub.f32 %v914, %v915
        %v917 = vand.u32 %v916, 4294901760
        %918 = vmatprep.subr.mxu0 %v917
        %v919 = vand.u32 %v524, 4294901760
        %v920 = vsub.f32 %v524, %v919
        %v921 = vand.u32 %v920, 4294901760
        %v922 = vsub.f32 %v920, %v921
        %v923 = vand.u32 %v922, 4294901760
        %924 = vmatpush1.msra.mxu0 %v923
        %v925 = vand.u32 %v527, 4294901760
        %v926 = vsub.f32 %v527, %v925
        %v927 = vand.u32 %v926, 4294901760
        %v928 = vsub.f32 %v926, %v927
        %v929 = vand.u32 %v928, 4294901760
        %930 = vmatprep.subr.mxu0 %v929
        %v931 = vand.u32 %v526, 4294901760
        %v932 = vsub.f32 %v526, %v931
        %v933 = vand.u32 %v932, 4294901760
        %v934 = vsub.f32 %v932, %v933
        %v935 = vand.u32 %v934, 4294901760
        %936 = vmatpush1.msra.mxu0 %v935
        %v937 = vand.u32 %v529, 4294901760
        %v938 = vsub.f32 %v529, %v937
        %v939 = vand.u32 %v938, 4294901760
        %v940 = vsub.f32 %v938, %v939
        %v941 = vand.u32 %v940, 4294901760
        %942 = vmatprep.subr.mxu0 %v941
        %v943 = vand.u32 %v528, 4294901760
        %v944 = vsub.f32 %v528, %v943
        %v945 = vand.u32 %v944, 4294901760
        %v946 = vsub.f32 %v944, %v945
        %v947 = vand.u32 %v946, 4294901760
        %948 = vmatpush1.msra.mxu0 %v947
        %v949 = vand.u32 %v531, 4294901760
        %v950 = vsub.f32 %v531, %v949
        %v951 = vand.u32 %v950, 4294901760
        %v952 = vsub.f32 %v950, %v951
        %v953 = vand.u32 %v952, 4294901760
        %954 = vmatprep.subr.mxu0 %v953
        %v955 = vand.u32 %v530, 4294901760
        %v956 = vsub.f32 %v530, %v955
        %v957 = vand.u32 %v956, 4294901760
        %v958 = vsub.f32 %v956, %v957
        %v959 = vand.u32 %v958, 4294901760
        %960 = vmatpush1.msra.mxu0 %v959
        %v961 = vand.u32 %v533, 4294901760
        %v962 = vsub.f32 %v533, %v961
        %v963 = vand.u32 %v962, 4294901760
        %v964 = vsub.f32 %v962, %v963
        %v965 = vand.u32 %v964, 4294901760
        %966 = vmatprep.subr.mxu0 %v965
        %v967 = vand.u32 %v532, 4294901760
        %v968 = vsub.f32 %v532, %v967
        %v969 = vand.u32 %v968, 4294901760
        %v970 = vsub.f32 %v968, %v969
        %v971 = vand.u32 %v970, 4294901760
        %972 = vmatpush1.msra.mxu0 %v971
        %v973 = vand.u32 %v535, 4294901760
        %v974 = vsub.f32 %v535, %v973
        %v975 = vand.u32 %v974, 4294901760
        %v976 = vsub.f32 %v974, %v975
        %v977 = vand.u32 %v976, 4294901760
        %978 = vmatprep.subr.mxu0 %v977
        %v979 = vand.u32 %v534, 4294901760
        %v980 = vsub.f32 %v534, %v979
        %v981 = vand.u32 %v980, 4294901760
        %v982 = vsub.f32 %v980, %v981
        %v983 = vand.u32 %v982, 4294901760
        %984 = vmatpush1.msra.mxu0 %v983
        %v985 = vand.u32 %v537, 4294901760
        %v986 = vsub.f32 %v537, %v985
        %v987 = vand.u32 %v986, 4294901760
        %v988 = vsub.f32 %v986, %v987
        %v989 = vand.u32 %v988, 4294901760
        %990 = vmatprep.subr.mxu0 %v989
        %v991 = vand.u32 %v536, 4294901760
        %v992 = vsub.f32 %v536, %v991
        %v993 = vand.u32 %v992, 4294901760
        %v994 = vsub.f32 %v992, %v993
        %v995 = vand.u32 %v994, 4294901760
        %996 = vmatpush1.msra.mxu0 %v995
        %v997 = vand.u32 %v539, 4294901760
        %v998 = vsub.f32 %v539, %v997
        %v999 = vand.u32 %v998, 4294901760
        %v1000 = vsub.f32 %v998, %v999
        %v1001 = vand.u32 %v1000, 4294901760
        %1002 = vmatprep.subr.mxu0 %v1001
        %v1003 = vand.u32 %v538, 4294901760
        %v1004 = vsub.f32 %v538, %v1003
        %v1005 = vand.u32 %v1004, 4294901760
        %v1006 = vsub.f32 %v1004, %v1005
        %v1007 = vand.u32 %v1006, 4294901760
        %1008 = vmatpush1.msra.mxu0 %v1007
        %v1009 = vand.u32 %v541, 4294901760
        %v1010 = vsub.f32 %v541, %v1009
        %v1011 = vand.u32 %v1010, 4294901760
        %v1012 = vsub.f32 %v1010, %v1011
        %v1013 = vand.u32 %v1012, 4294901760
        %1014 = vmatprep.subr.mxu0 %v1013
        %v1015 = vand.u32 %v540, 4294901760
        %v1016 = vsub.f32 %v540, %v1015
        %v1017 = vand.u32 %v1016, 4294901760
        %v1018 = vsub.f32 %v1016, %v1017
        %v1019 = vand.u32 %v1018, 4294901760
        %1020 = vmatpush1.msra.mxu0 %v1019
        %v1021 = vand.u32 %v543, 4294901760
        %v1022 = vsub.f32 %v543, %v1021
        %v1023 = vand.u32 %v1022, 4294901760
        %v1024 = vsub.f32 %v1022, %v1023
        %v1025 = vand.u32 %v1024, 4294901760
        %1026 = vmatprep.subr.mxu0 %v1025
        %v1027 = vand.u32 %v542, 4294901760
        %v1028 = vsub.f32 %v542, %v1027
        %v1029 = vand.u32 %v1028, 4294901760
        %v1030 = vsub.f32 %v1028, %v1029
        %v1031 = vand.u32 %v1030, 4294901760
        %1032 = vmatpush1.msra.mxu0 %v1031
        %v1033 = vand.u32 %v545, 4294901760
        %v1034 = vsub.f32 %v545, %v1033
        %v1035 = vand.u32 %v1034, 4294901760
        %v1036 = vsub.f32 %v1034, %v1035
        %v1037 = vand.u32 %v1036, 4294901760
        %1038 = vmatprep.subr.mxu0 %v1037
        %v1039 = vand.u32 %v544, 4294901760
        %v1040 = vsub.f32 %v544, %v1039
        %v1041 = vand.u32 %v1040, 4294901760
        %v1042 = vsub.f32 %v1040, %v1041
        %v1043 = vand.u32 %v1042, 4294901760
        %1044 = vmatpush1.msra.mxu0 %v1043
        %v1045 = vand.u32 %v547, 4294901760
        %v1046 = vsub.f32 %v547, %v1045
        %v1047 = vand.u32 %v1046, 4294901760
        %v1048 = vsub.f32 %v1046, %v1047
        %v1049 = vand.u32 %v1048, 4294901760
        %1050 = vmatprep.subr.mxu0 %v1049
        %v1051 = vand.u32 %v546, 4294901760
        %v1052 = vsub.f32 %v546, %v1051
        %v1053 = vand.u32 %v1052, 4294901760
        %v1054 = vsub.f32 %v1052, %v1053
        %v1055 = vand.u32 %v1054, 4294901760
        %1056 = vmatpush1.msra.mxu0 %v1055
        %v1057 = vand.u32 %v549, 4294901760
        %v1058 = vsub.f32 %v549, %v1057
        %v1059 = vand.u32 %v1058, 4294901760
        %v1060 = vsub.f32 %v1058, %v1059
        %v1061 = vand.u32 %v1060, 4294901760
        %1062 = vmatprep.subr.mxu0 %v1061
        %v1063 = vand.u32 %v548, 4294901760
        %v1064 = vsub.f32 %v548, %v1063
        %v1065 = vand.u32 %v1064, 4294901760
        %v1066 = vsub.f32 %v1064, %v1065
        %v1067 = vand.u32 %v1066, 4294901760
        %1068 = vmatpush1.msra.mxu0 %v1067
        %v1069 = vand.u32 %v551, 4294901760
        %v1070 = vsub.f32 %v551, %v1069
        %v1071 = vand.u32 %v1070, 4294901760
        %v1072 = vsub.f32 %v1070, %v1071
        %v1073 = vand.u32 %v1072, 4294901760
        %1074 = vmatprep.subr.mxu0 %v1073
        %v1075 = vand.u32 %v550, 4294901760
        %v1076 = vsub.f32 %v550, %v1075
        %v1077 = vand.u32 %v1076, 4294901760
        %v1078 = vsub.f32 %v1076, %v1077
        %v1079 = vand.u32 %v1078, 4294901760
        %1080 = vmatpush1.msra.mxu0 %v1079
        %v1081 = vand.u32 %v553, 4294901760
        %v1082 = vsub.f32 %v553, %v1081
        %v1083 = vand.u32 %v1082, 4294901760
        %v1084 = vsub.f32 %v1082, %v1083
        %v1085 = vand.u32 %v1084, 4294901760
        %1086 = vmatprep.subr.mxu0 %v1085
        %v1087 = vand.u32 %v552, 4294901760
        %v1088 = vsub.f32 %v552, %v1087
        %v1089 = vand.u32 %v1088, 4294901760
        %v1090 = vsub.f32 %v1088, %v1089
        %v1091 = vand.u32 %v1090, 4294901760
        %1092 = vmatpush1.msra.mxu0 %v1091
        %v1093 = vand.u32 %v555, 4294901760
        %v1094 = vsub.f32 %v555, %v1093
        %v1095 = vand.u32 %v1094, 4294901760
        %v1096 = vsub.f32 %v1094, %v1095
        %v1097 = vand.u32 %v1096, 4294901760
        %1098 = vmatprep.subr.mxu0 %v1097
        %v1099 = vand.u32 %v554, 4294901760
        %v1100 = vsub.f32 %v554, %v1099
        %v1101 = vand.u32 %v1100, 4294901760
        %v1102 = vsub.f32 %v1100, %v1101
        %v1103 = vand.u32 %v1102, 4294901760
        %1104 = vmatpush1.msra.mxu0 %v1103
        %v1105 = vand.u32 %v557, 4294901760
        %v1106 = vsub.f32 %v557, %v1105
        %v1107 = vand.u32 %v1106, 4294901760
        %v1108 = vsub.f32 %v1106, %v1107
        %v1109 = vand.u32 %v1108, 4294901760
        %1110 = vmatprep.subr.mxu0 %v1109
        %v1111 = vand.u32 %v556, 4294901760
        %v1112 = vsub.f32 %v556, %v1111
        %v1113 = vand.u32 %v1112, 4294901760
        %v1114 = vsub.f32 %v1112, %v1113
        %v1115 = vand.u32 %v1114, 4294901760
        %1116 = vmatpush1.msra.mxu0 %v1115
        %v1117 = vand.u32 %v559, 4294901760
        %v1118 = vsub.f32 %v559, %v1117
        %v1119 = vand.u32 %v1118, 4294901760
        %v1120 = vsub.f32 %v1118, %v1119
        %v1121 = vand.u32 %v1120, 4294901760
        %1122 = vmatprep.subr.mxu0 %v1121
        %v1123 = vand.u32 %v558, 4294901760
        %v1124 = vsub.f32 %v558, %v1123
        %v1125 = vand.u32 %v1124, 4294901760
        %v1126 = vsub.f32 %v1124, %v1125
        %v1127 = vand.u32 %v1126, 4294901760
        %1128 = vmatpush1.msra.mxu0 %v1127
        %v1129 = vand.u32 %v561, 4294901760
        %v1130 = vsub.f32 %v561, %v1129
        %v1131 = vand.u32 %v1130, 4294901760
        %v1132 = vsub.f32 %v1130, %v1131
        %v1133 = vand.u32 %v1132, 4294901760
        %1134 = vmatprep.subr.mxu0 %v1133
        %v1135 = vand.u32 %v560, 4294901760
        %v1136 = vsub.f32 %v560, %v1135
        %v1137 = vand.u32 %v1136, 4294901760
        %v1138 = vsub.f32 %v1136, %v1137
        %v1139 = vand.u32 %v1138, 4294901760
        %1140 = vmatpush1.msra.mxu0 %v1139
        %v1141 = vand.u32 %v563, 4294901760
        %v1142 = vsub.f32 %v563, %v1141
        %v1143 = vand.u32 %v1142, 4294901760
        %v1144 = vsub.f32 %v1142, %v1143
        %v1145 = vand.u32 %v1144, 4294901760
        %1146 = vmatprep.subr.mxu0 %v1145
        %v1147 = vand.u32 %v562, 4294901760
        %v1148 = vsub.f32 %v562, %v1147
        %v1149 = vand.u32 %v1148, 4294901760
        %v1150 = vsub.f32 %v1148, %v1149
        %v1151 = vand.u32 %v1150, 4294901760
        %1152 = vmatpush1.msra.mxu0 %v1151
        %v1153 = vand.u32 %v493, 4294901760
        %1154 = vmatprep.mubr.f32.mxu0 %v1153
        %v1155 = vand.u32 %v492, 4294901760
        %1156 = vmatmul.mubr.f32.gmra.mrb[0].mxu0 %v1155
        %v1157 = vpop.f32.mrb[0].mxu0
        %v1158 = vadd.f32 %v717, %v1157
        %v1159 = vpop.f32.mrb[0].mxu0
        %v1160 = vadd.f32 %v719, %v1159
        %v1161 = vand.u32 %v495, 4294901760
        %1162 = vmatprep.mubr.f32.mxu0 %v1161
        %v1163 = vand.u32 %v494, 4294901760
        %1164 = vmatmul.mubr.f32.gmra.mrb[0].mxu0 %v1163
        %v1165 = vpop.f32.mrb[0].mxu0
        %v1166 = vadd.f32 %v733, %v1165
        %v1167 = vpop.f32.mrb[0].mxu0
        %v1168 = vadd.f32 %v735, %v1167
        %v1169 = vand.u32 %v497, 4294901760
        %1170 = vmatprep.mubr.f32.mxu0 %v1169
        %v1171 = vand.u32 %v496, 4294901760
        %1172 = vmatmul.mubr.f32.gmra.mrb[0].mxu0 %v1171
        %v1173 = vpop.f32.mrb[0].mxu0
        %v1174 = vadd.f32 %v749, %v1173
        %v1175 = vpop.f32.mrb[0].mxu0
        %v1176 = vadd.f32 %v751, %v1175
        %v1177 = vand.u32 %v499, 4294901760
        %1178 = vmatprep.mubr.f32.mxu0 %v1177
        %v1179 = vand.u32 %v498, 4294901760
        %1180 = vmatmul.mubr.f32.gmra.mrb[0].mxu0 %v1179
        %v1181 = vpop.f32.mrb[0].mxu0
        %v1182 = vadd.f32 %v765, %v1181
        %v1183 = vpop.f32.mrb[0].mxu0
        %v1184 = vadd.f32 %v767, %v1183
        %1185 = vdwg.mxu0
        %v1186 = vand.u32 %v501, 4294901760
        %v1187 = vsub.f32 %v501, %v1186
        %1188 = vmatprep.subr.mxu0 %v1187
        %v1189 = vand.u32 %v500, 4294901760
        %v1190 = vsub.f32 %v500, %v1189
        %1191 = vmatpush1.msra.mxu0 %v1190
        %v1192 = vand.u32 %v503, 4294901760
        %v1193 = vsub.f32 %v503, %v1192
        %1194 = vmatprep.subr.mxu0 %v1193
        %v1195 = vand.u32 %v502, 4294901760
        %v1196 = vsub.f32 %v502, %v1195
        %1197 = vmatpush1.msra.mxu0 %v1196
        %v1198 = vand.u32 %v505, 4294901760
        %v1199 = vsub.f32 %v505, %v1198
        %1200 = vmatprep.subr.mxu0 %v1199
        %v1201 = vand.u32 %v504, 4294901760
        %v1202 = vsub.f32 %v504, %v1201
        %1203 = vmatpush1.msra.mxu0 %v1202
        %v1204 = vand.u32 %v507, 4294901760
        %v1205 = vsub.f32 %v507, %v1204
        %1206 = vmatprep.subr.mxu0 %v1205
        %v1207 = vand.u32 %v506, 4294901760
        %v1208 = vsub.f32 %v506, %v1207
        %1209 = vmatpush1.msra.mxu0 %v1208
        %v1210 = vand.u32 %v509, 4294901760
        %v1211 = vsub.f32 %v509, %v1210
        %1212 = vmatprep.subr.mxu0 %v1211
        %v1213 = vand.u32 %v508, 4294901760
        %v1214 = vsub.f32 %v508, %v1213
        %1215 = vmatpush1.msra.mxu0 %v1214
        %v1216 = vand.u32 %v511, 4294901760
        %v1217 = vsub.f32 %v511, %v1216
        %1218 = vmatprep.subr.mxu0 %v1217
        %v1219 = vand.u32 %v510, 4294901760
        %v1220 = vsub.f32 %v510, %v1219
        %1221 = vmatpush1.msra.mxu0 %v1220
        %v1222 = vand.u32 %v513, 4294901760
        %v1223 = vsub.f32 %v513, %v1222
        %1224 = vmatprep.subr.mxu0 %v1223
        %v1225 = vand.u32 %v512, 4294901760
        %v1226 = vsub.f32 %v512, %v1225
        %1227 = vmatpush1.msra.mxu0 %v1226
        %v1228 = vand.u32 %v515, 4294901760
        %v1229 = vsub.f32 %v515, %v1228
        %1230 = vmatprep.subr.mxu0 %v1229
        %v1231 = vand.u32 %v514, 4294901760
        %v1232 = vsub.f32 %v514, %v1231
        %1233 = vmatpush1.msra.mxu0 %v1232
        %v1234 = vand.u32 %v517, 4294901760
        %v1235 = vsub.f32 %v517, %v1234
        %1236 = vmatprep.subr.mxu0 %v1235
        %v1237 = vand.u32 %v516, 4294901760
        %v1238 = vsub.f32 %v516, %v1237
        %1239 = vmatpush1.msra.mxu0 %v1238
        %v1240 = vand.u32 %v519, 4294901760
        %v1241 = vsub.f32 %v519, %v1240
        %1242 = vmatprep.subr.mxu0 %v1241
        %v1243 = vand.u32 %v518, 4294901760
        %v1244 = vsub.f32 %v518, %v1243
        %1245 = vmatpush1.msra.mxu0 %v1244
        %v1246 = vand.u32 %v521, 4294901760
        %v1247 = vsub.f32 %v521, %v1246
        %1248 = vmatprep.subr.mxu0 %v1247
        %v1249 = vand.u32 %v520, 4294901760
        %v1250 = vsub.f32 %v520, %v1249
        %1251 = vmatpush1.msra.mxu0 %v1250
        %v1252 = vand.u32 %v523, 4294901760
        %v1253 = vsub.f32 %v523, %v1252
        %1254 = vmatprep.subr.mxu0 %v1253
        %v1255 = vand.u32 %v522, 4294901760
        %v1256 = vsub.f32 %v522, %v1255
        %1257 = vmatpush1.msra.mxu0 %v1256
        %v1258 = vand.u32 %v525, 4294901760
        %v1259 = vsub.f32 %v525, %v1258
        %1260 = vmatprep.subr.mxu0 %v1259
        %v1261 = vand.u32 %v524, 4294901760
        %v1262 = vsub.f32 %v524, %v1261
        %1263 = vmatpush1.msra.mxu0 %v1262
        %v1264 = vand.u32 %v527, 4294901760
        %v1265 = vsub.f32 %v527, %v1264
        %1266 = vmatprep.subr.mxu0 %v1265
        %v1267 = vand.u32 %v526, 4294901760
        %v1268 = vsub.f32 %v526, %v1267
        %1269 = vmatpush1.msra.mxu0 %v1268
        %v1270 = vand.u32 %v529, 4294901760
        %v1271 = vsub.f32 %v529, %v1270
        %1272 = vmatprep.subr.mxu0 %v1271
        %v1273 = vand.u32 %v528, 4294901760
        %v1274 = vsub.f32 %v528, %v1273
        %1275 = vmatpush1.msra.mxu0 %v1274
        %v1276 = vand.u32 %v531, 4294901760
        %v1277 = vsub.f32 %v531, %v1276
        %1278 = vmatprep.subr.mxu0 %v1277
        %v1279 = vand.u32 %v530, 4294901760
        %v1280 = vsub.f32 %v530, %v1279
        %1281 = vmatpush1.msra.mxu0 %v1280
        %v1282 = vand.u32 %v533, 4294901760
        %v1283 = vsub.f32 %v533, %v1282
        %1284 = vmatprep.subr.mxu0 %v1283
        %v1285 = vand.u32 %v532, 4294901760
        %v1286 = vsub.f32 %v532, %v1285
        %1287 = vmatpush1.msra.mxu0 %v1286
        %v1288 = vand.u32 %v535, 4294901760
        %v1289 = vsub.f32 %v535, %v1288
        %1290 = vmatprep.subr.mxu0 %v1289
        %v1291 = vand.u32 %v534, 4294901760
        %v1292 = vsub.f32 %v534, %v1291
        %1293 = vmatpush1.msra.mxu0 %v1292
        %v1294 = vand.u32 %v537, 4294901760
        %v1295 = vsub.f32 %v537, %v1294
        %1296 = vmatprep.subr.mxu0 %v1295
        %v1297 = vand.u32 %v536, 4294901760
        %v1298 = vsub.f32 %v536, %v1297
        %1299 = vmatpush1.msra.mxu0 %v1298
        %v1300 = vand.u32 %v539, 4294901760
        %v1301 = vsub.f32 %v539, %v1300
        %1302 = vmatprep.subr.mxu0 %v1301
        %v1303 = vand.u32 %v538, 4294901760
        %v1304 = vsub.f32 %v538, %v1303
        %1305 = vmatpush1.msra.mxu0 %v1304
        %v1306 = vand.u32 %v541, 4294901760
        %v1307 = vsub.f32 %v541, %v1306
        %1308 = vmatprep.subr.mxu0 %v1307
        %v1309 = vand.u32 %v540, 4294901760
        %v1310 = vsub.f32 %v540, %v1309
        %1311 = vmatpush1.msra.mxu0 %v1310
        %v1312 = vand.u32 %v543, 4294901760
        %v1313 = vsub.f32 %v543, %v1312
        %1314 = vmatprep.subr.mxu0 %v1313
        %v1315 = vand.u32 %v542, 4294901760
        %v1316 = vsub.f32 %v542, %v1315
        %1317 = vmatpush1.msra.mxu0 %v1316
        %v1318 = vand.u32 %v545, 4294901760
        %v1319 = vsub.f32 %v545, %v1318
        %1320 = vmatprep.subr.mxu0 %v1319
        %v1321 = vand.u32 %v544, 4294901760
        %v1322 = vsub.f32 %v544, %v1321
        %1323 = vmatpush1.msra.mxu0 %v1322
        %v1324 = vand.u32 %v547, 4294901760
        %v1325 = vsub.f32 %v547, %v1324
        %1326 = vmatprep.subr.mxu0 %v1325
        %v1327 = vand.u32 %v546, 4294901760
        %v1328 = vsub.f32 %v546, %v1327
        %1329 = vmatpush1.msra.mxu0 %v1328
        %v1330 = vand.u32 %v549, 4294901760
        %v1331 = vsub.f32 %v549, %v1330
        %1332 = vmatprep.subr.mxu0 %v1331
        %v1333 = vand.u32 %v548, 4294901760
        %v1334 = vsub.f32 %v548, %v1333
        %1335 = vmatpush1.msra.mxu0 %v1334
        %v1336 = vand.u32 %v551, 4294901760
        %v1337 = vsub.f32 %v551, %v1336
        %1338 = vmatprep.subr.mxu0 %v1337
        %v1339 = vand.u32 %v550, 4294901760
        %v1340 = vsub.f32 %v550, %v1339
        %1341 = vmatpush1.msra.mxu0 %v1340
        %v1342 = vand.u32 %v553, 4294901760
        %v1343 = vsub.f32 %v553, %v1342
        %1344 = vmatprep.subr.mxu0 %v1343
        %v1345 = vand.u32 %v552, 4294901760
        %v1346 = vsub.f32 %v552, %v1345
        %1347 = vmatpush1.msra.mxu0 %v1346
        %v1348 = vand.u32 %v555, 4294901760
        %v1349 = vsub.f32 %v555, %v1348
        %1350 = vmatprep.subr.mxu0 %v1349
        %v1351 = vand.u32 %v554, 4294901760
        %v1352 = vsub.f32 %v554, %v1351
        %1353 = vmatpush1.msra.mxu0 %v1352
        %v1354 = vand.u32 %v557, 4294901760
        %v1355 = vsub.f32 %v557, %v1354
        %1356 = vmatprep.subr.mxu0 %v1355
        %v1357 = vand.u32 %v556, 4294901760
        %v1358 = vsub.f32 %v556, %v1357
        %1359 = vmatpush1.msra.mxu0 %v1358
        %v1360 = vand.u32 %v559, 4294901760
        %v1361 = vsub.f32 %v559, %v1360
        %1362 = vmatprep.subr.mxu0 %v1361
        %v1363 = vand.u32 %v558, 4294901760
        %v1364 = vsub.f32 %v558, %v1363
        %1365 = vmatpush1.msra.mxu0 %v1364
        %v1366 = vand.u32 %v561, 4294901760
        %v1367 = vsub.f32 %v561, %v1366
        %1368 = vmatprep.subr.mxu0 %v1367
        %v1369 = vand.u32 %v560, 4294901760
        %v1370 = vsub.f32 %v560, %v1369
        %1371 = vmatpush1.msra.mxu0 %v1370
        %v1372 = vand.u32 %v563, 4294901760
        %v1373 = vsub.f32 %v563, %v1372
        %1374 = vmatprep.subr.mxu0 %v1373
        %v1375 = vand.u32 %v562, 4294901760
        %v1376 = vsub.f32 %v562, %v1375
        %1377 = vmatpush1.msra.mxu0 %v1376
        %v1378 = vand.u32 %v493, 4294901760
        %v1379 = vsub.f32 %v493, %v1378
        %1380 = vmatprep.mubr.f32.mxu0 %v1379
        %v1381 = vand.u32 %v492, 4294901760
        %v1382 = vsub.f32 %v492, %v1381
        %1383 = vmatmul.mubr.f32.gmra.mrb[0].mxu0 %v1382
        %v1384 = vpop.f32.mrb[0].mxu0
        %v1385 = vadd.f32 %v1158, %v1384
        %v1386 = vpop.f32.mrb[0].mxu0
        %v1387 = vadd.f32 %v1160, %v1386
        %v1388 = vand.u32 %v495, 4294901760
        %v1389 = vsub.f32 %v495, %v1388
        %1390 = vmatprep.mubr.f32.mxu0 %v1389
        %v1391 = vand.u32 %v494, 4294901760
        %v1392 = vsub.f32 %v494, %v1391
        %1393 = vmatmul.mubr.f32.gmra.mrb[0].mxu0 %v1392
        %v1394 = vpop.f32.mrb[0].mxu0
        %v1395 = vadd.f32 %v1166, %v1394
        %v1396 = vpop.f32.mrb[0].mxu0
        %v1397 = vadd.f32 %v1168, %v1396
        %v1398 = vand.u32 %v497, 4294901760
        %v1399 = vsub.f32 %v497, %v1398
        %1400 = vmatprep.mubr.f32.mxu0 %v1399
        %v1401 = vand.u32 %v496, 4294901760
        %v1402 = vsub.f32 %v496, %v1401
        %1403 = vmatmul.mubr.f32.gmra.mrb[0].mxu0 %v1402
        %v1404 = vpop.f32.mrb[0].mxu0
        %v1405 = vadd.f32 %v1174, %v1404
        %v1406 = vpop.f32.mrb[0].mxu0
        %v1407 = vadd.f32 %v1176, %v1406
        %v1408 = vand.u32 %v499, 4294901760
        %v1409 = vsub.f32 %v499, %v1408
        %1410 = vmatprep.mubr.f32.mxu0 %v1409
        %v1411 = vand.u32 %v498, 4294901760
        %v1412 = vsub.f32 %v498, %v1411
        %1413 = vmatmul.mubr.f32.gmra.mrb[0].mxu0 %v1412
        %v1414 = vpop.f32.mrb[0].mxu0
        %v1415 = vadd.f32 %v1182, %v1414
        %v1416 = vpop.f32.mrb[0].mxu0
        %v1417 = vadd.f32 %v1184, %v1416
        %1418 = vdwg.mxu0
        %v1419 = vand.u32 %v501, 4294901760
        %1420 = vmatprep.subr.mxu0 %v1419
        %v1421 = vand.u32 %v500, 4294901760
        %1422 = vmatpush1.msra.mxu0 %v1421
        %v1423 = vand.u32 %v503, 4294901760
        %1424 = vmatprep.subr.mxu0 %v1423
        %v1425 = vand.u32 %v502, 4294901760
        %1426 = vmatpush1.msra.mxu0 %v1425
        %v1427 = vand.u32 %v505, 4294901760
        %1428 = vmatprep.subr.mxu0 %v1427
        %v1429 = vand.u32 %v504, 4294901760
        %1430 = vmatpush1.msra.mxu0 %v1429
        %v1431 = vand.u32 %v507, 4294901760
        %1432 = vmatprep.subr.mxu0 %v1431
        %v1433 = vand.u32 %v506, 4294901760
        %1434 = vmatpush1.msra.mxu0 %v1433
        %v1435 = vand.u32 %v509, 4294901760
        %1436 = vmatprep.subr.mxu0 %v1435
        %v1437 = vand.u32 %v508, 4294901760
        %1438 = vmatpush1.msra.mxu0 %v1437
        %v1439 = vand.u32 %v511, 4294901760
        %1440 = vmatprep.subr.mxu0 %v1439
        %v1441 = vand.u32 %v510, 4294901760
        %1442 = vmatpush1.msra.mxu0 %v1441
        %v1443 = vand.u32 %v513, 4294901760
        %1444 = vmatprep.subr.mxu0 %v1443
        %v1445 = vand.u32 %v512, 4294901760
        %1446 = vmatpush1.msra.mxu0 %v1445
        %v1447 = vand.u32 %v515, 4294901760
        %1448 = vmatprep.subr.mxu0 %v1447
        %v1449 = vand.u32 %v514, 4294901760
        %1450 = vmatpush1.msra.mxu0 %v1449
        %v1451 = vand.u32 %v517, 4294901760
        %1452 = vmatprep.subr.mxu0 %v1451
        %v1453 = vand.u32 %v516, 4294901760
        %1454 = vmatpush1.msra.mxu0 %v1453
        %v1455 = vand.u32 %v519, 4294901760
        %1456 = vmatprep.subr.mxu0 %v1455
        %v1457 = vand.u32 %v518, 4294901760
        %1458 = vmatpush1.msra.mxu0 %v1457
        %v1459 = vand.u32 %v521, 4294901760
        %1460 = vmatprep.subr.mxu0 %v1459
        %v1461 = vand.u32 %v520, 4294901760
        %1462 = vmatpush1.msra.mxu0 %v1461
        %v1463 = vand.u32 %v523, 4294901760
        %1464 = vmatprep.subr.mxu0 %v1463
        %v1465 = vand.u32 %v522, 4294901760
        %1466 = vmatpush1.msra.mxu0 %v1465
        %v1467 = vand.u32 %v525, 4294901760
        %1468 = vmatprep.subr.mxu0 %v1467
        %v1469 = vand.u32 %v524, 4294901760
        %1470 = vmatpush1.msra.mxu0 %v1469
        %v1471 = vand.u32 %v527, 4294901760
        %1472 = vmatprep.subr.mxu0 %v1471
        %v1473 = vand.u32 %v526, 4294901760
        %1474 = vmatpush1.msra.mxu0 %v1473
        %v1475 = vand.u32 %v529, 4294901760
        %1476 = vmatprep.subr.mxu0 %v1475
        %v1477 = vand.u32 %v528, 4294901760
        %1478 = vmatpush1.msra.mxu0 %v1477
        %v1479 = vand.u32 %v531, 4294901760
        %1480 = vmatprep.subr.mxu0 %v1479
        %v1481 = vand.u32 %v530, 4294901760
        %1482 = vmatpush1.msra.mxu0 %v1481
        %v1483 = vand.u32 %v533, 4294901760
        %1484 = vmatprep.subr.mxu0 %v1483
        %v1485 = vand.u32 %v532, 4294901760
        %1486 = vmatpush1.msra.mxu0 %v1485
        %v1487 = vand.u32 %v535, 4294901760
        %1488 = vmatprep.subr.mxu0 %v1487
        %v1489 = vand.u32 %v534, 4294901760
        %1490 = vmatpush1.msra.mxu0 %v1489
        %v1491 = vand.u32 %v537, 4294901760
        %1492 = vmatprep.subr.mxu0 %v1491
        %v1493 = vand.u32 %v536, 4294901760
        %1494 = vmatpush1.msra.mxu0 %v1493
        %v1495 = vand.u32 %v539, 4294901760
        %1496 = vmatprep.subr.mxu0 %v1495
        %v1497 = vand.u32 %v538, 4294901760
        %1498 = vmatpush1.msra.mxu0 %v1497
        %v1499 = vand.u32 %v541, 4294901760
        %1500 = vmatprep.subr.mxu0 %v1499
        %v1501 = vand.u32 %v540, 4294901760
        %1502 = vmatpush1.msra.mxu0 %v1501
        %v1503 = vand.u32 %v543, 4294901760
        %1504 = vmatprep.subr.mxu0 %v1503
        %v1505 = vand.u32 %v542, 4294901760
        %1506 = vmatpush1.msra.mxu0 %v1505
        %v1507 = vand.u32 %v545, 4294901760
        %1508 = vmatprep.subr.mxu0 %v1507
        %v1509 = vand.u32 %v544, 4294901760
        %1510 = vmatpush1.msra.mxu0 %v1509
        %v1511 = vand.u32 %v547, 4294901760
        %1512 = vmatprep.subr.mxu0 %v1511
        %v1513 = vand.u32 %v546, 4294901760
        %1514 = vmatpush1.msra.mxu0 %v1513
        %v1515 = vand.u32 %v549, 4294901760
        %1516 = vmatprep.subr.mxu0 %v1515
        %v1517 = vand.u32 %v548, 4294901760
        %1518 = vmatpush1.msra.mxu0 %v1517
        %v1519 = vand.u32 %v551, 4294901760
        %1520 = vmatprep.subr.mxu0 %v1519
        %v1521 = vand.u32 %v550, 4294901760
        %1522 = vmatpush1.msra.mxu0 %v1521
        %v1523 = vand.u32 %v553, 4294901760
        %1524 = vmatprep.subr.mxu0 %v1523
        %v1525 = vand.u32 %v552, 4294901760
        %1526 = vmatpush1.msra.mxu0 %v1525
        %v1527 = vand.u32 %v555, 4294901760
        %1528 = vmatprep.subr.mxu0 %v1527
        %v1529 = vand.u32 %v554, 4294901760
        %1530 = vmatpush1.msra.mxu0 %v1529
        %v1531 = vand.u32 %v557, 4294901760
        %1532 = vmatprep.subr.mxu0 %v1531
        %v1533 = vand.u32 %v556, 4294901760
        %1534 = vmatpush1.msra.mxu0 %v1533
        %v1535 = vand.u32 %v559, 4294901760
        %1536 = vmatprep.subr.mxu0 %v1535
        %v1537 = vand.u32 %v558, 4294901760
        %1538 = vmatpush1.msra.mxu0 %v1537
        %v1539 = vand.u32 %v561, 4294901760
        %1540 = vmatprep.subr.mxu0 %v1539
        %v1541 = vand.u32 %v560, 4294901760
        %1542 = vmatpush1.msra.mxu0 %v1541
        %v1543 = vand.u32 %v563, 4294901760
        %1544 = vmatprep.subr.mxu0 %v1543
        %v1545 = vand.u32 %v562, 4294901760
        %1546 = vmatpush1.msra.mxu0 %v1545
        %v1547 = vand.u32 %v493, 4294901760
        %v1548 = vsub.f32 %v493, %v1547
        %v1549 = vand.u32 %v1548, 4294901760
        %1550 = vmatprep.mubr.f32.mxu0 %v1549
        %v1551 = vand.u32 %v492, 4294901760
        %v1552 = vsub.f32 %v492, %v1551
        %v1553 = vand.u32 %v1552, 4294901760
        %1554 = vmatmul.mubr.f32.gmra.mrb[0].mxu0 %v1553
        %v1555 = vpop.f32.mrb[0].mxu0
        %v1556 = vadd.f32 %v1385, %v1555
        %v1557 = vpop.f32.mrb[0].mxu0
        %v1558 = vadd.f32 %v1387, %v1557
        %v1559 = vand.u32 %v495, 4294901760
        %v1560 = vsub.f32 %v495, %v1559
        %v1561 = vand.u32 %v1560, 4294901760
        %1562 = vmatprep.mubr.f32.mxu0 %v1561
        %v1563 = vand.u32 %v494, 4294901760
        %v1564 = vsub.f32 %v494, %v1563
        %v1565 = vand.u32 %v1564, 4294901760
        %1566 = vmatmul.mubr.f32.gmra.mrb[0].mxu0 %v1565
        %v1567 = vpop.f32.mrb[0].mxu0
        %v1568 = vadd.f32 %v1395, %v1567
        %v1569 = vpop.f32.mrb[0].mxu0
        %v1570 = vadd.f32 %v1397, %v1569
        %v1571 = vand.u32 %v497, 4294901760
        %v1572 = vsub.f32 %v497, %v1571
        %v1573 = vand.u32 %v1572, 4294901760
        %1574 = vmatprep.mubr.f32.mxu0 %v1573
        %v1575 = vand.u32 %v496, 4294901760
        %v1576 = vsub.f32 %v496, %v1575
        %v1577 = vand.u32 %v1576, 4294901760
        %1578 = vmatmul.mubr.f32.gmra.mrb[0].mxu0 %v1577
        %v1579 = vpop.f32.mrb[0].mxu0
        %v1580 = vadd.f32 %v1405, %v1579
        %v1581 = vpop.f32.mrb[0].mxu0
        %v1582 = vadd.f32 %v1407, %v1581
        %v1583 = vand.u32 %v499, 4294901760
        %v1584 = vsub.f32 %v499, %v1583
        %v1585 = vand.u32 %v1584, 4294901760
        %1586 = vmatprep.mubr.f32.mxu0 %v1585
        %v1587 = vand.u32 %v498, 4294901760
        %v1588 = vsub.f32 %v498, %v1587
        %v1589 = vand.u32 %v1588, 4294901760
        %1590 = vmatmul.mubr.f32.gmra.mrb[0].mxu0 %v1589
        %v1591 = vpop.f32.mrb[0].mxu0
        %v1592 = vadd.f32 %v1415, %v1591
        %v1593 = vpop.f32.mrb[0].mxu0
        %v1594 = vadd.f32 %v1417, %v1593
        %1595 = vdwg.mxu0
        %v1596 = vand.u32 %v501, 4294901760
        %v1597 = vsub.f32 %v501, %v1596
        %v1598 = vand.u32 %v1597, 4294901760
        %1599 = vmatprep.subr.mxu0 %v1598
        %v1600 = vand.u32 %v500, 4294901760
        %v1601 = vsub.f32 %v500, %v1600
        %v1602 = vand.u32 %v1601, 4294901760
        %1603 = vmatpush1.msra.mxu0 %v1602
        %v1604 = vand.u32 %v503, 4294901760
        %v1605 = vsub.f32 %v503, %v1604
        %v1606 = vand.u32 %v1605, 4294901760
        %1607 = vmatprep.subr.mxu0 %v1606
        %v1608 = vand.u32 %v502, 4294901760
        %v1609 = vsub.f32 %v502, %v1608
        %v1610 = vand.u32 %v1609, 4294901760
        %1611 = vmatpush1.msra.mxu0 %v1610
        %v1612 = vand.u32 %v505, 4294901760
        %v1613 = vsub.f32 %v505, %v1612
        %v1614 = vand.u32 %v1613, 4294901760
        %1615 = vmatprep.subr.mxu0 %v1614
        %v1616 = vand.u32 %v504, 4294901760
        %v1617 = vsub.f32 %v504, %v1616
        %v1618 = vand.u32 %v1617, 4294901760
        %1619 = vmatpush1.msra.mxu0 %v1618
        %v1620 = vand.u32 %v507, 4294901760
        %v1621 = vsub.f32 %v507, %v1620
        %v1622 = vand.u32 %v1621, 4294901760
        %1623 = vmatprep.subr.mxu0 %v1622
        %v1624 = vand.u32 %v506, 4294901760
        %v1625 = vsub.f32 %v506, %v1624
        %v1626 = vand.u32 %v1625, 4294901760
        %1627 = vmatpush1.msra.mxu0 %v1626
        %v1628 = vand.u32 %v509, 4294901760
        %v1629 = vsub.f32 %v509, %v1628
        %v1630 = vand.u32 %v1629, 4294901760
        %1631 = vmatprep.subr.mxu0 %v1630
        %v1632 = vand.u32 %v508, 4294901760
        %v1633 = vsub.f32 %v508, %v1632
        %v1634 = vand.u32 %v1633, 4294901760
        %1635 = vmatpush1.msra.mxu0 %v1634
        %v1636 = vand.u32 %v511, 4294901760
        %v1637 = vsub.f32 %v511, %v1636
        %v1638 = vand.u32 %v1637, 4294901760
        %1639 = vmatprep.subr.mxu0 %v1638
        %v1640 = vand.u32 %v510, 4294901760
        %v1641 = vsub.f32 %v510, %v1640
        %v1642 = vand.u32 %v1641, 4294901760
        %1643 = vmatpush1.msra.mxu0 %v1642
        %v1644 = vand.u32 %v513, 4294901760
        %v1645 = vsub.f32 %v513, %v1644
        %v1646 = vand.u32 %v1645, 4294901760
        %1647 = vmatprep.subr.mxu0 %v1646
        %v1648 = vand.u32 %v512, 4294901760
        %v1649 = vsub.f32 %v512, %v1648
        %v1650 = vand.u32 %v1649, 4294901760
        %1651 = vmatpush1.msra.mxu0 %v1650
        %v1652 = vand.u32 %v515, 4294901760
        %v1653 = vsub.f32 %v515, %v1652
        %v1654 = vand.u32 %v1653, 4294901760
        %1655 = vmatprep.subr.mxu0 %v1654
        %v1656 = vand.u32 %v514, 4294901760
        %v1657 = vsub.f32 %v514, %v1656
        %v1658 = vand.u32 %v1657, 4294901760
        %1659 = vmatpush1.msra.mxu0 %v1658
        %v1660 = vand.u32 %v517, 4294901760
        %v1661 = vsub.f32 %v517, %v1660
        %v1662 = vand.u32 %v1661, 4294901760
        %1663 = vmatprep.subr.mxu0 %v1662
        %v1664 = vand.u32 %v516, 4294901760
        %v1665 = vsub.f32 %v516, %v1664
        %v1666 = vand.u32 %v1665, 4294901760
        %1667 = vmatpush1.msra.mxu0 %v1666
        %v1668 = vand.u32 %v519, 4294901760
        %v1669 = vsub.f32 %v519, %v1668
        %v1670 = vand.u32 %v1669, 4294901760
        %1671 = vmatprep.subr.mxu0 %v1670
        %v1672 = vand.u32 %v518, 4294901760
        %v1673 = vsub.f32 %v518, %v1672
        %v1674 = vand.u32 %v1673, 4294901760
        %1675 = vmatpush1.msra.mxu0 %v1674
        %v1676 = vand.u32 %v521, 4294901760
        %v1677 = vsub.f32 %v521, %v1676
        %v1678 = vand.u32 %v1677, 4294901760
        %1679 = vmatprep.subr.mxu0 %v1678
        %v1680 = vand.u32 %v520, 4294901760
        %v1681 = vsub.f32 %v520, %v1680
        %v1682 = vand.u32 %v1681, 4294901760
        %1683 = vmatpush1.msra.mxu0 %v1682
        %v1684 = vand.u32 %v523, 4294901760
        %v1685 = vsub.f32 %v523, %v1684
        %v1686 = vand.u32 %v1685, 4294901760
        %1687 = vmatprep.subr.mxu0 %v1686
        %v1688 = vand.u32 %v522, 4294901760
        %v1689 = vsub.f32 %v522, %v1688
        %v1690 = vand.u32 %v1689, 4294901760
        %1691 = vmatpush1.msra.mxu0 %v1690
        %v1692 = vand.u32 %v525, 4294901760
        %v1693 = vsub.f32 %v525, %v1692
        %v1694 = vand.u32 %v1693, 4294901760
        %1695 = vmatprep.subr.mxu0 %v1694
        %v1696 = vand.u32 %v524, 4294901760
        %v1697 = vsub.f32 %v524, %v1696
        %v1698 = vand.u32 %v1697, 4294901760
        %1699 = vmatpush1.msra.mxu0 %v1698
        %v1700 = vand.u32 %v527, 4294901760
        %v1701 = vsub.f32 %v527, %v1700
        %v1702 = vand.u32 %v1701, 4294901760
        %1703 = vmatprep.subr.mxu0 %v1702
        %v1704 = vand.u32 %v526, 4294901760
        %v1705 = vsub.f32 %v526, %v1704
        %v1706 = vand.u32 %v1705, 4294901760
        %1707 = vmatpush1.msra.mxu0 %v1706
        %v1708 = vand.u32 %v529, 4294901760
        %v1709 = vsub.f32 %v529, %v1708
        %v1710 = vand.u32 %v1709, 4294901760
        %1711 = vmatprep.subr.mxu0 %v1710
        %v1712 = vand.u32 %v528, 4294901760
        %v1713 = vsub.f32 %v528, %v1712
        %v1714 = vand.u32 %v1713, 4294901760
        %1715 = vmatpush1.msra.mxu0 %v1714
        %v1716 = vand.u32 %v531, 4294901760
        %v1717 = vsub.f32 %v531, %v1716
        %v1718 = vand.u32 %v1717, 4294901760
        %1719 = vmatprep.subr.mxu0 %v1718
        %v1720 = vand.u32 %v530, 4294901760
        %v1721 = vsub.f32 %v530, %v1720
        %v1722 = vand.u32 %v1721, 4294901760
        %1723 = vmatpush1.msra.mxu0 %v1722
        %v1724 = vand.u32 %v533, 4294901760
        %v1725 = vsub.f32 %v533, %v1724
        %v1726 = vand.u32 %v1725, 4294901760
        %1727 = vmatprep.subr.mxu0 %v1726
        %v1728 = vand.u32 %v532, 4294901760
        %v1729 = vsub.f32 %v532, %v1728
        %v1730 = vand.u32 %v1729, 4294901760
        %1731 = vmatpush1.msra.mxu0 %v1730
        %v1732 = vand.u32 %v535, 4294901760
        %v1733 = vsub.f32 %v535, %v1732
        %v1734 = vand.u32 %v1733, 4294901760
        %1735 = vmatprep.subr.mxu0 %v1734
        %v1736 = vand.u32 %v534, 4294901760
        %v1737 = vsub.f32 %v534, %v1736
        %v1738 = vand.u32 %v1737, 4294901760
        %1739 = vmatpush1.msra.mxu0 %v1738
        %v1740 = vand.u32 %v537, 4294901760
        %v1741 = vsub.f32 %v537, %v1740
        %v1742 = vand.u32 %v1741, 4294901760
        %1743 = vmatprep.subr.mxu0 %v1742
        %v1744 = vand.u32 %v536, 4294901760
        %v1745 = vsub.f32 %v536, %v1744
        %v1746 = vand.u32 %v1745, 4294901760
        %1747 = vmatpush1.msra.mxu0 %v1746
        %v1748 = vand.u32 %v539, 4294901760
        %v1749 = vsub.f32 %v539, %v1748
        %v1750 = vand.u32 %v1749, 4294901760
        %1751 = vmatprep.subr.mxu0 %v1750
        %v1752 = vand.u32 %v538, 4294901760
        %v1753 = vsub.f32 %v538, %v1752
        %v1754 = vand.u32 %v1753, 4294901760
        %1755 = vmatpush1.msra.mxu0 %v1754
        %v1756 = vand.u32 %v541, 4294901760
        %v1757 = vsub.f32 %v541, %v1756
        %v1758 = vand.u32 %v1757, 4294901760
        %1759 = vmatprep.subr.mxu0 %v1758
        %v1760 = vand.u32 %v540, 4294901760
        %v1761 = vsub.f32 %v540, %v1760
        %v1762 = vand.u32 %v1761, 4294901760
        %1763 = vmatpush1.msra.mxu0 %v1762
        %v1764 = vand.u32 %v543, 4294901760
        %v1765 = vsub.f32 %v543, %v1764
        %v1766 = vand.u32 %v1765, 4294901760
        %1767 = vmatprep.subr.mxu0 %v1766
        %v1768 = vand.u32 %v542, 4294901760
        %v1769 = vsub.f32 %v542, %v1768
        %v1770 = vand.u32 %v1769, 4294901760
        %1771 = vmatpush1.msra.mxu0 %v1770
        %v1772 = vand.u32 %v545, 4294901760
        %v1773 = vsub.f32 %v545, %v1772
        %v1774 = vand.u32 %v1773, 4294901760
        %1775 = vmatprep.subr.mxu0 %v1774
        %v1776 = vand.u32 %v544, 4294901760
        %v1777 = vsub.f32 %v544, %v1776
        %v1778 = vand.u32 %v1777, 4294901760
        %1779 = vmatpush1.msra.mxu0 %v1778
        %v1780 = vand.u32 %v547, 4294901760
        %v1781 = vsub.f32 %v547, %v1780
        %v1782 = vand.u32 %v1781, 4294901760
        %1783 = vmatprep.subr.mxu0 %v1782
        %v1784 = vand.u32 %v546, 4294901760
        %v1785 = vsub.f32 %v546, %v1784
        %v1786 = vand.u32 %v1785, 4294901760
        %1787 = vmatpush1.msra.mxu0 %v1786
        %v1788 = vand.u32 %v549, 4294901760
        %v1789 = vsub.f32 %v549, %v1788
        %v1790 = vand.u32 %v1789, 4294901760
        %1791 = vmatprep.subr.mxu0 %v1790
        %v1792 = vand.u32 %v548, 4294901760
        %v1793 = vsub.f32 %v548, %v1792
        %v1794 = vand.u32 %v1793, 4294901760
        %1795 = vmatpush1.msra.mxu0 %v1794
        %v1796 = vand.u32 %v551, 4294901760
        %v1797 = vsub.f32 %v551, %v1796
        %v1798 = vand.u32 %v1797, 4294901760
        %1799 = vmatprep.subr.mxu0 %v1798
        %v1800 = vand.u32 %v550, 4294901760
        %v1801 = vsub.f32 %v550, %v1800
        %v1802 = vand.u32 %v1801, 4294901760
        %1803 = vmatpush1.msra.mxu0 %v1802
        %v1804 = vand.u32 %v553, 4294901760
        %v1805 = vsub.f32 %v553, %v1804
        %v1806 = vand.u32 %v1805, 4294901760
        %1807 = vmatprep.subr.mxu0 %v1806
        %v1808 = vand.u32 %v552, 4294901760
        %v1809 = vsub.f32 %v552, %v1808
        %v1810 = vand.u32 %v1809, 4294901760
        %1811 = vmatpush1.msra.mxu0 %v1810
        %v1812 = vand.u32 %v555, 4294901760
        %v1813 = vsub.f32 %v555, %v1812
        %v1814 = vand.u32 %v1813, 4294901760
        %1815 = vmatprep.subr.mxu0 %v1814
        %v1816 = vand.u32 %v554, 4294901760
        %v1817 = vsub.f32 %v554, %v1816
        %v1818 = vand.u32 %v1817, 4294901760
        %1819 = vmatpush1.msra.mxu0 %v1818
        %v1820 = vand.u32 %v557, 4294901760
        %v1821 = vsub.f32 %v557, %v1820
        %v1822 = vand.u32 %v1821, 4294901760
        %1823 = vmatprep.subr.mxu0 %v1822
        %v1824 = vand.u32 %v556, 4294901760
        %v1825 = vsub.f32 %v556, %v1824
        %v1826 = vand.u32 %v1825, 4294901760
        %1827 = vmatpush1.msra.mxu0 %v1826
        %v1828 = vand.u32 %v559, 4294901760
        %v1829 = vsub.f32 %v559, %v1828
        %v1830 = vand.u32 %v1829, 4294901760
        %1831 = vmatprep.subr.mxu0 %v1830
        %v1832 = vand.u32 %v558, 4294901760
        %v1833 = vsub.f32 %v558, %v1832
        %v1834 = vand.u32 %v1833, 4294901760
        %1835 = vmatpush1.msra.mxu0 %v1834
        %v1836 = vand.u32 %v561, 4294901760
        %v1837 = vsub.f32 %v561, %v1836
        %v1838 = vand.u32 %v1837, 4294901760
        %1839 = vmatprep.subr.mxu0 %v1838
        %v1840 = vand.u32 %v560, 4294901760
        %v1841 = vsub.f32 %v560, %v1840
        %v1842 = vand.u32 %v1841, 4294901760
        %1843 = vmatpush1.msra.mxu0 %v1842
        %v1844 = vand.u32 %v563, 4294901760
        %v1845 = vsub.f32 %v563, %v1844
        %v1846 = vand.u32 %v1845, 4294901760
        %1847 = vmatprep.subr.mxu0 %v1846
        %v1848 = vand.u32 %v562, 4294901760
        %v1849 = vsub.f32 %v562, %v1848
        %v1850 = vand.u32 %v1849, 4294901760
        %1851 = vmatpush1.msra.mxu0 %v1850
        %v1852 = vand.u32 %v493, 4294901760
        %1853 = vmatprep.mubr.f32.mxu0 %v1852
        %v1854 = vand.u32 %v492, 4294901760
        %1855 = vmatmul.mubr.f32.gmra.mrb[0].mxu0 %v1854
        %v1856 = vpop.f32.mrb[0].mxu0
        %v1857 = vadd.f32 %v1556, %v1856
        %v1858 = vpop.f32.mrb[0].mxu0
        %v1859 = vadd.f32 %v1558, %v1858
        %v1860 = vand.u32 %v495, 4294901760
        %1861 = vmatprep.mubr.f32.mxu0 %v1860
        %v1862 = vand.u32 %v494, 4294901760
        %1863 = vmatmul.mubr.f32.gmra.mrb[0].mxu0 %v1862
        %v1864 = vpop.f32.mrb[0].mxu0
        %v1865 = vadd.f32 %v1568, %v1864
        %v1866 = vpop.f32.mrb[0].mxu0
        %v1867 = vadd.f32 %v1570, %v1866
        %v1868 = vand.u32 %v497, 4294901760
        %1869 = vmatprep.mubr.f32.mxu0 %v1868
        %v1870 = vand.u32 %v496, 4294901760
        %1871 = vmatmul.mubr.f32.gmra.mrb[0].mxu0 %v1870
        %v1872 = vpop.f32.mrb[0].mxu0
        %v1873 = vadd.f32 %v1580, %v1872
        %v1874 = vpop.f32.mrb[0].mxu0
        %v1875 = vadd.f32 %v1582, %v1874
        %v1876 = vand.u32 %v499, 4294901760
        %1877 = vmatprep.mubr.f32.mxu0 %v1876
        %v1878 = vand.u32 %v498, 4294901760
        %1879 = vmatmul.mubr.f32.gmra.mrb[0].mxu0 %v1878
        %v1880 = vpop.f32.mrb[0].mxu0
        %v1881 = vadd.f32 %v1592, %v1880
        %v1882 = vpop.f32.mrb[0].mxu0
        %v1883 = vadd.f32 %v1594, %v1882
        %1884 = vdwg.mxu0
        %v1885 = vand.u32 %v501, 4294901760
        %1886 = vmatprep.subr.mxu0 %v1885
        %v1887 = vand.u32 %v500, 4294901760
        %1888 = vmatpush1.msra.mxu0 %v1887
        %v1889 = vand.u32 %v503, 4294901760
        %1890 = vmatprep.subr.mxu0 %v1889
        %v1891 = vand.u32 %v502, 4294901760
        %1892 = vmatpush1.msra.mxu0 %v1891
        %v1893 = vand.u32 %v505, 4294901760
        %1894 = vmatprep.subr.mxu0 %v1893
        %v1895 = vand.u32 %v504, 4294901760
        %1896 = vmatpush1.msra.mxu0 %v1895
        %v1897 = vand.u32 %v507, 4294901760
        %1898 = vmatprep.subr.mxu0 %v1897
        %v1899 = vand.u32 %v506, 4294901760
        %1900 = vmatpush1.msra.mxu0 %v1899
        %v1901 = vand.u32 %v509, 4294901760
        %1902 = vmatprep.subr.mxu0 %v1901
        %v1903 = vand.u32 %v508, 4294901760
        %1904 = vmatpush1.msra.mxu0 %v1903
        %v1905 = vand.u32 %v511, 4294901760
        %1906 = vmatprep.subr.mxu0 %v1905
        %v1907 = vand.u32 %v510, 4294901760
        %1908 = vmatpush1.msra.mxu0 %v1907
        %v1909 = vand.u32 %v513, 4294901760
        %1910 = vmatprep.subr.mxu0 %v1909
        %v1911 = vand.u32 %v512, 4294901760
        %1912 = vmatpush1.msra.mxu0 %v1911
        %v1913 = vand.u32 %v515, 4294901760
        %1914 = vmatprep.subr.mxu0 %v1913
        %v1915 = vand.u32 %v514, 4294901760
        %1916 = vmatpush1.msra.mxu0 %v1915
        %v1917 = vand.u32 %v517, 4294901760
        %1918 = vmatprep.subr.mxu0 %v1917
        %v1919 = vand.u32 %v516, 4294901760
        %1920 = vmatpush1.msra.mxu0 %v1919
        %v1921 = vand.u32 %v519, 4294901760
        %1922 = vmatprep.subr.mxu0 %v1921
        %v1923 = vand.u32 %v518, 4294901760
        %1924 = vmatpush1.msra.mxu0 %v1923
        %v1925 = vand.u32 %v521, 4294901760
        %1926 = vmatprep.subr.mxu0 %v1925
        %v1927 = vand.u32 %v520, 4294901760
        %1928 = vmatpush1.msra.mxu0 %v1927
        %v1929 = vand.u32 %v523, 4294901760
        %1930 = vmatprep.subr.mxu0 %v1929
        %v1931 = vand.u32 %v522, 4294901760
        %1932 = vmatpush1.msra.mxu0 %v1931
        %v1933 = vand.u32 %v525, 4294901760
        %1934 = vmatprep.subr.mxu0 %v1933
        %v1935 = vand.u32 %v524, 4294901760
        %1936 = vmatpush1.msra.mxu0 %v1935
        %v1937 = vand.u32 %v527, 4294901760
        %1938 = vmatprep.subr.mxu0 %v1937
        %v1939 = vand.u32 %v526, 4294901760
        %1940 = vmatpush1.msra.mxu0 %v1939
        %v1941 = vand.u32 %v529, 4294901760
        %1942 = vmatprep.subr.mxu0 %v1941
        %v1943 = vand.u32 %v528, 4294901760
        %1944 = vmatpush1.msra.mxu0 %v1943
        %v1945 = vand.u32 %v531, 4294901760
        %1946 = vmatprep.subr.mxu0 %v1945
        %v1947 = vand.u32 %v530, 4294901760
        %1948 = vmatpush1.msra.mxu0 %v1947
        %v1949 = vand.u32 %v533, 4294901760
        %1950 = vmatprep.subr.mxu0 %v1949
        %v1951 = vand.u32 %v532, 4294901760
        %1952 = vmatpush1.msra.mxu0 %v1951
        %v1953 = vand.u32 %v535, 4294901760
        %1954 = vmatprep.subr.mxu0 %v1953
        %v1955 = vand.u32 %v534, 4294901760
        %1956 = vmatpush1.msra.mxu0 %v1955
        %v1957 = vand.u32 %v537, 4294901760
        %1958 = vmatprep.subr.mxu0 %v1957
        %v1959 = vand.u32 %v536, 4294901760
        %1960 = vmatpush1.msra.mxu0 %v1959
        %v1961 = vand.u32 %v539, 4294901760
        %1962 = vmatprep.subr.mxu0 %v1961
        %v1963 = vand.u32 %v538, 4294901760
        %1964 = vmatpush1.msra.mxu0 %v1963
        %v1965 = vand.u32 %v541, 4294901760
        %1966 = vmatprep.subr.mxu0 %v1965
        %v1967 = vand.u32 %v540, 4294901760
        %1968 = vmatpush1.msra.mxu0 %v1967
        %v1969 = vand.u32 %v543, 4294901760
        %1970 = vmatprep.subr.mxu0 %v1969
        %v1971 = vand.u32 %v542, 4294901760
        %1972 = vmatpush1.msra.mxu0 %v1971
        %v1973 = vand.u32 %v545, 4294901760
        %1974 = vmatprep.subr.mxu0 %v1973
        %v1975 = vand.u32 %v544, 4294901760
        %1976 = vmatpush1.msra.mxu0 %v1975
        %v1977 = vand.u32 %v547, 4294901760
        %1978 = vmatprep.subr.mxu0 %v1977
        %v1979 = vand.u32 %v546, 4294901760
        %1980 = vmatpush1.msra.mxu0 %v1979
        %v1981 = vand.u32 %v549, 4294901760
        %1982 = vmatprep.subr.mxu0 %v1981
        %v1983 = vand.u32 %v548, 4294901760
        %1984 = vmatpush1.msra.mxu0 %v1983
        %v1985 = vand.u32 %v551, 4294901760
        %1986 = vmatprep.subr.mxu0 %v1985
        %v1987 = vand.u32 %v550, 4294901760
        %1988 = vmatpush1.msra.mxu0 %v1987
        %v1989 = vand.u32 %v553, 4294901760
        %1990 = vmatprep.subr.mxu0 %v1989
        %v1991 = vand.u32 %v552, 4294901760
        %1992 = vmatpush1.msra.mxu0 %v1991
        %v1993 = vand.u32 %v555, 4294901760
        %1994 = vmatprep.subr.mxu0 %v1993
        %v1995 = vand.u32 %v554, 4294901760
        %1996 = vmatpush1.msra.mxu0 %v1995
        %v1997 = vand.u32 %v557, 4294901760
        %1998 = vmatprep.subr.mxu0 %v1997
        %v1999 = vand.u32 %v556, 4294901760
        %2000 = vmatpush1.msra.mxu0 %v1999
        %v2001 = vand.u32 %v559, 4294901760
        %2002 = vmatprep.subr.mxu0 %v2001
        %v2003 = vand.u32 %v558, 4294901760
        %2004 = vmatpush1.msra.mxu0 %v2003
        %v2005 = vand.u32 %v561, 4294901760
        %2006 = vmatprep.subr.mxu0 %v2005
        %v2007 = vand.u32 %v560, 4294901760
        %2008 = vmatpush1.msra.mxu0 %v2007
        %v2009 = vand.u32 %v563, 4294901760
        %2010 = vmatprep.subr.mxu0 %v2009
        %v2011 = vand.u32 %v562, 4294901760
        %2012 = vmatpush1.msra.mxu0 %v2011
        %v2013 = vand.u32 %v493, 4294901760
        %2014 = vmatprep.mubr.f32.mxu0 %v2013
        %v2015 = vand.u32 %v492, 4294901760
        %2016 = vmatmul.mubr.f32.gmra.mrb[0].mxu0 %v2015
        %v2017 = vpop.f32.mrb[0].mxu0
        %v2018 = vadd.f32 %v1857, %v2017
        %v2019 = vpop.f32.mrb[0].mxu0
        %v2020 = vadd.f32 %v1859, %v2019
        %v2021 = vand.u32 %v495, 4294901760
        %2022 = vmatprep.mubr.f32.mxu0 %v2021
        %v2023 = vand.u32 %v494, 4294901760
        %2024 = vmatmul.mubr.f32.gmra.mrb[0].mxu0 %v2023
        %v2025 = vpop.f32.mrb[0].mxu0
        %v2026 = vadd.f32 %v1865, %v2025
        %v2027 = vpop.f32.mrb[0].mxu0
        %v2028 = vadd.f32 %v1867, %v2027
        %v2029 = vand.u32 %v497, 4294901760
        %2030 = vmatprep.mubr.f32.mxu0 %v2029
        %v2031 = vand.u32 %v496, 4294901760
        %2032 = vmatmul.mubr.f32.gmra.mrb[0].mxu0 %v2031
        %v2033 = vpop.f32.mrb[0].mxu0
        %v2034 = vadd.f32 %v1873, %v2033
        %v2035 = vpop.f32.mrb[0].mxu0
        %v2036 = vadd.f32 %v1875, %v2035
        %v2037 = vand.u32 %v499, 4294901760
        %2038 = vmatprep.mubr.f32.mxu0 %v2037
        %v2039 = vand.u32 %v498, 4294901760
        %2040 = vmatmul.mubr.f32.gmra.mrb[0].mxu0 %v2039
        %v2041 = vpop.f32.mrb[0].mxu0
        %v2042 = vadd.f32 %v1881, %v2041
        %v2043 = vpop.f32.mrb[0].mxu0
        %v2044 = vadd.f32 %v1883, %v2043
        %2045 = vdwg.mxu0
        %v2046 = vmul.f32 %v2018, 0.5
        %v2047 = vmul.f32 %v2026, 0.5
        %v2048 = vmul.f32 %v2034, 0.5
        %v2049 = vmul.f32 %v2042, 0.5
        %v2050 = vmul.f32 %v2018, 0.70710677
        %v2051 = vmul.f32 %v2026, 0.70710677
        %v2052 = vmul.f32 %v2034, 0.70710677
        %v2053 = vmul.f32 %v2042, 0.70710677
        %v2054 = verf.f32.pop %v2050
        %v2055 = verf.f32.pop %v2051
        %v2056 = verf.f32.pop %v2052
        %v2057 = verf.f32.pop %v2053
        %v2058 = vadd.f32 %v2054, 1.0
        %v2059 = vadd.f32 %v2055, 1.0
        %v2060 = vadd.f32 %v2056, 1.0
        %v2061 = vadd.f32 %v2057, 1.0
        %v2062 = vmul.f32 %v2046, %v2058
        %v2063 = vmul.f32 %v2047, %v2059
        %v2064 = vmul.f32 %v2048, %v2060
        %v2065 = vmul.f32 %v2049, %v2061
        %v2066 = vand.u32 2147483647, %v2020
        %vm2067 = vcmp.le.f32.partialorder %v2066, 0.7853982
        %vm2068 = vcmp.lt.s32.totalorder %v2020, 0
        %v2069 = vand.u32 %v2020, 2139095040
        %v2070 = vshrl.u32 %v2069, 23
        %v2071 = vsub.s32 %v2070, 127
        %v2072 = vand.u32 2147483647, %v2020
        %v2073 = vand.u32 %v2072, 8388607
        %v2074 = vor.u32 %v2073, 8388608
        %v2075 = vsub.s32 0, %v2074
        %v2076 = vadd.s32 %v2071, 1
        %vm2077 = vcmp.gt.s32.totalorder %v2076, 0
        %v2078 = vsel %vm2077, %v2076, 0
        %v2079 = vshrl.u32 %v2078, 5
        %v2080 = vand.u32 %v2078, 31
        %v2081 = vsub.s32 32, %v2080
        %v2082 = vshrl.u32 683565275, %v2081
        %v2083 = vshll.u32 683565275, %v2080
        %v2084 = vshrl.u32 2475754826, %v2081
        %v2085 = vor.u32 %v2083, %v2084
        %v2086 = vshll.u32 2475754826, %v2080
        %v2087 = vshrl.u32 2131351028, %v2081
        %v2088 = vor.u32 %v2086, %v2087
        %v2089 = vshll.u32 2131351028, %v2080
        %v2090 = vshrl.u32 2102212464, %v2081
        %v2091 = vor.u32 %v2089, %v2090
        %v2092 = vshll.u32 2102212464, %v2080
        %v2093 = vshrl.u32 920167782, %v2081
        %v2094 = vor.u32 %v2092, %v2093
        %v2095 = vshll.u32 920167782, %v2080
        %v2096 = vshrl.u32 1326507024, %v2081
        %v2097 = vor.u32 %v2095, %v2096
        %vm2098 = vcmp.lt.s32.totalorder %v2079, 1
        %vm2099 = vcmp.lt.s32.totalorder %v2079, 2
        %vm2100 = vcmp.lt.s32.totalorder %v2079, 3
        %vm2101 = vcmp.lt.s32.totalorder %v2079, 4
        %v2102 = vsel %vm2098, %v2082, %v2085
        %v2103 = vsel %vm2101, %v2091, 2102212464
        %v2104 = vsel %vm2100, %v2088, %v2103
        %v2105 = vsel %vm2099, %v2102, %v2104
        %v2106 = vsel %vm2098, %v2085, %v2088
        %v2107 = vsel %vm2101, %v2094, 920167782
        %v2108 = vsel %vm2100, %v2091, %v2107
        %v2109 = vsel %vm2099, %v2106, %v2108
        %v2110 = vsel %vm2098, %v2088, %v2091
        %v2111 = vsel %vm2101, %v2097, 1326507024
        %v2112 = vsel %vm2100, %v2094, %v2111
        %v2113 = vsel %vm2099, %v2110, %v2112
        %v2114 = vshll.u32 %v2074, 8
        %v2115 = vmul.u32.u64.compose %v2114, %v2113
        %v2116 = vextract.low.u32 %v2115
        %v2117 = vextract.high.u32 %v2115
        %v2118 = vmul.u32.u64.compose %v2114, %v2109
        %v2119 = vextract.low.u32 %v2118
        %v2120 = vextract.high.u32 %v2118
        %v2121 = vmul.u32 %v2114, %v2105
        %v2122 = vadd.s32 %v2117, %v2119
        %vm2123 = vc.u32 %v2117, %v2119
        %v2124 = vadd.s32 %v2120, 1
        %v2125 = vsel %vm2123, %v2124, %v2120
        %v2126 = vadd.s32 %v2121, %v2125
        %v2127 = vadd.s32 %v2126, 536870912
        %v2128 = vshrl.u32 %v2127, 30
        %v2129 = vshll.u32 %v2128, 30
        %v2130 = vsub.s32 %v2126, %v2129
        %vm2131 = vcmp.lt.s32.totalorder %v2130, 0
        %v2132 = vsub.s32 0, %v2130
        %v2133 = vsel %vm2131, %v2132, %v2130
        %v2134 = vclz %v2133
        %v2135 = vsub.s32 %v2134, 2
        %vm2136 = vcmp.gt.s32.totalorder 0, %v2135
        %v2137 = vsel %vm2136, 0, %v2135
        %v2138 = vsub.s32 32, %v2137
        %v2139 = vshll.u32 %v2130, %v2137
        %v2140 = vshrl.u32 %v2122, %v2138
        %v2141 = vor.u32 %v2139, %v2140
        %v2142 = vsub.s32 4294967266, %v2137
        %v2143 = vadd.s32 %v2142, 127
        %v2144 = vshll.u32 %v2143, 23
        %v2145 = vor.u32 4788187, %v2144
        %v2146 = vand.u32 2147483647, %v2145
        %v2148 = vcvt.s32.f32 %v2141
        %v2149 = vmul.f32 %v2148, %v2146
        %v2150 = vxor.u32 %v2149, 2147483648
        %v2151 = vsel %vm2068, %v2150, %v2149
        %v2152 = vsub.s32 4, %v2128
        %v2153 = vsel %vm2068, %v2152, %v2128
        %v2154 = vsel %vm2067, %v2020, %v2151
        %v2155 = vsel %vm2067, 0, %v2153
        %v2156 = vcosq.f32.pop %v2154
        %v2157 = vsinq.f32.pop %v2154
        %vm2158 = vweird.f32 %v2020
        %v2159 = vand.u32 %v2155, 3
        %vm2160 = vcmp.lt.s32.totalorder %v2159, 2
        %vm2161 = vcmp.eq.s32.totalorder %v2159, 0
        %v2162 = vxor.u32 %v2157, 2147483648
        %v2163 = vsel %vm2161, %v2156, %v2162
        %vm2164 = vcmp.eq.s32.totalorder %v2159, 2
        %v2165 = vxor.u32 %v2156, 2147483648
        %v2166 = vsel %vm2164, %v2165, %v2157
        %v2167 = vsel %vm2160, %v2163, %v2166
        %v2168 = vsel %vm2158, nan, %v2167
        %v2169 = vand.u32 2147483647, %v2028
        %vm2170 = vcmp.le.f32.partialorder %v2169, 0.7853982
        %vm2171 = vcmp.lt.s32.totalorder %v2028, 0
        %v2172 = vand.u32 %v2028, 2139095040
        %v2173 = vshrl.u32 %v2172, 23
        %v2174 = vsub.s32 %v2173, 127
        %v2175 = vand.u32 2147483647, %v2028
        %v2176 = vand.u32 %v2175, 8388607
        %v2177 = vor.u32 %v2176, 8388608
        %v2178 = vsub.s32 0, %v2177
        %v2179 = vadd.s32 %v2174, 1
        %vm2180 = vcmp.gt.s32.totalorder %v2179, 0
        %v2181 = vsel %vm2180, %v2179, 0
        %v2182 = vshrl.u32 %v2181, 5
        %v2183 = vand.u32 %v2181, 31
        %v2184 = vsub.s32 32, %v2183
        %v2185 = vshrl.u32 683565275, %v2184
        %v2186 = vshll.u32 683565275, %v2183
        %v2187 = vshrl.u32 2475754826, %v2184
        %v2188 = vor.u32 %v2186, %v2187
        %v2189 = vshll.u32 2475754826, %v2183
        %v2190 = vshrl.u32 2131351028, %v2184
        %v2191 = vor.u32 %v2189, %v2190
        %v2192 = vshll.u32 2131351028, %v2183
        %v2193 = vshrl.u32 2102212464, %v2184
        %v2194 = vor.u32 %v2192, %v2193
        %v2195 = vshll.u32 2102212464, %v2183
        %v2196 = vshrl.u32 920167782, %v2184
        %v2197 = vor.u32 %v2195, %v2196
        %v2198 = vshll.u32 920167782, %v2183
        %v2199 = vshrl.u32 1326507024, %v2184
        %v2200 = vor.u32 %v2198, %v2199
        %vm2201 = vcmp.lt.s32.totalorder %v2182, 1
        %vm2202 = vcmp.lt.s32.totalorder %v2182, 2
        %vm2203 = vcmp.lt.s32.totalorder %v2182, 3
        %vm2204 = vcmp.lt.s32.totalorder %v2182, 4
        %v2205 = vsel %vm2201, %v2185, %v2188
        %v2206 = vsel %vm2204, %v2194, 2102212464
        %v2207 = vsel %vm2203, %v2191, %v2206
        %v2208 = vsel %vm2202, %v2205, %v2207
        %v2209 = vsel %vm2201, %v2188, %v2191
        %v2210 = vsel %vm2204, %v2197, 920167782
        %v2211 = vsel %vm2203, %v2194, %v2210
        %v2212 = vsel %vm2202, %v2209, %v2211
        %v2213 = vsel %vm2201, %v2191, %v2194
        %v2214 = vsel %vm2204, %v2200, 1326507024
        %v2215 = vsel %vm2203, %v2197, %v2214
        %v2216 = vsel %vm2202, %v2213, %v2215
        %v2217 = vshll.u32 %v2177, 8
        %v2218 = vmul.u32.u64.compose %v2217, %v2216
        %v2219 = vextract.low.u32 %v2218
        %v2220 = vextract.high.u32 %v2218
        %v2221 = vmul.u32.u64.compose %v2217, %v2212
        %v2222 = vextract.low.u32 %v2221
        %v2223 = vextract.high.u32 %v2221
        %v2224 = vmul.u32 %v2217, %v2208
        %v2225 = vadd.s32 %v2220, %v2222
        %vm2226 = vc.u32 %v2220, %v2222
        %v2227 = vadd.s32 %v2223, 1
        %v2228 = vsel %vm2226, %v2227, %v2223
        %v2229 = vadd.s32 %v2224, %v2228
        %v2230 = vadd.s32 %v2229, 536870912
        %v2231 = vshrl.u32 %v2230, 30
        %v2232 = vshll.u32 %v2231, 30
        %v2233 = vsub.s32 %v2229, %v2232
        %vm2234 = vcmp.lt.s32.totalorder %v2233, 0
        %v2235 = vsub.s32 0, %v2233
        %v2236 = vsel %vm2234, %v2235, %v2233
        %v2237 = vclz %v2236
        %v2238 = vsub.s32 %v2237, 2
        %vm2239 = vcmp.gt.s32.totalorder 0, %v2238
        %v2240 = vsel %vm2239, 0, %v2238
        %v2241 = vsub.s32 32, %v2240
        %v2242 = vshll.u32 %v2233, %v2240
        %v2243 = vshrl.u32 %v2225, %v2241
        %v2244 = vor.u32 %v2242, %v2243
        %v2245 = vsub.s32 4294967266, %v2240
        %v2246 = vadd.s32 %v2245, 127
        %v2247 = vshll.u32 %v2246, 23
        %v2248 = vor.u32 4788187, %v2247
        %v2249 = vand.u32 2147483647, %v2248
        %v2251 = vcvt.s32.f32 %v2244
        %v2252 = vmul.f32 %v2251, %v2249
        %v2253 = vxor.u32 %v2252, 2147483648
        %v2254 = vsel %vm2171, %v2253, %v2252
        %v2255 = vsub.s32 4, %v2231
        %v2256 = vsel %vm2171, %v2255, %v2231
        %v2257 = vsel %vm2170, %v2028, %v2254
        %v2258 = vsel %vm2170, 0, %v2256
        %v2259 = vcosq.f32.pop %v2257
        %v2260 = vsinq.f32.pop %v2257
        %vm2261 = vweird.f32 %v2028
        %v2262 = vand.u32 %v2258, 3
        %vm2263 = vcmp.lt.s32.totalorder %v2262, 2
        %vm2264 = vcmp.eq.s32.totalorder %v2262, 0
        %v2265 = vxor.u32 %v2260, 2147483648
        %v2266 = vsel %vm2264, %v2259, %v2265
        %vm2267 = vcmp.eq.s32.totalorder %v2262, 2
        %v2268 = vxor.u32 %v2259, 2147483648
        %v2269 = vsel %vm2267, %v2268, %v2260
        %v2270 = vsel %vm2263, %v2266, %v2269
        %v2271 = vsel %vm2261, nan, %v2270
        %v2272 = vand.u32 2147483647, %v2036
        %vm2273 = vcmp.le.f32.partialorder %v2272, 0.7853982
        %vm2274 = vcmp.lt.s32.totalorder %v2036, 0
        %v2275 = vand.u32 %v2036, 2139095040
        %v2276 = vshrl.u32 %v2275, 23
        %v2277 = vsub.s32 %v2276, 127
        %v2278 = vand.u32 2147483647, %v2036
        %v2279 = vand.u32 %v2278, 8388607
        %v2280 = vor.u32 %v2279, 8388608
        %v2281 = vsub.s32 0, %v2280
        %v2282 = vadd.s32 %v2277, 1
        %vm2283 = vcmp.gt.s32.totalorder %v2282, 0
        %v2284 = vsel %vm2283, %v2282, 0
        %v2285 = vshrl.u32 %v2284, 5
        %v2286 = vand.u32 %v2284, 31
        %v2287 = vsub.s32 32, %v2286
        %v2288 = vshrl.u32 683565275, %v2287
        %v2289 = vshll.u32 683565275, %v2286
        %v2290 = vshrl.u32 2475754826, %v2287
        %v2291 = vor.u32 %v2289, %v2290
        %v2292 = vshll.u32 2475754826, %v2286
        %v2293 = vshrl.u32 2131351028, %v2287
        %v2294 = vor.u32 %v2292, %v2293
        %v2295 = vshll.u32 2131351028, %v2286
        %v2296 = vshrl.u32 2102212464, %v2287
        %v2297 = vor.u32 %v2295, %v2296
        %v2298 = vshll.u32 2102212464, %v2286
        %v2299 = vshrl.u32 920167782, %v2287
        %v2300 = vor.u32 %v2298, %v2299
        %v2301 = vshll.u32 920167782, %v2286
        %v2302 = vshrl.u32 1326507024, %v2287
        %v2303 = vor.u32 %v2301, %v2302
        %vm2304 = vcmp.lt.s32.totalorder %v2285, 1
        %vm2305 = vcmp.lt.s32.totalorder %v2285, 2
        %vm2306 = vcmp.lt.s32.totalorder %v2285, 3
        %vm2307 = vcmp.lt.s32.totalorder %v2285, 4
        %v2308 = vsel %vm2304, %v2288, %v2291
        %v2309 = vsel %vm2307, %v2297, 2102212464
        %v2310 = vsel %vm2306, %v2294, %v2309
        %v2311 = vsel %vm2305, %v2308, %v2310
        %v2312 = vsel %vm2304, %v2291, %v2294
        %v2313 = vsel %vm2307, %v2300, 920167782
        %v2314 = vsel %vm2306, %v2297, %v2313
        %v2315 = vsel %vm2305, %v2312, %v2314
        %v2316 = vsel %vm2304, %v2294, %v2297
        %v2317 = vsel %vm2307, %v2303, 1326507024
        %v2318 = vsel %vm2306, %v2300, %v2317
        %v2319 = vsel %vm2305, %v2316, %v2318
        %v2320 = vshll.u32 %v2280, 8
        %v2321 = vmul.u32.u64.compose %v2320, %v2319
        %v2322 = vextract.low.u32 %v2321
        %v2323 = vextract.high.u32 %v2321
        %v2324 = vmul.u32.u64.compose %v2320, %v2315
        %v2325 = vextract.low.u32 %v2324
        %v2326 = vextract.high.u32 %v2324
        %v2327 = vmul.u32 %v2320, %v2311
        %v2328 = vadd.s32 %v2323, %v2325
        %vm2329 = vc.u32 %v2323, %v2325
        %v2330 = vadd.s32 %v2326, 1
        %v2331 = vsel %vm2329, %v2330, %v2326
        %v2332 = vadd.s32 %v2327, %v2331
        %v2333 = vadd.s32 %v2332, 536870912
        %v2334 = vshrl.u32 %v2333, 30
        %v2335 = vshll.u32 %v2334, 30
        %v2336 = vsub.s32 %v2332, %v2335
        %vm2337 = vcmp.lt.s32.totalorder %v2336, 0
        %v2338 = vsub.s32 0, %v2336
        %v2339 = vsel %vm2337, %v2338, %v2336
        %v2340 = vclz %v2339
        %v2341 = vsub.s32 %v2340, 2
        %vm2342 = vcmp.gt.s32.totalorder 0, %v2341
        %v2343 = vsel %vm2342, 0, %v2341
        %v2344 = vsub.s32 32, %v2343
        %v2345 = vshll.u32 %v2336, %v2343
        %v2346 = vshrl.u32 %v2328, %v2344
        %v2347 = vor.u32 %v2345, %v2346
        %v2348 = vsub.s32 4294967266, %v2343
        %v2349 = vadd.s32 %v2348, 127
        %v2350 = vshll.u32 %v2349, 23
        %v2351 = vor.u32 4788187, %v2350
        %v2352 = vand.u32 2147483647, %v2351
        %v2354 = vcvt.s32.f32 %v2347
        %v2355 = vmul.f32 %v2354, %v2352
        %v2356 = vxor.u32 %v2355, 2147483648
        %v2357 = vsel %vm2274, %v2356, %v2355
        %v2358 = vsub.s32 4, %v2334
        %v2359 = vsel %vm2274, %v2358, %v2334
        %v2360 = vsel %vm2273, %v2036, %v2357
        %v2361 = vsel %vm2273, 0, %v2359
        %v2362 = vcosq.f32.pop %v2360
        %v2363 = vsinq.f32.pop %v2360
        %vm2364 = vweird.f32 %v2036
        %v2365 = vand.u32 %v2361, 3
        %vm2366 = vcmp.lt.s32.totalorder %v2365, 2
        %vm2367 = vcmp.eq.s32.totalorder %v2365, 0
        %v2368 = vxor.u32 %v2363, 2147483648
        %v2369 = vsel %vm2367, %v2362, %v2368
        %vm2370 = vcmp.eq.s32.totalorder %v2365, 2
        %v2371 = vxor.u32 %v2362, 2147483648
        %v2372 = vsel %vm2370, %v2371, %v2363
        %v2373 = vsel %vm2366, %v2369, %v2372
        %v2374 = vsel %vm2364, nan, %v2373
        %v2375 = vand.u32 2147483647, %v2044
        %vm2376 = vcmp.le.f32.partialorder %v2375, 0.7853982
        %vm2377 = vcmp.lt.s32.totalorder %v2044, 0
        %v2378 = vand.u32 %v2044, 2139095040
        %v2379 = vshrl.u32 %v2378, 23
        %v2380 = vsub.s32 %v2379, 127
        %v2381 = vand.u32 2147483647, %v2044
        %v2382 = vand.u32 %v2381, 8388607
        %v2383 = vor.u32 %v2382, 8388608
        %v2384 = vsub.s32 0, %v2383
        %v2385 = vadd.s32 %v2380, 1
        %vm2386 = vcmp.gt.s32.totalorder %v2385, 0
        %v2387 = vsel %vm2386, %v2385, 0
        %v2388 = vshrl.u32 %v2387, 5
        %v2389 = vand.u32 %v2387, 31
        %v2390 = vsub.s32 32, %v2389
        %v2391 = vshrl.u32 683565275, %v2390
        %v2392 = vshll.u32 683565275, %v2389
        %v2393 = vshrl.u32 2475754826, %v2390
        %v2394 = vor.u32 %v2392, %v2393
        %v2395 = vshll.u32 2475754826, %v2389
        %v2396 = vshrl.u32 2131351028, %v2390
        %v2397 = vor.u32 %v2395, %v2396
        %v2398 = vshll.u32 2131351028, %v2389
        %v2399 = vshrl.u32 2102212464, %v2390
        %v2400 = vor.u32 %v2398, %v2399
        %v2401 = vshll.u32 2102212464, %v2389
        %v2402 = vshrl.u32 920167782, %v2390
        %v2403 = vor.u32 %v2401, %v2402
        %v2404 = vshll.u32 920167782, %v2389
        %v2405 = vshrl.u32 1326507024, %v2390
        %v2406 = vor.u32 %v2404, %v2405
        %vm2407 = vcmp.lt.s32.totalorder %v2388, 1
        %vm2408 = vcmp.lt.s32.totalorder %v2388, 2
        %vm2409 = vcmp.lt.s32.totalorder %v2388, 3
        %vm2410 = vcmp.lt.s32.totalorder %v2388, 4
        %v2411 = vsel %vm2407, %v2391, %v2394
        %v2412 = vsel %vm2410, %v2400, 2102212464
        %v2413 = vsel %vm2409, %v2397, %v2412
        %v2414 = vsel %vm2408, %v2411, %v2413
        %v2415 = vsel %vm2407, %v2394, %v2397
        %v2416 = vsel %vm2410, %v2403, 920167782
        %v2417 = vsel %vm2409, %v2400, %v2416
        %v2418 = vsel %vm2408, %v2415, %v2417
        %v2419 = vsel %vm2407, %v2397, %v2400
        %v2420 = vsel %vm2410, %v2406, 1326507024
        %v2421 = vsel %vm2409, %v2403, %v2420
        %v2422 = vsel %vm2408, %v2419, %v2421
        %v2423 = vshll.u32 %v2383, 8
        %v2424 = vmul.u32.u64.compose %v2423, %v2422
        %v2425 = vextract.low.u32 %v2424
        %v2426 = vextract.high.u32 %v2424
        %v2427 = vmul.u32.u64.compose %v2423, %v2418
        %v2428 = vextract.low.u32 %v2427
        %v2429 = vextract.high.u32 %v2427
        %v2430 = vmul.u32 %v2423, %v2414
        %v2431 = vadd.s32 %v2426, %v2428
        %vm2432 = vc.u32 %v2426, %v2428
        %v2433 = vadd.s32 %v2429, 1
        %v2434 = vsel %vm2432, %v2433, %v2429
        %v2435 = vadd.s32 %v2430, %v2434
        %v2436 = vadd.s32 %v2435, 536870912
        %v2437 = vshrl.u32 %v2436, 30
        %v2438 = vshll.u32 %v2437, 30
        %v2439 = vsub.s32 %v2435, %v2438
        %vm2440 = vcmp.lt.s32.totalorder %v2439, 0
        %v2441 = vsub.s32 0, %v2439
        %v2442 = vsel %vm2440, %v2441, %v2439
        %v2443 = vclz %v2442
        %v2444 = vsub.s32 %v2443, 2
        %vm2445 = vcmp.gt.s32.totalorder 0, %v2444
        %v2446 = vsel %vm2445, 0, %v2444
        %v2447 = vsub.s32 32, %v2446
        %v2448 = vshll.u32 %v2439, %v2446
        %v2449 = vshrl.u32 %v2431, %v2447
        %v2450 = vor.u32 %v2448, %v2449
        %v2451 = vsub.s32 4294967266, %v2446
        %v2452 = vadd.s32 %v2451, 127
        %v2453 = vshll.u32 %v2452, 23
        %v2454 = vor.u32 4788187, %v2453
        %v2455 = vand.u32 2147483647, %v2454
        %v2457 = vcvt.s32.f32 %v2450
        %v2458 = vmul.f32 %v2457, %v2455
        %v2459 = vxor.u32 %v2458, 2147483648
        %v2460 = vsel %vm2377, %v2459, %v2458
        %v2461 = vsub.s32 4, %v2437
        %v2462 = vsel %vm2377, %v2461, %v2437
        %v2463 = vsel %vm2376, %v2044, %v2460
        %v2464 = vsel %vm2376, 0, %v2462
        %v2465 = vcosq.f32.pop %v2463
        %v2466 = vsinq.f32.pop %v2463
        %vm2467 = vweird.f32 %v2044
        %v2468 = vand.u32 %v2464, 3
        %vm2469 = vcmp.lt.s32.totalorder %v2468, 2
        %vm2470 = vcmp.eq.s32.totalorder %v2468, 0
        %v2471 = vxor.u32 %v2466, 2147483648
        %v2472 = vsel %vm2470, %v2465, %v2471
        %vm2473 = vcmp.eq.s32.totalorder %v2468, 2
        %v2474 = vxor.u32 %v2465, 2147483648
        %v2475 = vsel %vm2473, %v2474, %v2466
        %v2476 = vsel %vm2469, %v2472, %v2475
        %v2477 = vsel %vm2467, nan, %v2476
        %v2478 = vld [vmem:[#allocation5] sm:$0xff]
        %v2479 = vld [vmem:[#allocation5 + $0x8] sm:$0xff]
        %v2480 = vld [vmem:[#allocation5 + $0x10] sm:$0xff]
        %v2481 = vld [vmem:[#allocation5 + $0x18] sm:$0xff]
        %v2482 = vld [vmem:[#allocation5 + $0x20] sm:$0xff]
        %v2483 = vld [vmem:[#allocation5 + $0x28] sm:$0xff]
        %v2484 = vld [vmem:[#allocation5 + $0x30] sm:$0xff]
        %v2485 = vld [vmem:[#allocation5 + $0x38] sm:$0xff]
        %v2486 = vld [vmem:[#allocation5 + $0x40] sm:$0xff]
        %v2487 = vld [vmem:[#allocation5 + $0x48] sm:$0xff]
        %v2488 = vld [vmem:[#allocation5 + $0x50] sm:$0xff]
        %v2489 = vld [vmem:[#allocation5 + $0x58] sm:$0xff]
        %v2490 = vld [vmem:[#allocation5 + $0x60] sm:$0xff]
        %v2491 = vld [vmem:[#allocation5 + $0x68] sm:$0xff]
        %v2492 = vld [vmem:[#allocation5 + $0x70] sm:$0xff]
        %v2493 = vld [vmem:[#allocation5 + $0x78] sm:$0xff]
        %v2494 = vld [vmem:[#allocation5 + $0x80] sm:$0xff]
        %v2495 = vld [vmem:[#allocation5 + $0x88] sm:$0xff]
        %v2496 = vld [vmem:[#allocation5 + $0x90] sm:$0xff]
        %v2497 = vld [vmem:[#allocation5 + $0x98] sm:$0xff]
        %v2498 = vld [vmem:[#allocation5 + $0xa0] sm:$0xff]
        %v2499 = vld [vmem:[#allocation5 + $0xa8] sm:$0xff]
        %v2500 = vld [vmem:[#allocation5 + $0xb0] sm:$0xff]
        %v2501 = vld [vmem:[#allocation5 + $0xb8] sm:$0xff]
        %v2502 = vld [vmem:[#allocation5 + $0xc0] sm:$0xff]
        %v2503 = vld [vmem:[#allocation5 + $0xc8] sm:$0xff]
        %v2504 = vld [vmem:[#allocation5 + $0xd0] sm:$0xff]
        %v2505 = vld [vmem:[#allocation5 + $0xd8] sm:$0xff]
        %v2506 = vld [vmem:[#allocation5 + $0xe0] sm:$0xff]
        %v2507 = vld [vmem:[#allocation5 + $0xe8] sm:$0xff]
        %v2508 = vld [vmem:[#allocation5 + $0xf0] sm:$0xff]
        %v2509 = vld [vmem:[#allocation5 + $0xf8] sm:$0xff]
        %v2510 = vld [vmem:[#allocation7] sm:$0xff]
        %v2511 = vld [vmem:[#allocation7 + $0x8] sm:$0xff]
        %v2512 = vld [vmem:[#allocation7 + $0x10] sm:$0xff]
        %v2513 = vld [vmem:[#allocation7 + $0x18] sm:$0xff]
        %v2514 = vld [vmem:[#allocation7 + $0x20] sm:$0xff]
        %v2515 = vld [vmem:[#allocation7 + $0x28] sm:$0xff]
        %v2516 = vld [vmem:[#allocation7 + $0x30] sm:$0xff]
        %v2517 = vld [vmem:[#allocation7 + $0x38] sm:$0xff]
        %v2518 = vld [vmem:[#allocation7 + $0x40] sm:$0xff]
        %v2519 = vld [vmem:[#allocation7 + $0x48] sm:$0xff]
        %v2520 = vld [vmem:[#allocation7 + $0x50] sm:$0xff]
        %v2521 = vld [vmem:[#allocation7 + $0x58] sm:$0xff]
        %v2522 = vld [vmem:[#allocation7 + $0x60] sm:$0xff]
        %v2523 = vld [vmem:[#allocation7 + $0x68] sm:$0xff]
        %v2524 = vld [vmem:[#allocation7 + $0x70] sm:$0xff]
        %v2525 = vld [vmem:[#allocation7 + $0x78] sm:$0xff]
        %v2526 = vld [vmem:[#allocation7 + $0x80] sm:$0xff]
        %v2527 = vld [vmem:[#allocation7 + $0x88] sm:$0xff]
        %v2528 = vld [vmem:[#allocation7 + $0x90] sm:$0xff]
        %v2529 = vld [vmem:[#allocation7 + $0x98] sm:$0xff]
        %v2530 = vld [vmem:[#allocation7 + $0xa0] sm:$0xff]
        %v2531 = vld [vmem:[#allocation7 + $0xa8] sm:$0xff]
        %v2532 = vld [vmem:[#allocation7 + $0xb0] sm:$0xff]
        %v2533 = vld [vmem:[#allocation7 + $0xb8] sm:$0xff]
        %v2534 = vld [vmem:[#allocation7 + $0xc0] sm:$0xff]
        %v2535 = vld [vmem:[#allocation7 + $0xc8] sm:$0xff]
        %v2536 = vld [vmem:[#allocation7 + $0xd0] sm:$0xff]
        %v2537 = vld [vmem:[#allocation7 + $0xd8] sm:$0xff]
        %v2538 = vld [vmem:[#allocation7 + $0xe0] sm:$0xff]
        %v2539 = vld [vmem:[#allocation7 + $0xe8] sm:$0xff]
        %v2540 = vld [vmem:[#allocation7 + $0xf0] sm:$0xff]
        %v2541 = vld [vmem:[#allocation7 + $0xf8] sm:$0xff]
        %v2542 = vand.u32 %v2511, 4294901760
        %2543 = vmatprep.subr.mxu0 %v2542
        %v2544 = vand.u32 %v2510, 4294901760
        %2545 = vmatpush1.msra.mxu0 %v2544
        %v2546 = vand.u32 %v2513, 4294901760
        %2547 = vmatprep.subr.mxu0 %v2546
        %v2548 = vand.u32 %v2512, 4294901760
        %2549 = vmatpush1.msra.mxu0 %v2548
        %v2550 = vand.u32 %v2515, 4294901760
        %2551 = vmatprep.subr.mxu0 %v2550
        %v2552 = vand.u32 %v2514, 4294901760
        %2553 = vmatpush1.msra.mxu0 %v2552
        %v2554 = vand.u32 %v2517, 4294901760
        %2555 = vmatprep.subr.mxu0 %v2554
        %v2556 = vand.u32 %v2516, 4294901760
        %2557 = vmatpush1.msra.mxu0 %v2556
        %v2558 = vand.u32 %v2519, 4294901760
        %2559 = vmatprep.subr.mxu0 %v2558
        %v2560 = vand.u32 %v2518, 4294901760
        %2561 = vmatpush1.msra.mxu0 %v2560
        %v2562 = vand.u32 %v2521, 4294901760
        %2563 = vmatprep.subr.mxu0 %v2562
        %v2564 = vand.u32 %v2520, 4294901760
        %2565 = vmatpush1.msra.mxu0 %v2564
        %v2566 = vand.u32 %v2523, 4294901760
        %2567 = vmatprep.subr.mxu0 %v2566
        %v2568 = vand.u32 %v2522, 4294901760
        %2569 = vmatpush1.msra.mxu0 %v2568
        %v2570 = vand.u32 %v2525, 4294901760
        %2571 = vmatprep.subr.mxu0 %v2570
        %v2572 = vand.u32 %v2524, 4294901760
        %2573 = vmatpush1.msra.mxu0 %v2572
        %v2574 = vand.u32 %v2527, 4294901760
        %2575 = vmatprep.subr.mxu0 %v2574
        %v2576 = vand.u32 %v2526, 4294901760
        %2577 = vmatpush1.msra.mxu0 %v2576
        %v2578 = vand.u32 %v2529, 4294901760
        %2579 = vmatprep.subr.mxu0 %v2578
        %v2580 = vand.u32 %v2528, 4294901760
        %2581 = vmatpush1.msra.mxu0 %v2580
        %v2582 = vand.u32 %v2531, 4294901760
        %2583 = vmatprep.subr.mxu0 %v2582
        %v2584 = vand.u32 %v2530, 4294901760
        %2585 = vmatpush1.msra.mxu0 %v2584
        %v2586 = vand.u32 %v2533, 4294901760
        %2587 = vmatprep.subr.mxu0 %v2586
        %v2588 = vand.u32 %v2532, 4294901760
        %2589 = vmatpush1.msra.mxu0 %v2588
        %v2590 = vand.u32 %v2535, 4294901760
        %2591 = vmatprep.subr.mxu0 %v2590
        %v2592 = vand.u32 %v2534, 4294901760
        %2593 = vmatpush1.msra.mxu0 %v2592
        %v2594 = vand.u32 %v2537, 4294901760
        %2595 = vmatprep.subr.mxu0 %v2594
        %v2596 = vand.u32 %v2536, 4294901760
        %2597 = vmatpush1.msra.mxu0 %v2596
        %v2598 = vand.u32 %v2539, 4294901760
        %2599 = vmatprep.subr.mxu0 %v2598
        %v2600 = vand.u32 %v2538, 4294901760
        %2601 = vmatpush1.msra.mxu0 %v2600
        %v2602 = vand.u32 %v2541, 4294901760
        %2603 = vmatprep.subr.mxu0 %v2602
        %v2604 = vand.u32 %v2540, 4294901760
        %2605 = vmatpush1.msra.mxu0 %v2604
        %2606 = vmatprep.subr.mxu0 0.0
        %2607 = vmatpush1.msra.mxu0 0.0
        %2608 = vmatprep.subr.mxu0 0.0
        %2609 = vmatpush1.msra.mxu0 0.0
        %2610 = vmatprep.subr.mxu0 0.0
        %2611 = vmatpush1.msra.mxu0 0.0
        %2612 = vmatprep.subr.mxu0 0.0
        %2613 = vmatpush1.msra.mxu0 0.0
        %2614 = vmatprep.subr.mxu0 0.0
        %2615 = vmatpush1.msra.mxu0 0.0
        %2616 = vmatprep.subr.mxu0 0.0
        %2617 = vmatpush1.msra.mxu0 0.0
        %2618 = vmatprep.subr.mxu0 0.0
        %2619 = vmatpush1.msra.mxu0 0.0
        %2620 = vmatprep.subr.mxu0 0.0
        %2621 = vmatpush1.msra.mxu0 0.0
        %2622 = vmatprep.subr.mxu0 0.0
        %2623 = vmatpush1.msra.mxu0 0.0
        %2624 = vmatprep.subr.mxu0 0.0
        %2625 = vmatpush1.msra.mxu0 0.0
        %2626 = vmatprep.subr.mxu0 0.0
        %2627 = vmatpush1.msra.mxu0 0.0
        %2628 = vmatprep.subr.mxu0 0.0
        %2629 = vmatpush1.msra.mxu0 0.0
        %2630 = vmatprep.subr.mxu0 0.0
        %2631 = vmatpush1.msra.mxu0 0.0
        %2632 = vmatprep.subr.mxu0 0.0
        %2633 = vmatpush1.msra.mxu0 0.0
        %2634 = vmatprep.subr.mxu0 0.0
        %2635 = vmatpush1.msra.mxu0 0.0
        %2636 = vmatprep.subr.mxu0 0.0
        %2637 = vmatpush1.msra.mxu0 0.0
        %2638 = vmatprep.mubr.f32.mxu0 0.0
        %v2639 = vand.u32 %v2168, 4294901760
        %v2640 = vsub.f32 %v2168, %v2639
        %v2641 = vand.u32 %v2640, 4294901760
        %v2642 = vsub.f32 %v2640, %v2641
        %v2643 = vand.u32 %v2642, 4294901760
        %2644 = vmatmul.mubr.f32.gmra.mrb[0].mxu0 %v2643
        %v2645 = vpop.f32.mrb[0].mxu0
        %v2646 = vadd.f32 0.0, %v2645
        %v2647 = vpop.f32.mrb[0].mxu0
        %v2648 = vadd.f32 0.0, %v2647
        %2649 = vmatprep.mubr.f32.mxu0 0.0
        %v2650 = vand.u32 %v2271, 4294901760
        %v2651 = vsub.f32 %v2271, %v2650
        %v2652 = vand.u32 %v2651, 4294901760
        %v2653 = vsub.f32 %v2651, %v2652
        %v2654 = vand.u32 %v2653, 4294901760
        %2655 = vmatmul.mubr.f32.gmra.mrb[0].mxu0 %v2654
        %v2656 = vpop.f32.mrb[0].mxu0
        %v2657 = vadd.f32 0.0, %v2656
        %v2658 = vpop.f32.mrb[0].mxu0
        %v2659 = vadd.f32 0.0, %v2658
        %2660 = vmatprep.mubr.f32.mxu0 0.0
        %v2661 = vand.u32 %v2374, 4294901760
        %v2662 = vsub.f32 %v2374, %v2661
        %v2663 = vand.u32 %v2662, 4294901760
        %v2664 = vsub.f32 %v2662, %v2663
        %v2665 = vand.u32 %v2664, 4294901760
        %2666 = vmatmul.mubr.f32.gmra.mrb[0].mxu0 %v2665
        %v2667 = vpop.f32.mrb[0].mxu0
        %v2668 = vadd.f32 0.0, %v2667
        %v2669 = vpop.f32.mrb[0].mxu0
        %v2670 = vadd.f32 0.0, %v2669
        %2671 = vmatprep.mubr.f32.mxu0 0.0
        %v2672 = vand.u32 %v2477, 4294901760
        %v2673 = vsub.f32 %v2477, %v2672
        %v2674 = vand.u32 %v2673, 4294901760
        %v2675 = vsub.f32 %v2673, %v2674
        %v2676 = vand.u32 %v2675, 4294901760
        %2677 = vmatmul.mubr.f32.gmra.mrb[0].mxu0 %v2676
        %v2678 = vpop.f32.mrb[0].mxu0
        %v2679 = vadd.f32 0.0, %v2678
        %v2680 = vpop.f32.mrb[0].mxu0
        %v2681 = vadd.f32 0.0, %v2680
        %2682 = vdwg.mxu0
        %v2683 = vand.u32 %v2511, 4294901760
        %v2684 = vsub.f32 %v2511, %v2683
        %v2685 = vand.u32 %v2684, 4294901760
        %v2686 = vsub.f32 %v2684, %v2685
        %v2687 = vand.u32 %v2686, 4294901760
        %2688 = vmatprep.subr.mxu0 %v2687
        %v2689 = vand.u32 %v2510, 4294901760
        %v2690 = vsub.f32 %v2510, %v2689
        %v2691 = vand.u32 %v2690, 4294901760
        %v2692 = vsub.f32 %v2690, %v2691
        %v2693 = vand.u32 %v2692, 4294901760
        %2694 = vmatpush1.msra.mxu0 %v2693
        %v2695 = vand.u32 %v2513, 4294901760
        %v2696 = vsub.f32 %v2513, %v2695
        %v2697 = vand.u32 %v2696, 4294901760
        %v2698 = vsub.f32 %v2696, %v2697
        %v2699 = vand.u32 %v2698, 4294901760
        %2700 = vmatprep.subr.mxu0 %v2699
        %v2701 = vand.u32 %v2512, 4294901760
        %v2702 = vsub.f32 %v2512, %v2701
        %v2703 = vand.u32 %v2702, 4294901760
        %v2704 = vsub.f32 %v2702, %v2703
        %v2705 = vand.u32 %v2704, 4294901760
        %2706 = vmatpush1.msra.mxu0 %v2705
        %v2707 = vand.u32 %v2515, 4294901760
        %v2708 = vsub.f32 %v2515, %v2707
        %v2709 = vand.u32 %v2708, 4294901760
        %v2710 = vsub.f32 %v2708, %v2709
        %v2711 = vand.u32 %v2710, 4294901760
        %2712 = vmatprep.subr.mxu0 %v2711
        %v2713 = vand.u32 %v2514, 4294901760
        %v2714 = vsub.f32 %v2514, %v2713
        %v2715 = vand.u32 %v2714, 4294901760
        %v2716 = vsub.f32 %v2714, %v2715
        %v2717 = vand.u32 %v2716, 4294901760
        %2718 = vmatpush1.msra.mxu0 %v2717
        %v2719 = vand.u32 %v2517, 4294901760
        %v2720 = vsub.f32 %v2517, %v2719
        %v2721 = vand.u32 %v2720, 4294901760
        %v2722 = vsub.f32 %v2720, %v2721
        %v2723 = vand.u32 %v2722, 4294901760
        %2724 = vmatprep.subr.mxu0 %v2723
        %v2725 = vand.u32 %v2516, 4294901760
        %v2726 = vsub.f32 %v2516, %v2725
        %v2727 = vand.u32 %v2726, 4294901760
        %v2728 = vsub.f32 %v2726, %v2727
        %v2729 = vand.u32 %v2728, 4294901760
        %2730 = vmatpush1.msra.mxu0 %v2729
        %v2731 = vand.u32 %v2519, 4294901760
        %v2732 = vsub.f32 %v2519, %v2731
        %v2733 = vand.u32 %v2732, 4294901760
        %v2734 = vsub.f32 %v2732, %v2733
        %v2735 = vand.u32 %v2734, 4294901760
        %2736 = vmatprep.subr.mxu0 %v2735
        %v2737 = vand.u32 %v2518, 4294901760
        %v2738 = vsub.f32 %v2518, %v2737
        %v2739 = vand.u32 %v2738, 4294901760
        %v2740 = vsub.f32 %v2738, %v2739
        %v2741 = vand.u32 %v2740, 4294901760
        %2742 = vmatpush1.msra.mxu0 %v2741
        %v2743 = vand.u32 %v2521, 4294901760
        %v2744 = vsub.f32 %v2521, %v2743
        %v2745 = vand.u32 %v2744, 4294901760
        %v2746 = vsub.f32 %v2744, %v2745
        %v2747 = vand.u32 %v2746, 4294901760
        %2748 = vmatprep.subr.mxu0 %v2747
        %v2749 = vand.u32 %v2520, 4294901760
        %v2750 = vsub.f32 %v2520, %v2749
        %v2751 = vand.u32 %v2750, 4294901760
        %v2752 = vsub.f32 %v2750, %v2751
        %v2753 = vand.u32 %v2752, 4294901760
        %2754 = vmatpush1.msra.mxu0 %v2753
        %v2755 = vand.u32 %v2523, 4294901760
        %v2756 = vsub.f32 %v2523, %v2755
        %v2757 = vand.u32 %v2756, 4294901760
        %v2758 = vsub.f32 %v2756, %v2757
        %v2759 = vand.u32 %v2758, 4294901760
        %2760 = vmatprep.subr.mxu0 %v2759
        %v2761 = vand.u32 %v2522, 4294901760
        %v2762 = vsub.f32 %v2522, %v2761
        %v2763 = vand.u32 %v2762, 4294901760
        %v2764 = vsub.f32 %v2762, %v2763
        %v2765 = vand.u32 %v2764, 4294901760
        %2766 = vmatpush1.msra.mxu0 %v2765
        %v2767 = vand.u32 %v2525, 4294901760
        %v2768 = vsub.f32 %v2525, %v2767
        %v2769 = vand.u32 %v2768, 4294901760
        %v2770 = vsub.f32 %v2768, %v2769
        %v2771 = vand.u32 %v2770, 4294901760
        %2772 = vmatprep.subr.mxu0 %v2771
        %v2773 = vand.u32 %v2524, 4294901760
        %v2774 = vsub.f32 %v2524, %v2773
        %v2775 = vand.u32 %v2774, 4294901760
        %v2776 = vsub.f32 %v2774, %v2775
        %v2777 = vand.u32 %v2776, 4294901760
        %2778 = vmatpush1.msra.mxu0 %v2777
        %v2779 = vand.u32 %v2527, 4294901760
        %v2780 = vsub.f32 %v2527, %v2779
        %v2781 = vand.u32 %v2780, 4294901760
        %v2782 = vsub.f32 %v2780, %v2781
        %v2783 = vand.u32 %v2782, 4294901760
        %2784 = vmatprep.subr.mxu0 %v2783
        %v2785 = vand.u32 %v2526, 4294901760
        %v2786 = vsub.f32 %v2526, %v2785
        %v2787 = vand.u32 %v2786, 4294901760
        %v2788 = vsub.f32 %v2786, %v2787
        %v2789 = vand.u32 %v2788, 4294901760
        %2790 = vmatpush1.msra.mxu0 %v2789
        %v2791 = vand.u32 %v2529, 4294901760
        %v2792 = vsub.f32 %v2529, %v2791
        %v2793 = vand.u32 %v2792, 4294901760
        %v2794 = vsub.f32 %v2792, %v2793
        %v2795 = vand.u32 %v2794, 4294901760
        %2796 = vmatprep.subr.mxu0 %v2795
        %v2797 = vand.u32 %v2528, 4294901760
        %v2798 = vsub.f32 %v2528, %v2797
        %v2799 = vand.u32 %v2798, 4294901760
        %v2800 = vsub.f32 %v2798, %v2799
        %v2801 = vand.u32 %v2800, 4294901760
        %2802 = vmatpush1.msra.mxu0 %v2801
        %v2803 = vand.u32 %v2531, 4294901760
        %v2804 = vsub.f32 %v2531, %v2803
        %v2805 = vand.u32 %v2804, 4294901760
        %v2806 = vsub.f32 %v2804, %v2805
        %v2807 = vand.u32 %v2806, 4294901760
        %2808 = vmatprep.subr.mxu0 %v2807
        %v2809 = vand.u32 %v2530, 4294901760
        %v2810 = vsub.f32 %v2530, %v2809
        %v2811 = vand.u32 %v2810, 4294901760
        %v2812 = vsub.f32 %v2810, %v2811
        %v2813 = vand.u32 %v2812, 4294901760
        %2814 = vmatpush1.msra.mxu0 %v2813
        %v2815 = vand.u32 %v2533, 4294901760
        %v2816 = vsub.f32 %v2533, %v2815
        %v2817 = vand.u32 %v2816, 4294901760
        %v2818 = vsub.f32 %v2816, %v2817
        %v2819 = vand.u32 %v2818, 4294901760
        %2820 = vmatprep.subr.mxu0 %v2819
        %v2821 = vand.u32 %v2532, 4294901760
        %v2822 = vsub.f32 %v2532, %v2821
        %v2823 = vand.u32 %v2822, 4294901760
        %v2824 = vsub.f32 %v2822, %v2823
        %v2825 = vand.u32 %v2824, 4294901760
        %2826 = vmatpush1.msra.mxu0 %v2825
        %v2827 = vand.u32 %v2535, 4294901760
        %v2828 = vsub.f32 %v2535, %v2827
        %v2829 = vand.u32 %v2828, 4294901760
        %v2830 = vsub.f32 %v2828, %v2829
        %v2831 = vand.u32 %v2830, 4294901760
        %2832 = vmatprep.subr.mxu0 %v2831
        %v2833 = vand.u32 %v2534, 4294901760
        %v2834 = vsub.f32 %v2534, %v2833
        %v2835 = vand.u32 %v2834, 4294901760
        %v2836 = vsub.f32 %v2834, %v2835
        %v2837 = vand.u32 %v2836, 4294901760
        %2838 = vmatpush1.msra.mxu0 %v2837
        %v2839 = vand.u32 %v2537, 4294901760
        %v2840 = vsub.f32 %v2537, %v2839
        %v2841 = vand.u32 %v2840, 4294901760
        %v2842 = vsub.f32 %v2840, %v2841
        %v2843 = vand.u32 %v2842, 4294901760
        %2844 = vmatprep.subr.mxu0 %v2843
        %v2845 = vand.u32 %v2536, 4294901760
        %v2846 = vsub.f32 %v2536, %v2845
        %v2847 = vand.u32 %v2846, 4294901760
        %v2848 = vsub.f32 %v2846, %v2847
        %v2849 = vand.u32 %v2848, 4294901760
        %2850 = vmatpush1.msra.mxu0 %v2849
        %v2851 = vand.u32 %v2539, 4294901760
        %v2852 = vsub.f32 %v2539, %v2851
        %v2853 = vand.u32 %v2852, 4294901760
        %v2854 = vsub.f32 %v2852, %v2853
        %v2855 = vand.u32 %v2854, 4294901760
        %2856 = vmatprep.subr.mxu0 %v2855
        %v2857 = vand.u32 %v2538, 4294901760
        %v2858 = vsub.f32 %v2538, %v2857
        %v2859 = vand.u32 %v2858, 4294901760
        %v2860 = vsub.f32 %v2858, %v2859
        %v2861 = vand.u32 %v2860, 4294901760
        %2862 = vmatpush1.msra.mxu0 %v2861
        %v2863 = vand.u32 %v2541, 4294901760
        %v2864 = vsub.f32 %v2541, %v2863
        %v2865 = vand.u32 %v2864, 4294901760
        %v2866 = vsub.f32 %v2864, %v2865
        %v2867 = vand.u32 %v2866, 4294901760
        %2868 = vmatprep.subr.mxu0 %v2867
        %v2869 = vand.u32 %v2540, 4294901760
        %v2870 = vsub.f32 %v2540, %v2869
        %v2871 = vand.u32 %v2870, 4294901760
        %v2872 = vsub.f32 %v2870, %v2871
        %v2873 = vand.u32 %v2872, 4294901760
        %2874 = vmatpush1.msra.mxu0 %v2873
        %2875 = vmatprep.subr.mxu0 0.0
        %2876 = vmatpush1.msra.mxu0 0.0
        %2877 = vmatprep.subr.mxu0 0.0
        %2878 = vmatpush1.msra.mxu0 0.0
        %2879 = vmatprep.subr.mxu0 0.0
        %2880 = vmatpush1.msra.mxu0 0.0
        %2881 = vmatprep.subr.mxu0 0.0
        %2882 = vmatpush1.msra.mxu0 0.0
        %2883 = vmatprep.subr.mxu0 0.0
        %2884 = vmatpush1.msra.mxu0 0.0
        %2885 = vmatprep.subr.mxu0 0.0
        %2886 = vmatpush1.msra.mxu0 0.0
        %2887 = vmatprep.subr.mxu0 0.0
        %2888 = vmatpush1.msra.mxu0 0.0
        %2889 = vmatprep.subr.mxu0 0.0
        %2890 = vmatpush1.msra.mxu0 0.0
        %2891 = vmatprep.subr.mxu0 0.0
        %2892 = vmatpush1.msra.mxu0 0.0
        %2893 = vmatprep.subr.mxu0 0.0
        %2894 = vmatpush1.msra.mxu0 0.0
        %2895 = vmatprep.subr.mxu0 0.0
        %2896 = vmatpush1.msra.mxu0 0.0
        %2897 = vmatprep.subr.mxu0 0.0
        %2898 = vmatpush1.msra.mxu0 0.0
        %2899 = vmatprep.subr.mxu0 0.0
        %2900 = vmatpush1.msra.mxu0 0.0
        %2901 = vmatprep.subr.mxu0 0.0
        %2902 = vmatpush1.msra.mxu0 0.0
        %2903 = vmatprep.subr.mxu0 0.0
        %2904 = vmatpush1.msra.mxu0 0.0
        %2905 = vmatprep.subr.mxu0 0.0
        %2906 = vmatpush1.msra.mxu0 0.0
        %2907 = vmatprep.mubr.f32.mxu0 0.0
        %v2908 = vand.u32 %v2168, 4294901760
        %2909 = vmatmul.mubr.f32.gmra.mrb[0].mxu0 %v2908
        %v2910 = vpop.f32.mrb[0].mxu0
        %v2911 = vadd.f32 %v2646, %v2910
        %v2912 = vpop.f32.mrb[0].mxu0
        %v2913 = vadd.f32 %v2648, %v2912
        %2914 = vmatprep.mubr.f32.mxu0 0.0
        %v2915 = vand.u32 %v2271, 4294901760
        %2916 = vmatmul.mubr.f32.gmra.mrb[0].mxu0 %v2915
        %v2917 = vpop.f32.mrb[0].mxu0
        %v2918 = vadd.f32 %v2657, %v2917
        %v2919 = vpop.f32.mrb[0].mxu0
        %v2920 = vadd.f32 %v2659, %v2919
        %2921 = vmatprep.mubr.f32.mxu0 0.0
        %v2922 = vand.u32 %v2374, 4294901760
        %2923 = vmatmul.mubr.f32.gmra.mrb[0].mxu0 %v2922
        %v2924 = vpop.f32.mrb[0].mxu0
        %v2925 = vadd.f32 %v2668, %v2924
        %v2926 = vpop.f32.mrb[0].mxu0
        %v2927 = vadd.f32 %v2670, %v2926
        %2928 = vmatprep.mubr.f32.mxu0 0.0
        %v2929 = vand.u32 %v2477, 4294901760
        %2930 = vmatmul.mubr.f32.gmra.mrb[0].mxu0 %v2929
        %v2931 = vpop.f32.mrb[0].mxu0
        %v2932 = vadd.f32 %v2679, %v2931
        %v2933 = vpop.f32.mrb[0].mxu0
        %v2934 = vadd.f32 %v2681, %v2933
        %2935 = vdwg.mxu0
        %v2936 = vand.u32 %v2511, 4294901760
        %v2937 = vsub.f32 %v2511, %v2936
        %2938 = vmatprep.subr.mxu0 %v2937
        %v2939 = vand.u32 %v2510, 4294901760
        %v2940 = vsub.f32 %v2510, %v2939
        %2941 = vmatpush1.msra.mxu0 %v2940
        %v2942 = vand.u32 %v2513, 4294901760
        %v2943 = vsub.f32 %v2513, %v2942
        %2944 = vmatprep.subr.mxu0 %v2943
        %v2945 = vand.u32 %v2512, 4294901760
        %v2946 = vsub.f32 %v2512, %v2945
        %2947 = vmatpush1.msra.mxu0 %v2946
        %v2948 = vand.u32 %v2515, 4294901760
        %v2949 = vsub.f32 %v2515, %v2948
        %2950 = vmatprep.subr.mxu0 %v2949
        %v2951 = vand.u32 %v2514, 4294901760
        %v2952 = vsub.f32 %v2514, %v2951
        %2953 = vmatpush1.msra.mxu0 %v2952
        %v2954 = vand.u32 %v2517, 4294901760
        %v2955 = vsub.f32 %v2517, %v2954
        %2956 = vmatprep.subr.mxu0 %v2955
        %v2957 = vand.u32 %v2516, 4294901760
        %v2958 = vsub.f32 %v2516, %v2957
        %2959 = vmatpush1.msra.mxu0 %v2958
        %v2960 = vand.u32 %v2519, 4294901760
        %v2961 = vsub.f32 %v2519, %v2960
        %2962 = vmatprep.subr.mxu0 %v2961
        %v2963 = vand.u32 %v2518, 4294901760
        %v2964 = vsub.f32 %v2518, %v2963
        %2965 = vmatpush1.msra.mxu0 %v2964
        %v2966 = vand.u32 %v2521, 4294901760
        %v2967 = vsub.f32 %v2521, %v2966
        %2968 = vmatprep.subr.mxu0 %v2967
        %v2969 = vand.u32 %v2520, 4294901760
        %v2970 = vsub.f32 %v2520, %v2969
        %2971 = vmatpush1.msra.mxu0 %v2970
        %v2972 = vand.u32 %v2523, 4294901760
        %v2973 = vsub.f32 %v2523, %v2972
        %2974 = vmatprep.subr.mxu0 %v2973
        %v2975 = vand.u32 %v2522, 4294901760
        %v2976 = vsub.f32 %v2522, %v2975
        %2977 = vmatpush1.msra.mxu0 %v2976
        %v2978 = vand.u32 %v2525, 4294901760
        %v2979 = vsub.f32 %v2525, %v2978
        %2980 = vmatprep.subr.mxu0 %v2979
        %v2981 = vand.u32 %v2524, 4294901760
        %v2982 = vsub.f32 %v2524, %v2981
        %2983 = vmatpush1.msra.mxu0 %v2982
        %v2984 = vand.u32 %v2527, 4294901760
        %v2985 = vsub.f32 %v2527, %v2984
        %2986 = vmatprep.subr.mxu0 %v2985
        %v2987 = vand.u32 %v2526, 4294901760
        %v2988 = vsub.f32 %v2526, %v2987
        %2989 = vmatpush1.msra.mxu0 %v2988
        %v2990 = vand.u32 %v2529, 4294901760
        %v2991 = vsub.f32 %v2529, %v2990
        %2992 = vmatprep.subr.mxu0 %v2991
        %v2993 = vand.u32 %v2528, 4294901760
        %v2994 = vsub.f32 %v2528, %v2993
        %2995 = vmatpush1.msra.mxu0 %v2994
        %v2996 = vand.u32 %v2531, 4294901760
        %v2997 = vsub.f32 %v2531, %v2996
        %2998 = vmatprep.subr.mxu0 %v2997
        %v2999 = vand.u32 %v2530, 4294901760
        %v3000 = vsub.f32 %v2530, %v2999
        %3001 = vmatpush1.msra.mxu0 %v3000
        %v3002 = vand.u32 %v2533, 4294901760
        %v3003 = vsub.f32 %v2533, %v3002
        %3004 = vmatprep.subr.mxu0 %v3003
        %v3005 = vand.u32 %v2532, 4294901760
        %v3006 = vsub.f32 %v2532, %v3005
        %3007 = vmatpush1.msra.mxu0 %v3006
        %v3008 = vand.u32 %v2535, 4294901760
        %v3009 = vsub.f32 %v2535, %v3008
        %3010 = vmatprep.subr.mxu0 %v3009
        %v3011 = vand.u32 %v2534, 4294901760
        %v3012 = vsub.f32 %v2534, %v3011
        %3013 = vmatpush1.msra.mxu0 %v3012
        %v3014 = vand.u32 %v2537, 4294901760
        %v3015 = vsub.f32 %v2537, %v3014
        %3016 = vmatprep.subr.mxu0 %v3015
        %v3017 = vand.u32 %v2536, 4294901760
        %v3018 = vsub.f32 %v2536, %v3017
        %3019 = vmatpush1.msra.mxu0 %v3018
        %v3020 = vand.u32 %v2539, 4294901760
        %v3021 = vsub.f32 %v2539, %v3020
        %3022 = vmatprep.subr.mxu0 %v3021
        %v3023 = vand.u32 %v2538, 4294901760
        %v3024 = vsub.f32 %v2538, %v3023
        %3025 = vmatpush1.msra.mxu0 %v3024
        %v3026 = vand.u32 %v2541, 4294901760
        %v3027 = vsub.f32 %v2541, %v3026
        %3028 = vmatprep.subr.mxu0 %v3027
        %v3029 = vand.u32 %v2540, 4294901760
        %v3030 = vsub.f32 %v2540, %v3029
        %3031 = vmatpush1.msra.mxu0 %v3030
        %3032 = vmatprep.subr.mxu0 0.0
        %3033 = vmatpush1.msra.mxu0 0.0
        %3034 = vmatprep.subr.mxu0 0.0
        %3035 = vmatpush1.msra.mxu0 0.0
        %3036 = vmatprep.subr.mxu0 0.0
        %3037 = vmatpush1.msra.mxu0 0.0
        %3038 = vmatprep.subr.mxu0 0.0
        %3039 = vmatpush1.msra.mxu0 0.0
        %3040 = vmatprep.subr.mxu0 0.0
        %3041 = vmatpush1.msra.mxu0 0.0
        %3042 = vmatprep.subr.mxu0 0.0
        %3043 = vmatpush1.msra.mxu0 0.0
        %3044 = vmatprep.subr.mxu0 0.0
        %3045 = vmatpush1.msra.mxu0 0.0
        %3046 = vmatprep.subr.mxu0 0.0
        %3047 = vmatpush1.msra.mxu0 0.0
        %3048 = vmatprep.subr.mxu0 0.0
        %3049 = vmatpush1.msra.mxu0 0.0
        %3050 = vmatprep.subr.mxu0 0.0
        %3051 = vmatpush1.msra.mxu0 0.0
        %3052 = vmatprep.subr.mxu0 0.0
        %3053 = vmatpush1.msra.mxu0 0.0
        %3054 = vmatprep.subr.mxu0 0.0
        %3055 = vmatpush1.msra.mxu0 0.0
        %3056 = vmatprep.subr.mxu0 0.0
        %3057 = vmatpush1.msra.mxu0 0.0
        %3058 = vmatprep.subr.mxu0 0.0
        %3059 = vmatpush1.msra.mxu0 0.0
        %3060 = vmatprep.subr.mxu0 0.0
        %3061 = vmatpush1.msra.mxu0 0.0
        %3062 = vmatprep.subr.mxu0 0.0
        %3063 = vmatpush1.msra.mxu0 0.0
        %3064 = vmatprep.mubr.f32.mxu0 0.0
        %v3065 = vand.u32 %v2168, 4294901760
        %v3066 = vsub.f32 %v2168, %v3065
        %3067 = vmatmul.mubr.f32.gmra.mrb[0].mxu0 %v3066
        %v3068 = vpop.f32.mrb[0].mxu0
        %v3069 = vadd.f32 %v2911, %v3068
        %v3070 = vpop.f32.mrb[0].mxu0
        %v3071 = vadd.f32 %v2913, %v3070
        %3072 = vmatprep.mubr.f32.mxu0 0.0
        %v3073 = vand.u32 %v2271, 4294901760
        %v3074 = vsub.f32 %v2271, %v3073
        %3075 = vmatmul.mubr.f32.gmra.mrb[0].mxu0 %v3074
        %v3076 = vpop.f32.mrb[0].mxu0
        %v3077 = vadd.f32 %v2918, %v3076
        %v3078 = vpop.f32.mrb[0].mxu0
        %v3079 = vadd.f32 %v2920, %v3078
        %3080 = vmatprep.mubr.f32.mxu0 0.0
        %v3081 = vand.u32 %v2374, 4294901760
        %v3082 = vsub.f32 %v2374, %v3081
        %3083 = vmatmul.mubr.f32.gmra.mrb[0].mxu0 %v3082
        %v3084 = vpop.f32.mrb[0].mxu0
        %v3085 = vadd.f32 %v2925, %v3084
        %v3086 = vpop.f32.mrb[0].mxu0
        %v3087 = vadd.f32 %v2927, %v3086
        %3088 = vmatprep.mubr.f32.mxu0 0.0
        %v3089 = vand.u32 %v2477, 4294901760
        %v3090 = vsub.f32 %v2477, %v3089
        %3091 = vmatmul.mubr.f32.gmra.mrb[0].mxu0 %v3090
        %v3092 = vpop.f32.mrb[0].mxu0
        %v3093 = vadd.f32 %v2932, %v3092
        %v3094 = vpop.f32.mrb[0].mxu0
        %v3095 = vadd.f32 %v2934, %v3094
        %3096 = vdwg.mxu0
        %v3097 = vand.u32 %v2511, 4294901760
        %3098 = vmatprep.subr.mxu0 %v3097
        %v3099 = vand.u32 %v2510, 4294901760
        %3100 = vmatpush1.msra.mxu0 %v3099
        %v3101 = vand.u32 %v2513, 4294901760
        %3102 = vmatprep.subr.mxu0 %v3101
        %v3103 = vand.u32 %v2512, 4294901760
        %3104 = vmatpush1.msra.mxu0 %v3103
        %v3105 = vand.u32 %v2515, 4294901760
        %3106 = vmatprep.subr.mxu0 %v3105
        %v3107 = vand.u32 %v2514, 4294901760
        %3108 = vmatpush1.msra.mxu0 %v3107
        %v3109 = vand.u32 %v2517, 4294901760
        %3110 = vmatprep.subr.mxu0 %v3109
        %v3111 = vand.u32 %v2516, 4294901760
        %3112 = vmatpush1.msra.mxu0 %v3111
        %v3113 = vand.u32 %v2519, 4294901760
        %3114 = vmatprep.subr.mxu0 %v3113
        %v3115 = vand.u32 %v2518, 4294901760
        %3116 = vmatpush1.msra.mxu0 %v3115
        %v3117 = vand.u32 %v2521, 4294901760
        %3118 = vmatprep.subr.mxu0 %v3117
        %v3119 = vand.u32 %v2520, 4294901760
        %3120 = vmatpush1.msra.mxu0 %v3119
        %v3121 = vand.u32 %v2523, 4294901760
        %3122 = vmatprep.subr.mxu0 %v3121
        %v3123 = vand.u32 %v2522, 4294901760
        %3124 = vmatpush1.msra.mxu0 %v3123
        %v3125 = vand.u32 %v2525, 4294901760
        %3126 = vmatprep.subr.mxu0 %v3125
        %v3127 = vand.u32 %v2524, 4294901760
        %3128 = vmatpush1.msra.mxu0 %v3127
        %v3129 = vand.u32 %v2527, 4294901760
        %3130 = vmatprep.subr.mxu0 %v3129
        %v3131 = vand.u32 %v2526, 4294901760
        %3132 = vmatpush1.msra.mxu0 %v3131
        %v3133 = vand.u32 %v2529, 4294901760
        %3134 = vmatprep.subr.mxu0 %v3133
        %v3135 = vand.u32 %v2528, 4294901760
        %3136 = vmatpush1.msra.mxu0 %v3135
        %v3137 = vand.u32 %v2531, 4294901760
        %3138 = vmatprep.subr.mxu0 %v3137
        %v3139 = vand.u32 %v2530, 4294901760
        %3140 = vmatpush1.msra.mxu0 %v3139
        %v3141 = vand.u32 %v2533, 4294901760
        %3142 = vmatprep.subr.mxu0 %v3141
        %v3143 = vand.u32 %v2532, 4294901760
        %3144 = vmatpush1.msra.mxu0 %v3143
        %v3145 = vand.u32 %v2535, 4294901760
        %3146 = vmatprep.subr.mxu0 %v3145
        %v3147 = vand.u32 %v2534, 4294901760
        %3148 = vmatpush1.msra.mxu0 %v3147
        %v3149 = vand.u32 %v2537, 4294901760
        %3150 = vmatprep.subr.mxu0 %v3149
        %v3151 = vand.u32 %v2536, 4294901760
        %3152 = vmatpush1.msra.mxu0 %v3151
        %v3153 = vand.u32 %v2539, 4294901760
        %3154 = vmatprep.subr.mxu0 %v3153
        %v3155 = vand.u32 %v2538, 4294901760
        %3156 = vmatpush1.msra.mxu0 %v3155
        %v3157 = vand.u32 %v2541, 4294901760
        %3158 = vmatprep.subr.mxu0 %v3157
        %v3159 = vand.u32 %v2540, 4294901760
        %3160 = vmatpush1.msra.mxu0 %v3159
        %3161 = vmatprep.subr.mxu0 0.0
        %3162 = vmatpush1.msra.mxu0 0.0
        %3163 = vmatprep.subr.mxu0 0.0
        %3164 = vmatpush1.msra.mxu0 0.0
        %3165 = vmatprep.subr.mxu0 0.0
        %3166 = vmatpush1.msra.mxu0 0.0
        %3167 = vmatprep.subr.mxu0 0.0
        %3168 = vmatpush1.msra.mxu0 0.0
        %3169 = vmatprep.subr.mxu0 0.0
        %3170 = vmatpush1.msra.mxu0 0.0
        %3171 = vmatprep.subr.mxu0 0.0
        %3172 = vmatpush1.msra.mxu0 0.0
        %3173 = vmatprep.subr.mxu0 0.0
        %3174 = vmatpush1.msra.mxu0 0.0
        %3175 = vmatprep.subr.mxu0 0.0
        %3176 = vmatpush1.msra.mxu0 0.0
        %3177 = vmatprep.subr.mxu0 0.0
        %3178 = vmatpush1.msra.mxu0 0.0
        %3179 = vmatprep.subr.mxu0 0.0
        %3180 = vmatpush1.msra.mxu0 0.0
        %3181 = vmatprep.subr.mxu0 0.0
        %3182 = vmatpush1.msra.mxu0 0.0
        %3183 = vmatprep.subr.mxu0 0.0
        %3184 = vmatpush1.msra.mxu0 0.0
        %3185 = vmatprep.subr.mxu0 0.0
        %3186 = vmatpush1.msra.mxu0 0.0
        %3187 = vmatprep.subr.mxu0 0.0
        %3188 = vmatpush1.msra.mxu0 0.0
        %3189 = vmatprep.subr.mxu0 0.0
        %3190 = vmatpush1.msra.mxu0 0.0
        %3191 = vmatprep.subr.mxu0 0.0
        %3192 = vmatpush1.msra.mxu0 0.0
        %3193 = vmatprep.mubr.f32.mxu0 0.0
        %v3194 = vand.u32 %v2168, 4294901760
        %v3195 = vsub.f32 %v2168, %v3194
        %v3196 = vand.u32 %v3195, 4294901760
        %3197 = vmatmul.mubr.f32.gmra.mrb[0].mxu0 %v3196
        %v3198 = vpop.f32.mrb[0].mxu0
        %v3199 = vadd.f32 %v3069, %v3198
        %v3200 = vpop.f32.mrb[0].mxu0
        %v3201 = vadd.f32 %v3071, %v3200
        %3202 = vmatprep.mubr.f32.mxu0 0.0
        %v3203 = vand.u32 %v2271, 4294901760
        %v3204 = vsub.f32 %v2271, %v3203
        %v3205 = vand.u32 %v3204, 4294901760
        %3206 = vmatmul.mubr.f32.gmra.mrb[0].mxu0 %v3205
        %v3207 = vpop.f32.mrb[0].mxu0
        %v3208 = vadd.f32 %v3077, %v3207
        %v3209 = vpop.f32.mrb[0].mxu0
        %v3210 = vadd.f32 %v3079, %v3209
        %3211 = vmatprep.mubr.f32.mxu0 0.0
        %v3212 = vand.u32 %v2374, 4294901760
        %v3213 = vsub.f32 %v2374, %v3212
        %v3214 = vand.u32 %v3213, 4294901760
        %3215 = vmatmul.mubr.f32.gmra.mrb[0].mxu0 %v3214
        %v3216 = vpop.f32.mrb[0].mxu0
        %v3217 = vadd.f32 %v3085, %v3216
        %v3218 = vpop.f32.mrb[0].mxu0
        %v3219 = vadd.f32 %v3087, %v3218
        %3220 = vmatprep.mubr.f32.mxu0 0.0
        %v3221 = vand.u32 %v2477, 4294901760
        %v3222 = vsub.f32 %v2477, %v3221
        %v3223 = vand.u32 %v3222, 4294901760
        %3224 = vmatmul.mubr.f32.gmra.mrb[0].mxu0 %v3223
        %v3225 = vpop.f32.mrb[0].mxu0
        %v3226 = vadd.f32 %v3093, %v3225
        %v3227 = vpop.f32.mrb[0].mxu0
        %v3228 = vadd.f32 %v3095, %v3227
        %3229 = vdwg.mxu0
        %v3230 = vand.u32 %v2511, 4294901760
        %v3231 = vsub.f32 %v2511, %v3230
        %v3232 = vand.u32 %v3231, 4294901760
        %3233 = vmatprep.subr.mxu0 %v3232
        %v3234 = vand.u32 %v2510, 4294901760
        %v3235 = vsub.f32 %v2510, %v3234
        %v3236 = vand.u32 %v3235, 4294901760
        %3237 = vmatpush1.msra.mxu0 %v3236
        %v3238 = vand.u32 %v2513, 4294901760
        %v3239 = vsub.f32 %v2513, %v3238
        %v3240 = vand.u32 %v3239, 4294901760
        %3241 = vmatprep.subr.mxu0 %v3240
        %v3242 = vand.u32 %v2512, 4294901760
        %v3243 = vsub.f32 %v2512, %v3242
        %v3244 = vand.u32 %v3243, 4294901760
        %3245 = vmatpush1.msra.mxu0 %v3244
        %v3246 = vand.u32 %v2515, 4294901760
        %v3247 = vsub.f32 %v2515, %v3246
        %v3248 = vand.u32 %v3247, 4294901760
        %3249 = vmatprep.subr.mxu0 %v3248
        %v3250 = vand.u32 %v2514, 4294901760
        %v3251 = vsub.f32 %v2514, %v3250
        %v3252 = vand.u32 %v3251, 4294901760
        %3253 = vmatpush1.msra.mxu0 %v3252
        %v3254 = vand.u32 %v2517, 4294901760
        %v3255 = vsub.f32 %v2517, %v3254
        %v3256 = vand.u32 %v3255, 4294901760
        %3257 = vmatprep.subr.mxu0 %v3256
        %v3258 = vand.u32 %v2516, 4294901760
        %v3259 = vsub.f32 %v2516, %v3258
        %v3260 = vand.u32 %v3259, 4294901760
        %3261 = vmatpush1.msra.mxu0 %v3260
        %v3262 = vand.u32 %v2519, 4294901760
        %v3263 = vsub.f32 %v2519, %v3262
        %v3264 = vand.u32 %v3263, 4294901760
        %3265 = vmatprep.subr.mxu0 %v3264
        %v3266 = vand.u32 %v2518, 4294901760
        %v3267 = vsub.f32 %v2518, %v3266
        %v3268 = vand.u32 %v3267, 4294901760
        %3269 = vmatpush1.msra.mxu0 %v3268
        %v3270 = vand.u32 %v2521, 4294901760
        %v3271 = vsub.f32 %v2521, %v3270
        %v3272 = vand.u32 %v3271, 4294901760
        %3273 = vmatprep.subr.mxu0 %v3272
        %v3274 = vand.u32 %v2520, 4294901760
        %v3275 = vsub.f32 %v2520, %v3274
        %v3276 = vand.u32 %v3275, 4294901760
        %3277 = vmatpush1.msra.mxu0 %v3276
        %v3278 = vand.u32 %v2523, 4294901760
        %v3279 = vsub.f32 %v2523, %v3278
        %v3280 = vand.u32 %v3279, 4294901760
        %3281 = vmatprep.subr.mxu0 %v3280
        %v3282 = vand.u32 %v2522, 4294901760
        %v3283 = vsub.f32 %v2522, %v3282
        %v3284 = vand.u32 %v3283, 4294901760
        %3285 = vmatpush1.msra.mxu0 %v3284
        %v3286 = vand.u32 %v2525, 4294901760
        %v3287 = vsub.f32 %v2525, %v3286
        %v3288 = vand.u32 %v3287, 4294901760
        %3289 = vmatprep.subr.mxu0 %v3288
        %v3290 = vand.u32 %v2524, 4294901760
        %v3291 = vsub.f32 %v2524, %v3290
        %v3292 = vand.u32 %v3291, 4294901760
        %3293 = vmatpush1.msra.mxu0 %v3292
        %v3294 = vand.u32 %v2527, 4294901760
        %v3295 = vsub.f32 %v2527, %v3294
        %v3296 = vand.u32 %v3295, 4294901760
        %3297 = vmatprep.subr.mxu0 %v3296
        %v3298 = vand.u32 %v2526, 4294901760
        %v3299 = vsub.f32 %v2526, %v3298
        %v3300 = vand.u32 %v3299, 4294901760
        %3301 = vmatpush1.msra.mxu0 %v3300
        %v3302 = vand.u32 %v2529, 4294901760
        %v3303 = vsub.f32 %v2529, %v3302
        %v3304 = vand.u32 %v3303, 4294901760
        %3305 = vmatprep.subr.mxu0 %v3304
        %v3306 = vand.u32 %v2528, 4294901760
        %v3307 = vsub.f32 %v2528, %v3306
        %v3308 = vand.u32 %v3307, 4294901760
        %3309 = vmatpush1.msra.mxu0 %v3308
        %v3310 = vand.u32 %v2531, 4294901760
        %v3311 = vsub.f32 %v2531, %v3310
        %v3312 = vand.u32 %v3311, 4294901760
        %3313 = vmatprep.subr.mxu0 %v3312
        %v3314 = vand.u32 %v2530, 4294901760
        %v3315 = vsub.f32 %v2530, %v3314
        %v3316 = vand.u32 %v3315, 4294901760
        %3317 = vmatpush1.msra.mxu0 %v3316
        %v3318 = vand.u32 %v2533, 4294901760
        %v3319 = vsub.f32 %v2533, %v3318
        %v3320 = vand.u32 %v3319, 4294901760
        %3321 = vmatprep.subr.mxu0 %v3320
        %v3322 = vand.u32 %v2532, 4294901760
        %v3323 = vsub.f32 %v2532, %v3322
        %v3324 = vand.u32 %v3323, 4294901760
        %3325 = vmatpush1.msra.mxu0 %v3324
        %v3326 = vand.u32 %v2535, 4294901760
        %v3327 = vsub.f32 %v2535, %v3326
        %v3328 = vand.u32 %v3327, 4294901760
        %3329 = vmatprep.subr.mxu0 %v3328
        %v3330 = vand.u32 %v2534, 4294901760
        %v3331 = vsub.f32 %v2534, %v3330
        %v3332 = vand.u32 %v3331, 4294901760
        %3333 = vmatpush1.msra.mxu0 %v3332
        %v3334 = vand.u32 %v2537, 4294901760
        %v3335 = vsub.f32 %v2537, %v3334
        %v3336 = vand.u32 %v3335, 4294901760
        %3337 = vmatprep.subr.mxu0 %v3336
        %v3338 = vand.u32 %v2536, 4294901760
        %v3339 = vsub.f32 %v2536, %v3338
        %v3340 = vand.u32 %v3339, 4294901760
        %3341 = vmatpush1.msra.mxu0 %v3340
        %v3342 = vand.u32 %v2539, 4294901760
        %v3343 = vsub.f32 %v2539, %v3342
        %v3344 = vand.u32 %v3343, 4294901760
        %3345 = vmatprep.subr.mxu0 %v3344
        %v3346 = vand.u32 %v2538, 4294901760
        %v3347 = vsub.f32 %v2538, %v3346
        %v3348 = vand.u32 %v3347, 4294901760
        %3349 = vmatpush1.msra.mxu0 %v3348
        %v3350 = vand.u32 %v2541, 4294901760
        %v3351 = vsub.f32 %v2541, %v3350
        %v3352 = vand.u32 %v3351, 4294901760
        %3353 = vmatprep.subr.mxu0 %v3352
        %v3354 = vand.u32 %v2540, 4294901760
        %v3355 = vsub.f32 %v2540, %v3354
        %v3356 = vand.u32 %v3355, 4294901760
        %3357 = vmatpush1.msra.mxu0 %v3356
        %3358 = vmatprep.subr.mxu0 0.0
        %3359 = vmatpush1.msra.mxu0 0.0
        %3360 = vmatprep.subr.mxu0 0.0
        %3361 = vmatpush1.msra.mxu0 0.0
        %3362 = vmatprep.subr.mxu0 0.0
        %3363 = vmatpush1.msra.mxu0 0.0
        %3364 = vmatprep.subr.mxu0 0.0
        %3365 = vmatpush1.msra.mxu0 0.0
        %3366 = vmatprep.subr.mxu0 0.0
        %3367 = vmatpush1.msra.mxu0 0.0
        %3368 = vmatprep.subr.mxu0 0.0
        %3369 = vmatpush1.msra.mxu0 0.0
        %3370 = vmatprep.subr.mxu0 0.0
        %3371 = vmatpush1.msra.mxu0 0.0
        %3372 = vmatprep.subr.mxu0 0.0
        %3373 = vmatpush1.msra.mxu0 0.0
        %3374 = vmatprep.subr.mxu0 0.0
        %3375 = vmatpush1.msra.mxu0 0.0
        %3376 = vmatprep.subr.mxu0 0.0
        %3377 = vmatpush1.msra.mxu0 0.0
        %3378 = vmatprep.subr.mxu0 0.0
        %3379 = vmatpush1.msra.mxu0 0.0
        %3380 = vmatprep.subr.mxu0 0.0
        %3381 = vmatpush1.msra.mxu0 0.0
        %3382 = vmatprep.subr.mxu0 0.0
        %3383 = vmatpush1.msra.mxu0 0.0
        %3384 = vmatprep.subr.mxu0 0.0
        %3385 = vmatpush1.msra.mxu0 0.0
        %3386 = vmatprep.subr.mxu0 0.0
        %3387 = vmatpush1.msra.mxu0 0.0
        %3388 = vmatprep.subr.mxu0 0.0
        %3389 = vmatpush1.msra.mxu0 0.0
        %3390 = vmatprep.mubr.f32.mxu0 0.0
        %v3391 = vand.u32 %v2168, 4294901760
        %3392 = vmatmul.mubr.f32.gmra.mrb[0].mxu0 %v3391
        %v3393 = vpop.f32.mrb[0].mxu0
        %v3394 = vadd.f32 %v3199, %v3393
        %v3395 = vpop.f32.mrb[0].mxu0
        %v3396 = vadd.f32 %v3201, %v3395
        %3397 = vmatprep.mubr.f32.mxu0 0.0
        %v3398 = vand.u32 %v2271, 4294901760
        %3399 = vmatmul.mubr.f32.gmra.mrb[0].mxu0 %v3398
        %v3400 = vpop.f32.mrb[0].mxu0
        %v3401 = vadd.f32 %v3208, %v3400
        %v3402 = vpop.f32.mrb[0].mxu0
        %v3403 = vadd.f32 %v3210, %v3402
        %3404 = vmatprep.mubr.f32.mxu0 0.0
        %v3405 = vand.u32 %v2374, 4294901760
        %3406 = vmatmul.mubr.f32.gmra.mrb[0].mxu0 %v3405
        %v3407 = vpop.f32.mrb[0].mxu0
        %v3408 = vadd.f32 %v3217, %v3407
        %v3409 = vpop.f32.mrb[0].mxu0
        %v3410 = vadd.f32 %v3219, %v3409
        %3411 = vmatprep.mubr.f32.mxu0 0.0
        %v3412 = vand.u32 %v2477, 4294901760
        %3413 = vmatmul.mubr.f32.gmra.mrb[0].mxu0 %v3412
        %v3414 = vpop.f32.mrb[0].mxu0
        %v3415 = vadd.f32 %v3226, %v3414
        %v3416 = vpop.f32.mrb[0].mxu0
        %v3417 = vadd.f32 %v3228, %v3416
        %3418 = vdwg.mxu0
        %v3419 = vand.u32 %v2511, 4294901760
        %3420 = vmatprep.subr.mxu0 %v3419
        %v3421 = vand.u32 %v2510, 4294901760
        %3422 = vmatpush1.msra.mxu0 %v3421
        %v3423 = vand.u32 %v2513, 4294901760
        %3424 = vmatprep.subr.mxu0 %v3423
        %v3425 = vand.u32 %v2512, 4294901760
        %3426 = vmatpush1.msra.mxu0 %v3425
        %v3427 = vand.u32 %v2515, 4294901760
        %3428 = vmatprep.subr.mxu0 %v3427
        %v3429 = vand.u32 %v2514, 4294901760
        %3430 = vmatpush1.msra.mxu0 %v3429
        %v3431 = vand.u32 %v2517, 4294901760
        %3432 = vmatprep.subr.mxu0 %v3431
        %v3433 = vand.u32 %v2516, 4294901760
        %3434 = vmatpush1.msra.mxu0 %v3433
        %v3435 = vand.u32 %v2519, 4294901760
        %3436 = vmatprep.subr.mxu0 %v3435
        %v3437 = vand.u32 %v2518, 4294901760
        %3438 = vmatpush1.msra.mxu0 %v3437
        %v3439 = vand.u32 %v2521, 4294901760
        %3440 = vmatprep.subr.mxu0 %v3439
        %v3441 = vand.u32 %v2520, 4294901760
        %3442 = vmatpush1.msra.mxu0 %v3441
        %v3443 = vand.u32 %v2523, 4294901760
        %3444 = vmatprep.subr.mxu0 %v3443
        %v3445 = vand.u32 %v2522, 4294901760
        %3446 = vmatpush1.msra.mxu0 %v3445
        %v3447 = vand.u32 %v2525, 4294901760
        %3448 = vmatprep.subr.mxu0 %v3447
        %v3449 = vand.u32 %v2524, 4294901760
        %3450 = vmatpush1.msra.mxu0 %v3449
        %v3451 = vand.u32 %v2527, 4294901760
        %3452 = vmatprep.subr.mxu0 %v3451
        %v3453 = vand.u32 %v2526, 4294901760
        %3454 = vmatpush1.msra.mxu0 %v3453
        %v3455 = vand.u32 %v2529, 4294901760
        %3456 = vmatprep.subr.mxu0 %v3455
        %v3457 = vand.u32 %v2528, 4294901760
        %3458 = vmatpush1.msra.mxu0 %v3457
        %v3459 = vand.u32 %v2531, 4294901760
        %3460 = vmatprep.subr.mxu0 %v3459
        %v3461 = vand.u32 %v2530, 4294901760
        %3462 = vmatpush1.msra.mxu0 %v3461
        %v3463 = vand.u32 %v2533, 4294901760
        %3464 = vmatprep.subr.mxu0 %v3463
        %v3465 = vand.u32 %v2532, 4294901760
        %3466 = vmatpush1.msra.mxu0 %v3465
        %v3467 = vand.u32 %v2535, 4294901760
        %3468 = vmatprep.subr.mxu0 %v3467
        %v3469 = vand.u32 %v2534, 4294901760
        %3470 = vmatpush1.msra.mxu0 %v3469
        %v3471 = vand.u32 %v2537, 4294901760
        %3472 = vmatprep.subr.mxu0 %v3471
        %v3473 = vand.u32 %v2536, 4294901760
        %3474 = vmatpush1.msra.mxu0 %v3473
        %v3475 = vand.u32 %v2539, 4294901760
        %3476 = vmatprep.subr.mxu0 %v3475
        %v3477 = vand.u32 %v2538, 4294901760
        %3478 = vmatpush1.msra.mxu0 %v3477
        %v3479 = vand.u32 %v2541, 4294901760
        %3480 = vmatprep.subr.mxu0 %v3479
        %v3481 = vand.u32 %v2540, 4294901760
        %3482 = vmatpush1.msra.mxu0 %v3481
        %3483 = vmatprep.subr.mxu0 0.0
        %3484 = vmatpush1.msra.mxu0 0.0
        %3485 = vmatprep.subr.mxu0 0.0
        %3486 = vmatpush1.msra.mxu0 0.0
        %3487 = vmatprep.subr.mxu0 0.0
        %3488 = vmatpush1.msra.mxu0 0.0
        %3489 = vmatprep.subr.mxu0 0.0
        %3490 = vmatpush1.msra.mxu0 0.0
        %3491 = vmatprep.subr.mxu0 0.0
        %3492 = vmatpush1.msra.mxu0 0.0
        %3493 = vmatprep.subr.mxu0 0.0
        %3494 = vmatpush1.msra.mxu0 0.0
        %3495 = vmatprep.subr.mxu0 0.0
        %3496 = vmatpush1.msra.mxu0 0.0
        %3497 = vmatprep.subr.mxu0 0.0
        %3498 = vmatpush1.msra.mxu0 0.0
        %3499 = vmatprep.subr.mxu0 0.0
        %3500 = vmatpush1.msra.mxu0 0.0
        %3501 = vmatprep.subr.mxu0 0.0
        %3502 = vmatpush1.msra.mxu0 0.0
        %3503 = vmatprep.subr.mxu0 0.0
        %3504 = vmatpush1.msra.mxu0 0.0
        %3505 = vmatprep.subr.mxu0 0.0
        %3506 = vmatpush1.msra.mxu0 0.0
        %3507 = vmatprep.subr.mxu0 0.0
        %3508 = vmatpush1.msra.mxu0 0.0
        %3509 = vmatprep.subr.mxu0 0.0
        %3510 = vmatpush1.msra.mxu0 0.0
        %3511 = vmatprep.subr.mxu0 0.0
        %3512 = vmatpush1.msra.mxu0 0.0
        %3513 = vmatprep.subr.mxu0 0.0
        %3514 = vmatpush1.msra.mxu0 0.0
        %3515 = vmatprep.mubr.f32.mxu0 0.0
        %v3516 = vand.u32 %v2168, 4294901760
        %3517 = vmatmul.mubr.f32.gmra.mrb[0].mxu0 %v3516
        %v3518 = vpop.f32.mrb[0].mxu0
        %v3519 = vadd.f32 %v3394, %v3518
        %v3520 = vpop.f32.mrb[0].mxu0
        %v3521 = vadd.f32 %v3396, %v3520
        %3522 = vmatprep.mubr.f32.mxu0 0.0
        %v3523 = vand.u32 %v2271, 4294901760
        %3524 = vmatmul.mubr.f32.gmra.mrb[0].mxu0 %v3523
        %v3525 = vpop.f32.mrb[0].mxu0
        %v3526 = vadd.f32 %v3401, %v3525
        %v3527 = vpop.f32.mrb[0].mxu0
        %v3528 = vadd.f32 %v3403, %v3527
        %3529 = vmatprep.mubr.f32.mxu0 0.0
        %v3530 = vand.u32 %v2374, 4294901760
        %3531 = vmatmul.mubr.f32.gmra.mrb[0].mxu0 %v3530
        %v3532 = vpop.f32.mrb[0].mxu0
        %v3533 = vadd.f32 %v3408, %v3532
        %v3534 = vpop.f32.mrb[0].mxu0
        %v3535 = vadd.f32 %v3410, %v3534
        %3536 = vmatprep.mubr.f32.mxu0 0.0
        %v3537 = vand.u32 %v2477, 4294901760
        %3538 = vmatmul.mubr.f32.gmra.mrb[0].mxu0 %v3537
        %v3539 = vpop.f32.mrb[0].mxu0
        %v3540 = vadd.f32 %v3415, %v3539
        %v3541 = vpop.f32.mrb[0].mxu0
        %v3542 = vadd.f32 %v3417, %v3541
        %3543 = vdwg.mxu0
        %v3544 = vand.u32 %v2479, 4294901760
        %3545 = vmatprep.subr.mxu0 %v3544
        %v3546 = vand.u32 %v2478, 4294901760
        %3547 = vmatpush1.msra.mxu0 %v3546
        %v3548 = vand.u32 %v2481, 4294901760
        %3549 = vmatprep.subr.mxu0 %v3548
        %v3550 = vand.u32 %v2480, 4294901760
        %3551 = vmatpush1.msra.mxu0 %v3550
        %v3552 = vand.u32 %v2483, 4294901760
        %3553 = vmatprep.subr.mxu0 %v3552
        %v3554 = vand.u32 %v2482, 4294901760
        %3555 = vmatpush1.msra.mxu0 %v3554
        %v3556 = vand.u32 %v2485, 4294901760
        %3557 = vmatprep.subr.mxu0 %v3556
        %v3558 = vand.u32 %v2484, 4294901760
        %3559 = vmatpush1.msra.mxu0 %v3558
        %v3560 = vand.u32 %v2487, 4294901760
        %3561 = vmatprep.subr.mxu0 %v3560
        %v3562 = vand.u32 %v2486, 4294901760
        %3563 = vmatpush1.msra.mxu0 %v3562
        %v3564 = vand.u32 %v2489, 4294901760
        %3565 = vmatprep.subr.mxu0 %v3564
        %v3566 = vand.u32 %v2488, 4294901760
        %3567 = vmatpush1.msra.mxu0 %v3566
        %v3568 = vand.u32 %v2491, 4294901760
        %3569 = vmatprep.subr.mxu0 %v3568
        %v3570 = vand.u32 %v2490, 4294901760
        %3571 = vmatpush1.msra.mxu0 %v3570
        %v3572 = vand.u32 %v2493, 4294901760
        %3573 = vmatprep.subr.mxu0 %v3572
        %v3574 = vand.u32 %v2492, 4294901760
        %3575 = vmatpush1.msra.mxu0 %v3574
        %v3576 = vand.u32 %v2495, 4294901760
        %3577 = vmatprep.subr.mxu0 %v3576
        %v3578 = vand.u32 %v2494, 4294901760
        %3579 = vmatpush1.msra.mxu0 %v3578
        %v3580 = vand.u32 %v2497, 4294901760
        %3581 = vmatprep.subr.mxu0 %v3580
        %v3582 = vand.u32 %v2496, 4294901760
        %3583 = vmatpush1.msra.mxu0 %v3582
        %v3584 = vand.u32 %v2499, 4294901760
        %3585 = vmatprep.subr.mxu0 %v3584
        %v3586 = vand.u32 %v2498, 4294901760
        %3587 = vmatpush1.msra.mxu0 %v3586
        %v3588 = vand.u32 %v2501, 4294901760
        %3589 = vmatprep.subr.mxu0 %v3588
        %v3590 = vand.u32 %v2500, 4294901760
        %3591 = vmatpush1.msra.mxu0 %v3590
        %v3592 = vand.u32 %v2503, 4294901760
        %3593 = vmatprep.subr.mxu0 %v3592
        %v3594 = vand.u32 %v2502, 4294901760
        %3595 = vmatpush1.msra.mxu0 %v3594
        %v3596 = vand.u32 %v2505, 4294901760
        %3597 = vmatprep.subr.mxu0 %v3596
        %v3598 = vand.u32 %v2504, 4294901760
        %3599 = vmatpush1.msra.mxu0 %v3598
        %v3600 = vand.u32 %v2507, 4294901760
        %3601 = vmatprep.subr.mxu0 %v3600
        %v3602 = vand.u32 %v2506, 4294901760
        %3603 = vmatpush1.msra.mxu0 %v3602
        %v3604 = vand.u32 %v2509, 4294901760
        %3605 = vmatprep.subr.mxu0 %v3604
        %v3606 = vand.u32 %v2508, 4294901760
        %3607 = vmatpush1.msra.mxu0 %v3606
        %3608 = vmatprep.subr.mxu0 0.0
        %3609 = vmatpush1.msra.mxu0 0.0
        %3610 = vmatprep.subr.mxu0 0.0
        %3611 = vmatpush1.msra.mxu0 0.0
        %3612 = vmatprep.subr.mxu0 0.0
        %3613 = vmatpush1.msra.mxu0 0.0
        %3614 = vmatprep.subr.mxu0 0.0
        %3615 = vmatpush1.msra.mxu0 0.0
        %3616 = vmatprep.subr.mxu0 0.0
        %3617 = vmatpush1.msra.mxu0 0.0
        %3618 = vmatprep.subr.mxu0 0.0
        %3619 = vmatpush1.msra.mxu0 0.0
        %3620 = vmatprep.subr.mxu0 0.0
        %3621 = vmatpush1.msra.mxu0 0.0
        %3622 = vmatprep.subr.mxu0 0.0
        %3623 = vmatpush1.msra.mxu0 0.0
        %3624 = vmatprep.subr.mxu0 0.0
        %3625 = vmatpush1.msra.mxu0 0.0
        %3626 = vmatprep.subr.mxu0 0.0
        %3627 = vmatpush1.msra.mxu0 0.0
        %3628 = vmatprep.subr.mxu0 0.0
        %3629 = vmatpush1.msra.mxu0 0.0
        %3630 = vmatprep.subr.mxu0 0.0
        %3631 = vmatpush1.msra.mxu0 0.0
        %3632 = vmatprep.subr.mxu0 0.0
        %3633 = vmatpush1.msra.mxu0 0.0
        %3634 = vmatprep.subr.mxu0 0.0
        %3635 = vmatpush1.msra.mxu0 0.0
        %3636 = vmatprep.subr.mxu0 0.0
        %3637 = vmatpush1.msra.mxu0 0.0
        %3638 = vmatprep.subr.mxu0 0.0
        %3639 = vmatpush1.msra.mxu0 0.0
        %3640 = vmatprep.mubr.f32.mxu0 0.0
        %v3641 = vand.u32 %v2062, 4294901760
        %v3642 = vsub.f32 %v2062, %v3641
        %v3643 = vand.u32 %v3642, 4294901760
        %v3644 = vsub.f32 %v3642, %v3643
        %v3645 = vand.u32 %v3644, 4294901760
        %3646 = vmatmul.mubr.f32.gmra.mrb[0].mxu0 %v3645
        %v3647 = vpop.f32.mrb[0].mxu0
        %v3648 = vadd.f32 %v3519, %v3647
        %v3649 = vpop.f32.mrb[0].mxu0
        %v3650 = vadd.f32 %v3521, %v3649
        %3651 = vmatprep.mubr.f32.mxu0 0.0
        %v3652 = vand.u32 %v2063, 4294901760
        %v3653 = vsub.f32 %v2063, %v3652
        %v3654 = vand.u32 %v3653, 4294901760
        %v3655 = vsub.f32 %v3653, %v3654
        %v3656 = vand.u32 %v3655, 4294901760
        %3657 = vmatmul.mubr.f32.gmra.mrb[0].mxu0 %v3656
        %v3658 = vpop.f32.mrb[0].mxu0
        %v3659 = vadd.f32 %v3526, %v3658
        %v3660 = vpop.f32.mrb[0].mxu0
        %v3661 = vadd.f32 %v3528, %v3660
        %3662 = vmatprep.mubr.f32.mxu0 0.0
        %v3663 = vand.u32 %v2064, 4294901760
        %v3664 = vsub.f32 %v2064, %v3663
        %v3665 = vand.u32 %v3664, 4294901760
        %v3666 = vsub.f32 %v3664, %v3665
        %v3667 = vand.u32 %v3666, 4294901760
        %3668 = vmatmul.mubr.f32.gmra.mrb[0].mxu0 %v3667
        %v3669 = vpop.f32.mrb[0].mxu0
        %v3670 = vadd.f32 %v3533, %v3669
        %v3671 = vpop.f32.mrb[0].mxu0
        %v3672 = vadd.f32 %v3535, %v3671
        %3673 = vmatprep.mubr.f32.mxu0 0.0
        %v3674 = vand.u32 %v2065, 4294901760
        %v3675 = vsub.f32 %v2065, %v3674
        %v3676 = vand.u32 %v3675, 4294901760
        %v3677 = vsub.f32 %v3675, %v3676
        %v3678 = vand.u32 %v3677, 4294901760
        %3679 = vmatmul.mubr.f32.gmra.mrb[0].mxu0 %v3678
        %v3680 = vpop.f32.mrb[0].mxu0
        %v3681 = vadd.f32 %v3540, %v3680
        %v3682 = vpop.f32.mrb[0].mxu0
        %v3683 = vadd.f32 %v3542, %v3682
        %3684 = vdwg.mxu0
        %v3685 = vand.u32 %v2479, 4294901760
        %v3686 = vsub.f32 %v2479, %v3685
        %v3687 = vand.u32 %v3686, 4294901760
        %v3688 = vsub.f32 %v3686, %v3687
        %v3689 = vand.u32 %v3688, 4294901760
        %3690 = vmatprep.subr.mxu0 %v3689
        %v3691 = vand.u32 %v2478, 4294901760
        %v3692 = vsub.f32 %v2478, %v3691
        %v3693 = vand.u32 %v3692, 4294901760
        %v3694 = vsub.f32 %v3692, %v3693
        %v3695 = vand.u32 %v3694, 4294901760
        %3696 = vmatpush1.msra.mxu0 %v3695
        %v3697 = vand.u32 %v2481, 4294901760
        %v3698 = vsub.f32 %v2481, %v3697
        %v3699 = vand.u32 %v3698, 4294901760
        %v3700 = vsub.f32 %v3698, %v3699
        %v3701 = vand.u32 %v3700, 4294901760
        %3702 = vmatprep.subr.mxu0 %v3701
        %v3703 = vand.u32 %v2480, 4294901760
        %v3704 = vsub.f32 %v2480, %v3703
        %v3705 = vand.u32 %v3704, 4294901760
        %v3706 = vsub.f32 %v3704, %v3705
        %v3707 = vand.u32 %v3706, 4294901760
        %3708 = vmatpush1.msra.mxu0 %v3707
        %v3709 = vand.u32 %v2483, 4294901760
        %v3710 = vsub.f32 %v2483, %v3709
        %v3711 = vand.u32 %v3710, 4294901760
        %v3712 = vsub.f32 %v3710, %v3711
        %v3713 = vand.u32 %v3712, 4294901760
        %3714 = vmatprep.subr.mxu0 %v3713
        %v3715 = vand.u32 %v2482, 4294901760
        %v3716 = vsub.f32 %v2482, %v3715
        %v3717 = vand.u32 %v3716, 4294901760
        %v3718 = vsub.f32 %v3716, %v3717
        %v3719 = vand.u32 %v3718, 4294901760
        %3720 = vmatpush1.msra.mxu0 %v3719
        %v3721 = vand.u32 %v2485, 4294901760
        %v3722 = vsub.f32 %v2485, %v3721
        %v3723 = vand.u32 %v3722, 4294901760
        %v3724 = vsub.f32 %v3722, %v3723
        %v3725 = vand.u32 %v3724, 4294901760
        %3726 = vmatprep.subr.mxu0 %v3725
        %v3727 = vand.u32 %v2484, 4294901760
        %v3728 = vsub.f32 %v2484, %v3727
        %v3729 = vand.u32 %v3728, 4294901760
        %v3730 = vsub.f32 %v3728, %v3729
        %v3731 = vand.u32 %v3730, 4294901760
        %3732 = vmatpush1.msra.mxu0 %v3731
        %v3733 = vand.u32 %v2487, 4294901760
        %v3734 = vsub.f32 %v2487, %v3733
        %v3735 = vand.u32 %v3734, 4294901760
        %v3736 = vsub.f32 %v3734, %v3735
        %v3737 = vand.u32 %v3736, 4294901760
        %3738 = vmatprep.subr.mxu0 %v3737
        %v3739 = vand.u32 %v2486, 4294901760
        %v3740 = vsub.f32 %v2486, %v3739
        %v3741 = vand.u32 %v3740, 4294901760
        %v3742 = vsub.f32 %v3740, %v3741
        %v3743 = vand.u32 %v3742, 4294901760
        %3744 = vmatpush1.msra.mxu0 %v3743
        %v3745 = vand.u32 %v2489, 4294901760
        %v3746 = vsub.f32 %v2489, %v3745
        %v3747 = vand.u32 %v3746, 4294901760
        %v3748 = vsub.f32 %v3746, %v3747
        %v3749 = vand.u32 %v3748, 4294901760
        %3750 = vmatprep.subr.mxu0 %v3749
        %v3751 = vand.u32 %v2488, 4294901760
        %v3752 = vsub.f32 %v2488, %v3751
        %v3753 = vand.u32 %v3752, 4294901760
        %v3754 = vsub.f32 %v3752, %v3753
        %v3755 = vand.u32 %v3754, 4294901760
        %3756 = vmatpush1.msra.mxu0 %v3755
        %v3757 = vand.u32 %v2491, 4294901760
        %v3758 = vsub.f32 %v2491, %v3757
        %v3759 = vand.u32 %v3758, 4294901760
        %v3760 = vsub.f32 %v3758, %v3759
        %v3761 = vand.u32 %v3760, 4294901760
        %3762 = vmatprep.subr.mxu0 %v3761
        %v3763 = vand.u32 %v2490, 4294901760
        %v3764 = vsub.f32 %v2490, %v3763
        %v3765 = vand.u32 %v3764, 4294901760
        %v3766 = vsub.f32 %v3764, %v3765
        %v3767 = vand.u32 %v3766, 4294901760
        %3768 = vmatpush1.msra.mxu0 %v3767
        %v3769 = vand.u32 %v2493, 4294901760
        %v3770 = vsub.f32 %v2493, %v3769
        %v3771 = vand.u32 %v3770, 4294901760
        %v3772 = vsub.f32 %v3770, %v3771
        %v3773 = vand.u32 %v3772, 4294901760
        %3774 = vmatprep.subr.mxu0 %v3773
        %v3775 = vand.u32 %v2492, 4294901760
        %v3776 = vsub.f32 %v2492, %v3775
        %v3777 = vand.u32 %v3776, 4294901760
        %v3778 = vsub.f32 %v3776, %v3777
        %v3779 = vand.u32 %v3778, 4294901760
        %3780 = vmatpush1.msra.mxu0 %v3779
        %v3781 = vand.u32 %v2495, 4294901760
        %v3782 = vsub.f32 %v2495, %v3781
        %v3783 = vand.u32 %v3782, 4294901760
        %v3784 = vsub.f32 %v3782, %v3783
        %v3785 = vand.u32 %v3784, 4294901760
        %3786 = vmatprep.subr.mxu0 %v3785
        %v3787 = vand.u32 %v2494, 4294901760
        %v3788 = vsub.f32 %v2494, %v3787
        %v3789 = vand.u32 %v3788, 4294901760
        %v3790 = vsub.f32 %v3788, %v3789
        %v3791 = vand.u32 %v3790, 4294901760
        %3792 = vmatpush1.msra.mxu0 %v3791
        %v3793 = vand.u32 %v2497, 4294901760
        %v3794 = vsub.f32 %v2497, %v3793
        %v3795 = vand.u32 %v3794, 4294901760
        %v3796 = vsub.f32 %v3794, %v3795
        %v3797 = vand.u32 %v3796, 4294901760
        %3798 = vmatprep.subr.mxu0 %v3797
        %v3799 = vand.u32 %v2496, 4294901760
        %v3800 = vsub.f32 %v2496, %v3799
        %v3801 = vand.u32 %v3800, 4294901760
        %v3802 = vsub.f32 %v3800, %v3801
        %v3803 = vand.u32 %v3802, 4294901760
        %3804 = vmatpush1.msra.mxu0 %v3803
        %v3805 = vand.u32 %v2499, 4294901760
        %v3806 = vsub.f32 %v2499, %v3805
        %v3807 = vand.u32 %v3806, 4294901760
        %v3808 = vsub.f32 %v3806, %v3807
        %v3809 = vand.u32 %v3808, 4294901760
        %3810 = vmatprep.subr.mxu0 %v3809
        %v3811 = vand.u32 %v2498, 4294901760
        %v3812 = vsub.f32 %v2498, %v3811
        %v3813 = vand.u32 %v3812, 4294901760
        %v3814 = vsub.f32 %v3812, %v3813
        %v3815 = vand.u32 %v3814, 4294901760
        %3816 = vmatpush1.msra.mxu0 %v3815
        %v3817 = vand.u32 %v2501, 4294901760
        %v3818 = vsub.f32 %v2501, %v3817
        %v3819 = vand.u32 %v3818, 4294901760
        %v3820 = vsub.f32 %v3818, %v3819
        %v3821 = vand.u32 %v3820, 4294901760
        %3822 = vmatprep.subr.mxu0 %v3821
        %v3823 = vand.u32 %v2500, 4294901760
        %v3824 = vsub.f32 %v2500, %v3823
        %v3825 = vand.u32 %v3824, 4294901760
        %v3826 = vsub.f32 %v3824, %v3825
        %v3827 = vand.u32 %v3826, 4294901760
        %3828 = vmatpush1.msra.mxu0 %v3827
        %v3829 = vand.u32 %v2503, 4294901760
        %v3830 = vsub.f32 %v2503, %v3829
        %v3831 = vand.u32 %v3830, 4294901760
        %v3832 = vsub.f32 %v3830, %v3831
        %v3833 = vand.u32 %v3832, 4294901760
        %3834 = vmatprep.subr.mxu0 %v3833
        %v3835 = vand.u32 %v2502, 4294901760
        %v3836 = vsub.f32 %v2502, %v3835
        %v3837 = vand.u32 %v3836, 4294901760
        %v3838 = vsub.f32 %v3836, %v3837
        %v3839 = vand.u32 %v3838, 4294901760
        %3840 = vmatpush1.msra.mxu0 %v3839
        %v3841 = vand.u32 %v2505, 4294901760
        %v3842 = vsub.f32 %v2505, %v3841
        %v3843 = vand.u32 %v3842, 4294901760
        %v3844 = vsub.f32 %v3842, %v3843
        %v3845 = vand.u32 %v3844, 4294901760
        %3846 = vmatprep.subr.mxu0 %v3845
        %v3847 = vand.u32 %v2504, 4294901760
        %v3848 = vsub.f32 %v2504, %v3847
        %v3849 = vand.u32 %v3848, 4294901760
        %v3850 = vsub.f32 %v3848, %v3849
        %v3851 = vand.u32 %v3850, 4294901760
        %3852 = vmatpush1.msra.mxu0 %v3851
        %v3853 = vand.u32 %v2507, 4294901760
        %v3854 = vsub.f32 %v2507, %v3853
        %v3855 = vand.u32 %v3854, 4294901760
        %v3856 = vsub.f32 %v3854, %v3855
        %v3857 = vand.u32 %v3856, 4294901760
        %3858 = vmatprep.subr.mxu0 %v3857
        %v3859 = vand.u32 %v2506, 4294901760
        %v3860 = vsub.f32 %v2506, %v3859
        %v3861 = vand.u32 %v3860, 4294901760
        %v3862 = vsub.f32 %v3860, %v3861
        %v3863 = vand.u32 %v3862, 4294901760
        %3864 = vmatpush1.msra.mxu0 %v3863
        %v3865 = vand.u32 %v2509, 4294901760
        %v3866 = vsub.f32 %v2509, %v3865
        %v3867 = vand.u32 %v3866, 4294901760
        %v3868 = vsub.f32 %v3866, %v3867
        %v3869 = vand.u32 %v3868, 4294901760
        %3870 = vmatprep.subr.mxu0 %v3869
        %v3871 = vand.u32 %v2508, 4294901760
        %v3872 = vsub.f32 %v2508, %v3871
        %v3873 = vand.u32 %v3872, 4294901760
        %v3874 = vsub.f32 %v3872, %v3873
        %v3875 = vand.u32 %v3874, 4294901760
        %3876 = vmatpush1.msra.mxu0 %v3875
        %3877 = vmatprep.subr.mxu0 0.0
        %3878 = vmatpush1.msra.mxu0 0.0
        %3879 = vmatprep.subr.mxu0 0.0
        %3880 = vmatpush1.msra.mxu0 0.0
        %3881 = vmatprep.subr.mxu0 0.0
        %3882 = vmatpush1.msra.mxu0 0.0
        %3883 = vmatprep.subr.mxu0 0.0
        %3884 = vmatpush1.msra.mxu0 0.0
        %3885 = vmatprep.subr.mxu0 0.0
        %3886 = vmatpush1.msra.mxu0 0.0
        %3887 = vmatprep.subr.mxu0 0.0
        %3888 = vmatpush1.msra.mxu0 0.0
        %3889 = vmatprep.subr.mxu0 0.0
        %3890 = vmatpush1.msra.mxu0 0.0
        %3891 = vmatprep.subr.mxu0 0.0
        %3892 = vmatpush1.msra.mxu0 0.0
        %3893 = vmatprep.subr.mxu0 0.0
        %3894 = vmatpush1.msra.mxu0 0.0
        %3895 = vmatprep.subr.mxu0 0.0
        %3896 = vmatpush1.msra.mxu0 0.0
        %3897 = vmatprep.subr.mxu0 0.0
        %3898 = vmatpush1.msra.mxu0 0.0
        %3899 = vmatprep.subr.mxu0 0.0
        %3900 = vmatpush1.msra.mxu0 0.0
        %3901 = vmatprep.subr.mxu0 0.0
        %3902 = vmatpush1.msra.mxu0 0.0
        %3903 = vmatprep.subr.mxu0 0.0
        %3904 = vmatpush1.msra.mxu0 0.0
        %3905 = vmatprep.subr.mxu0 0.0
        %3906 = vmatpush1.msra.mxu0 0.0
        %3907 = vmatprep.subr.mxu0 0.0
        %3908 = vmatpush1.msra.mxu0 0.0
        %3909 = vmatprep.mubr.f32.mxu0 0.0
        %v3910 = vand.u32 %v2062, 4294901760
        %3911 = vmatmul.mubr.f32.gmra.mrb[0].mxu0 %v3910
        %v3912 = vpop.f32.mrb[0].mxu0
        %v3913 = vadd.f32 %v3648, %v3912
        %v3914 = vpop.f32.mrb[0].mxu0
        %v3915 = vadd.f32 %v3650, %v3914
        %3916 = vmatprep.mubr.f32.mxu0 0.0
        %v3917 = vand.u32 %v2063, 4294901760
        %3918 = vmatmul.mubr.f32.gmra.mrb[0].mxu0 %v3917
        %v3919 = vpop.f32.mrb[0].mxu0
        %v3920 = vadd.f32 %v3659, %v3919
        %v3921 = vpop.f32.mrb[0].mxu0
        %v3922 = vadd.f32 %v3661, %v3921
        %3923 = vmatprep.mubr.f32.mxu0 0.0
        %v3924 = vand.u32 %v2064, 4294901760
        %3925 = vmatmul.mubr.f32.gmra.mrb[0].mxu0 %v3924
        %v3926 = vpop.f32.mrb[0].mxu0
        %v3927 = vadd.f32 %v3670, %v3926
        %v3928 = vpop.f32.mrb[0].mxu0
        %v3929 = vadd.f32 %v3672, %v3928
        %3930 = vmatprep.mubr.f32.mxu0 0.0
        %v3931 = vand.u32 %v2065, 4294901760
        %3932 = vmatmul.mubr.f32.gmra.mrb[0].mxu0 %v3931
        %v3933 = vpop.f32.mrb[0].mxu0
        %v3934 = vadd.f32 %v3681, %v3933
        %v3935 = vpop.f32.mrb[0].mxu0
        %v3936 = vadd.f32 %v3683, %v3935
        %3937 = vdwg.mxu0
        %v3938 = vand.u32 %v2479, 4294901760
        %v3939 = vsub.f32 %v2479, %v3938
        %3940 = vmatprep.subr.mxu0 %v3939
        %v3941 = vand.u32 %v2478, 4294901760
        %v3942 = vsub.f32 %v2478, %v3941
        %3943 = vmatpush1.msra.mxu0 %v3942
        %v3944 = vand.u32 %v2481, 4294901760
        %v3945 = vsub.f32 %v2481, %v3944
        %3946 = vmatprep.subr.mxu0 %v3945
        %v3947 = vand.u32 %v2480, 4294901760
        %v3948 = vsub.f32 %v2480, %v3947
        %3949 = vmatpush1.msra.mxu0 %v3948
        %v3950 = vand.u32 %v2483, 4294901760
        %v3951 = vsub.f32 %v2483, %v3950
        %3952 = vmatprep.subr.mxu0 %v3951
        %v3953 = vand.u32 %v2482, 4294901760
        %v3954 = vsub.f32 %v2482, %v3953
        %3955 = vmatpush1.msra.mxu0 %v3954
        %v3956 = vand.u32 %v2485, 4294901760
        %v3957 = vsub.f32 %v2485, %v3956
        %3958 = vmatprep.subr.mxu0 %v3957
        %v3959 = vand.u32 %v2484, 4294901760
        %v3960 = vsub.f32 %v2484, %v3959
        %3961 = vmatpush1.msra.mxu0 %v3960
        %v3962 = vand.u32 %v2487, 4294901760
        %v3963 = vsub.f32 %v2487, %v3962
        %3964 = vmatprep.subr.mxu0 %v3963
        %v3965 = vand.u32 %v2486, 4294901760
        %v3966 = vsub.f32 %v2486, %v3965
        %3967 = vmatpush1.msra.mxu0 %v3966
        %v3968 = vand.u32 %v2489, 4294901760
        %v3969 = vsub.f32 %v2489, %v3968
        %3970 = vmatprep.subr.mxu0 %v3969
        %v3971 = vand.u32 %v2488, 4294901760
        %v3972 = vsub.f32 %v2488, %v3971
        %3973 = vmatpush1.msra.mxu0 %v3972
        %v3974 = vand.u32 %v2491, 4294901760
        %v3975 = vsub.f32 %v2491, %v3974
        %3976 = vmatprep.subr.mxu0 %v3975
        %v3977 = vand.u32 %v2490, 4294901760
        %v3978 = vsub.f32 %v2490, %v3977
        %3979 = vmatpush1.msra.mxu0 %v3978
        %v3980 = vand.u32 %v2493, 4294901760
        %v3981 = vsub.f32 %v2493, %v3980
        %3982 = vmatprep.subr.mxu0 %v3981
        %v3983 = vand.u32 %v2492, 4294901760
        %v3984 = vsub.f32 %v2492, %v3983
        %3985 = vmatpush1.msra.mxu0 %v3984
        %v3986 = vand.u32 %v2495, 4294901760
        %v3987 = vsub.f32 %v2495, %v3986
        %3988 = vmatprep.subr.mxu0 %v3987
        %v3989 = vand.u32 %v2494, 4294901760
        %v3990 = vsub.f32 %v2494, %v3989
        %3991 = vmatpush1.msra.mxu0 %v3990
        %v3992 = vand.u32 %v2497, 4294901760
        %v3993 = vsub.f32 %v2497, %v3992
        %3994 = vmatprep.subr.mxu0 %v3993
        %v3995 = vand.u32 %v2496, 4294901760
        %v3996 = vsub.f32 %v2496, %v3995
        %3997 = vmatpush1.msra.mxu0 %v3996
        %v3998 = vand.u32 %v2499, 4294901760
        %v3999 = vsub.f32 %v2499, %v3998
        %4000 = vmatprep.subr.mxu0 %v3999
        %v4001 = vand.u32 %v2498, 4294901760
        %v4002 = vsub.f32 %v2498, %v4001
        %4003 = vmatpush1.msra.mxu0 %v4002
        %v4004 = vand.u32 %v2501, 4294901760
        %v4005 = vsub.f32 %v2501, %v4004
        %4006 = vmatprep.subr.mxu0 %v4005
        %v4007 = vand.u32 %v2500, 4294901760
        %v4008 = vsub.f32 %v2500, %v4007
        %4009 = vmatpush1.msra.mxu0 %v4008
        %v4010 = vand.u32 %v2503, 4294901760
        %v4011 = vsub.f32 %v2503, %v4010
        %4012 = vmatprep.subr.mxu0 %v4011
        %v4013 = vand.u32 %v2502, 4294901760
        %v4014 = vsub.f32 %v2502, %v4013
        %4015 = vmatpush1.msra.mxu0 %v4014
        %v4016 = vand.u32 %v2505, 4294901760
        %v4017 = vsub.f32 %v2505, %v4016
        %4018 = vmatprep.subr.mxu0 %v4017
        %v4019 = vand.u32 %v2504, 4294901760
        %v4020 = vsub.f32 %v2504, %v4019
        %4021 = vmatpush1.msra.mxu0 %v4020
        %v4022 = vand.u32 %v2507, 4294901760
        %v4023 = vsub.f32 %v2507, %v4022
        %4024 = vmatprep.subr.mxu0 %v4023
        %v4025 = vand.u32 %v2506, 4294901760
        %v4026 = vsub.f32 %v2506, %v4025
        %4027 = vmatpush1.msra.mxu0 %v4026
        %v4028 = vand.u32 %v2509, 4294901760
        %v4029 = vsub.f32 %v2509, %v4028
        %4030 = vmatprep.subr.mxu0 %v4029
        %v4031 = vand.u32 %v2508, 4294901760
        %v4032 = vsub.f32 %v2508, %v4031
        %4033 = vmatpush1.msra.mxu0 %v4032
        %4034 = vmatprep.subr.mxu0 0.0
        %4035 = vmatpush1.msra.mxu0 0.0
        %4036 = vmatprep.subr.mxu0 0.0
        %4037 = vmatpush1.msra.mxu0 0.0
        %4038 = vmatprep.subr.mxu0 0.0
        %4039 = vmatpush1.msra.mxu0 0.0
        %4040 = vmatprep.subr.mxu0 0.0
        %4041 = vmatpush1.msra.mxu0 0.0
        %4042 = vmatprep.subr.mxu0 0.0
        %4043 = vmatpush1.msra.mxu0 0.0
        %4044 = vmatprep.subr.mxu0 0.0
        %4045 = vmatpush1.msra.mxu0 0.0
        %4046 = vmatprep.subr.mxu0 0.0
        %4047 = vmatpush1.msra.mxu0 0.0
        %4048 = vmatprep.subr.mxu0 0.0
        %4049 = vmatpush1.msra.mxu0 0.0
        %4050 = vmatprep.subr.mxu0 0.0
        %4051 = vmatpush1.msra.mxu0 0.0
        %4052 = vmatprep.subr.mxu0 0.0
        %4053 = vmatpush1.msra.mxu0 0.0
        %4054 = vmatprep.subr.mxu0 0.0
        %4055 = vmatpush1.msra.mxu0 0.0
        %4056 = vmatprep.subr.mxu0 0.0
        %4057 = vmatpush1.msra.mxu0 0.0
        %4058 = vmatprep.subr.mxu0 0.0
        %4059 = vmatpush1.msra.mxu0 0.0
        %4060 = vmatprep.subr.mxu0 0.0
        %4061 = vmatpush1.msra.mxu0 0.0
        %4062 = vmatprep.subr.mxu0 0.0
        %4063 = vmatpush1.msra.mxu0 0.0
        %4064 = vmatprep.subr.mxu0 0.0
        %4065 = vmatpush1.msra.mxu0 0.0
        %4066 = vmatprep.mubr.f32.mxu0 0.0
        %v4067 = vand.u32 %v2062, 4294901760
        %v4068 = vsub.f32 %v2062, %v4067
        %4069 = vmatmul.mubr.f32.gmra.mrb[0].mxu0 %v4068
        %v4070 = vpop.f32.mrb[0].mxu0
        %v4071 = vadd.f32 %v3913, %v4070
        %v4072 = vpop.f32.mrb[0].mxu0
        %v4073 = vadd.f32 %v3915, %v4072
        %4074 = vmatprep.mubr.f32.mxu0 0.0
        %v4075 = vand.u32 %v2063, 4294901760
        %v4076 = vsub.f32 %v2063, %v4075
        %4077 = vmatmul.mubr.f32.gmra.mrb[0].mxu0 %v4076
        %v4078 = vpop.f32.mrb[0].mxu0
        %v4079 = vadd.f32 %v3920, %v4078
        %v4080 = vpop.f32.mrb[0].mxu0
        %v4081 = vadd.f32 %v3922, %v4080
        %4082 = vmatprep.mubr.f32.mxu0 0.0
        %v4083 = vand.u32 %v2064, 4294901760
        %v4084 = vsub.f32 %v2064, %v4083
        %4085 = vmatmul.mubr.f32.gmra.mrb[0].mxu0 %v4084
        %v4086 = vpop.f32.mrb[0].mxu0
        %v4087 = vadd.f32 %v3927, %v4086
        %v4088 = vpop.f32.mrb[0].mxu0
        %v4089 = vadd.f32 %v3929, %v4088
        %4090 = vmatprep.mubr.f32.mxu0 0.0
        %v4091 = vand.u32 %v2065, 4294901760
        %v4092 = vsub.f32 %v2065, %v4091
        %4093 = vmatmul.mubr.f32.gmra.mrb[0].mxu0 %v4092
        %v4094 = vpop.f32.mrb[0].mxu0
        %v4095 = vadd.f32 %v3934, %v4094
        %v4096 = vpop.f32.mrb[0].mxu0
        %v4097 = vadd.f32 %v3936, %v4096
        %4098 = vdwg.mxu0
        %v4099 = vand.u32 %v2479, 4294901760
        %4100 = vmatprep.subr.mxu0 %v4099
        %v4101 = vand.u32 %v2478, 4294901760
        %4102 = vmatpush1.msra.mxu0 %v4101
        %v4103 = vand.u32 %v2481, 4294901760
        %4104 = vmatprep.subr.mxu0 %v4103
        %v4105 = vand.u32 %v2480, 4294901760
        %4106 = vmatpush1.msra.mxu0 %v4105
        %v4107 = vand.u32 %v2483, 4294901760
        %4108 = vmatprep.subr.mxu0 %v4107
        %v4109 = vand.u32 %v2482, 4294901760
        %4110 = vmatpush1.msra.mxu0 %v4109
        %v4111 = vand.u32 %v2485, 4294901760
        %4112 = vmatprep.subr.mxu0 %v4111
        %v4113 = vand.u32 %v2484, 4294901760
        %4114 = vmatpush1.msra.mxu0 %v4113
        %v4115 = vand.u32 %v2487, 4294901760
        %4116 = vmatprep.subr.mxu0 %v4115
        %v4117 = vand.u32 %v2486, 4294901760
        %4118 = vmatpush1.msra.mxu0 %v4117
        %v4119 = vand.u32 %v2489, 4294901760
        %4120 = vmatprep.subr.mxu0 %v4119
        %v4121 = vand.u32 %v2488, 4294901760
        %4122 = vmatpush1.msra.mxu0 %v4121
        %v4123 = vand.u32 %v2491, 4294901760
        %4124 = vmatprep.subr.mxu0 %v4123
        %v4125 = vand.u32 %v2490, 4294901760
        %4126 = vmatpush1.msra.mxu0 %v4125
        %v4127 = vand.u32 %v2493, 4294901760
        %4128 = vmatprep.subr.mxu0 %v4127
        %v4129 = vand.u32 %v2492, 4294901760
        %4130 = vmatpush1.msra.mxu0 %v4129
        %v4131 = vand.u32 %v2495, 4294901760
        %4132 = vmatprep.subr.mxu0 %v4131
        %v4133 = vand.u32 %v2494, 4294901760
        %4134 = vmatpush1.msra.mxu0 %v4133
        %v4135 = vand.u32 %v2497, 4294901760
        %4136 = vmatprep.subr.mxu0 %v4135
        %v4137 = vand.u32 %v2496, 4294901760
        %4138 = vmatpush1.msra.mxu0 %v4137
        %v4139 = vand.u32 %v2499, 4294901760
        %4140 = vmatprep.subr.mxu0 %v4139
        %v4141 = vand.u32 %v2498, 4294901760
        %4142 = vmatpush1.msra.mxu0 %v4141
        %v4143 = vand.u32 %v2501, 4294901760
        %4144 = vmatprep.subr.mxu0 %v4143
        %v4145 = vand.u32 %v2500, 4294901760
        %4146 = vmatpush1.msra.mxu0 %v4145
        %v4147 = vand.u32 %v2503, 4294901760
        %4148 = vmatprep.subr.mxu0 %v4147
        %v4149 = vand.u32 %v2502, 4294901760
        %4150 = vmatpush1.msra.mxu0 %v4149
        %v4151 = vand.u32 %v2505, 4294901760
        %4152 = vmatprep.subr.mxu0 %v4151
        %v4153 = vand.u32 %v2504, 4294901760
        %4154 = vmatpush1.msra.mxu0 %v4153
        %v4155 = vand.u32 %v2507, 4294901760
        %4156 = vmatprep.subr.mxu0 %v4155
        %v4157 = vand.u32 %v2506, 4294901760
        %4158 = vmatpush1.msra.mxu0 %v4157
        %v4159 = vand.u32 %v2509, 4294901760
        %4160 = vmatprep.subr.mxu0 %v4159
        %v4161 = vand.u32 %v2508, 4294901760
        %4162 = vmatpush1.msra.mxu0 %v4161
        %4163 = vmatprep.subr.mxu0 0.0
        %4164 = vmatpush1.msra.mxu0 0.0
        %4165 = vmatprep.subr.mxu0 0.0
        %4166 = vmatpush1.msra.mxu0 0.0
        %4167 = vmatprep.subr.mxu0 0.0
        %4168 = vmatpush1.msra.mxu0 0.0
        %4169 = vmatprep.subr.mxu0 0.0
        %4170 = vmatpush1.msra.mxu0 0.0
        %4171 = vmatprep.subr.mxu0 0.0
        %4172 = vmatpush1.msra.mxu0 0.0
        %4173 = vmatprep.subr.mxu0 0.0
        %4174 = vmatpush1.msra.mxu0 0.0
        %4175 = vmatprep.subr.mxu0 0.0
        %4176 = vmatpush1.msra.mxu0 0.0
        %4177 = vmatprep.subr.mxu0 0.0
        %4178 = vmatpush1.msra.mxu0 0.0
        %4179 = vmatprep.subr.mxu0 0.0
        %4180 = vmatpush1.msra.mxu0 0.0
        %4181 = vmatprep.subr.mxu0 0.0
        %4182 = vmatpush1.msra.mxu0 0.0
        %4183 = vmatprep.subr.mxu0 0.0
        %4184 = vmatpush1.msra.mxu0 0.0
        %4185 = vmatprep.subr.mxu0 0.0
        %4186 = vmatpush1.msra.mxu0 0.0
        %4187 = vmatprep.subr.mxu0 0.0
        %4188 = vmatpush1.msra.mxu0 0.0
        %4189 = vmatprep.subr.mxu0 0.0
        %4190 = vmatpush1.msra.mxu0 0.0
        %4191 = vmatprep.subr.mxu0 0.0
        %4192 = vmatpush1.msra.mxu0 0.0
        %4193 = vmatprep.subr.mxu0 0.0
        %4194 = vmatpush1.msra.mxu0 0.0
        %4195 = vmatprep.mubr.f32.mxu0 0.0
        %v4196 = vand.u32 %v2062, 4294901760
        %v4197 = vsub.f32 %v2062, %v4196
        %v4198 = vand.u32 %v4197, 4294901760
        %4199 = vmatmul.mubr.f32.gmra.mrb[0].mxu0 %v4198
        %v4200 = vpop.f32.mrb[0].mxu0
        %v4201 = vadd.f32 %v4071, %v4200
        %v4202 = vpop.f32.mrb[0].mxu0
        %v4203 = vadd.f32 %v4073, %v4202
        %4204 = vmatprep.mubr.f32.mxu0 0.0
        %v4205 = vand.u32 %v2063, 4294901760
        %v4206 = vsub.f32 %v2063, %v4205
        %v4207 = vand.u32 %v4206, 4294901760
        %4208 = vmatmul.mubr.f32.gmra.mrb[0].mxu0 %v4207
        %v4209 = vpop.f32.mrb[0].mxu0
        %v4210 = vadd.f32 %v4079, %v4209
        %v4211 = vpop.f32.mrb[0].mxu0
        %v4212 = vadd.f32 %v4081, %v4211
        %4213 = vmatprep.mubr.f32.mxu0 0.0
        %v4214 = vand.u32 %v2064, 4294901760
        %v4215 = vsub.f32 %v2064, %v4214
        %v4216 = vand.u32 %v4215, 4294901760
        %4217 = vmatmul.mubr.f32.gmra.mrb[0].mxu0 %v4216
        %v4218 = vpop.f32.mrb[0].mxu0
        %v4219 = vadd.f32 %v4087, %v4218
        %v4220 = vpop.f32.mrb[0].mxu0
        %v4221 = vadd.f32 %v4089, %v4220
        %4222 = vmatprep.mubr.f32.mxu0 0.0
        %v4223 = vand.u32 %v2065, 4294901760
        %v4224 = vsub.f32 %v2065, %v4223
        %v4225 = vand.u32 %v4224, 4294901760
        %4226 = vmatmul.mubr.f32.gmra.mrb[0].mxu0 %v4225
        %v4227 = vpop.f32.mrb[0].mxu0
        %v4228 = vadd.f32 %v4095, %v4227
        %v4229 = vpop.f32.mrb[0].mxu0
        %v4230 = vadd.f32 %v4097, %v4229
        %4231 = vdwg.mxu0
        %v4232 = vand.u32 %v2479, 4294901760
        %v4233 = vsub.f32 %v2479, %v4232
        %v4234 = vand.u32 %v4233, 4294901760
        %4235 = vmatprep.subr.mxu0 %v4234
        %v4236 = vand.u32 %v2478, 4294901760
        %v4237 = vsub.f32 %v2478, %v4236
        %v4238 = vand.u32 %v4237, 4294901760
        %4239 = vmatpush1.msra.mxu0 %v4238
        %v4240 = vand.u32 %v2481, 4294901760
        %v4241 = vsub.f32 %v2481, %v4240
        %v4242 = vand.u32 %v4241, 4294901760
        %4243 = vmatprep.subr.mxu0 %v4242
        %v4244 = vand.u32 %v2480, 4294901760
        %v4245 = vsub.f32 %v2480, %v4244
        %v4246 = vand.u32 %v4245, 4294901760
        %4247 = vmatpush1.msra.mxu0 %v4246
        %v4248 = vand.u32 %v2483, 4294901760
        %v4249 = vsub.f32 %v2483, %v4248
        %v4250 = vand.u32 %v4249, 4294901760
        %4251 = vmatprep.subr.mxu0 %v4250
        %v4252 = vand.u32 %v2482, 4294901760
        %v4253 = vsub.f32 %v2482, %v4252
        %v4254 = vand.u32 %v4253, 4294901760
        %4255 = vmatpush1.msra.mxu0 %v4254
        %v4256 = vand.u32 %v2485, 4294901760
        %v4257 = vsub.f32 %v2485, %v4256
        %v4258 = vand.u32 %v4257, 4294901760
        %4259 = vmatprep.subr.mxu0 %v4258
        %v4260 = vand.u32 %v2484, 4294901760
        %v4261 = vsub.f32 %v2484, %v4260
        %v4262 = vand.u32 %v4261, 4294901760
        %4263 = vmatpush1.msra.mxu0 %v4262
        %v4264 = vand.u32 %v2487, 4294901760
        %v4265 = vsub.f32 %v2487, %v4264
        %v4266 = vand.u32 %v4265, 4294901760
        %4267 = vmatprep.subr.mxu0 %v4266
        %v4268 = vand.u32 %v2486, 4294901760
        %v4269 = vsub.f32 %v2486, %v4268
        %v4270 = vand.u32 %v4269, 4294901760
        %4271 = vmatpush1.msra.mxu0 %v4270
        %v4272 = vand.u32 %v2489, 4294901760
        %v4273 = vsub.f32 %v2489, %v4272
        %v4274 = vand.u32 %v4273, 4294901760
        %4275 = vmatprep.subr.mxu0 %v4274
        %v4276 = vand.u32 %v2488, 4294901760
        %v4277 = vsub.f32 %v2488, %v4276
        %v4278 = vand.u32 %v4277, 4294901760
        %4279 = vmatpush1.msra.mxu0 %v4278
        %v4280 = vand.u32 %v2491, 4294901760
        %v4281 = vsub.f32 %v2491, %v4280
        %v4282 = vand.u32 %v4281, 4294901760
        %4283 = vmatprep.subr.mxu0 %v4282
        %v4284 = vand.u32 %v2490, 4294901760
        %v4285 = vsub.f32 %v2490, %v4284
        %v4286 = vand.u32 %v4285, 4294901760
        %4287 = vmatpush1.msra.mxu0 %v4286
        %v4288 = vand.u32 %v2493, 4294901760
        %v4289 = vsub.f32 %v2493, %v4288
        %v4290 = vand.u32 %v4289, 4294901760
        %4291 = vmatprep.subr.mxu0 %v4290
        %v4292 = vand.u32 %v2492, 4294901760
        %v4293 = vsub.f32 %v2492, %v4292
        %v4294 = vand.u32 %v4293, 4294901760
        %4295 = vmatpush1.msra.mxu0 %v4294
        %v4296 = vand.u32 %v2495, 4294901760
        %v4297 = vsub.f32 %v2495, %v4296
        %v4298 = vand.u32 %v4297, 4294901760
        %4299 = vmatprep.subr.mxu0 %v4298
        %v4300 = vand.u32 %v2494, 4294901760
        %v4301 = vsub.f32 %v2494, %v4300
        %v4302 = vand.u32 %v4301, 4294901760
        %4303 = vmatpush1.msra.mxu0 %v4302
        %v4304 = vand.u32 %v2497, 4294901760
        %v4305 = vsub.f32 %v2497, %v4304
        %v4306 = vand.u32 %v4305, 4294901760
        %4307 = vmatprep.subr.mxu0 %v4306
        %v4308 = vand.u32 %v2496, 4294901760
        %v4309 = vsub.f32 %v2496, %v4308
        %v4310 = vand.u32 %v4309, 4294901760
        %4311 = vmatpush1.msra.mxu0 %v4310
        %v4312 = vand.u32 %v2499, 4294901760
        %v4313 = vsub.f32 %v2499, %v4312
        %v4314 = vand.u32 %v4313, 4294901760
        %4315 = vmatprep.subr.mxu0 %v4314
        %v4316 = vand.u32 %v2498, 4294901760
        %v4317 = vsub.f32 %v2498, %v4316
        %v4318 = vand.u32 %v4317, 4294901760
        %4319 = vmatpush1.msra.mxu0 %v4318
        %v4320 = vand.u32 %v2501, 4294901760
        %v4321 = vsub.f32 %v2501, %v4320
        %v4322 = vand.u32 %v4321, 4294901760
        %4323 = vmatprep.subr.mxu0 %v4322
        %v4324 = vand.u32 %v2500, 4294901760
        %v4325 = vsub.f32 %v2500, %v4324
        %v4326 = vand.u32 %v4325, 4294901760
        %4327 = vmatpush1.msra.mxu0 %v4326
        %v4328 = vand.u32 %v2503, 4294901760
        %v4329 = vsub.f32 %v2503, %v4328
        %v4330 = vand.u32 %v4329, 4294901760
        %4331 = vmatprep.subr.mxu0 %v4330
        %v4332 = vand.u32 %v2502, 4294901760
        %v4333 = vsub.f32 %v2502, %v4332
        %v4334 = vand.u32 %v4333, 4294901760
        %4335 = vmatpush1.msra.mxu0 %v4334
        %v4336 = vand.u32 %v2505, 4294901760
        %v4337 = vsub.f32 %v2505, %v4336
        %v4338 = vand.u32 %v4337, 4294901760
        %4339 = vmatprep.subr.mxu0 %v4338
        %v4340 = vand.u32 %v2504, 4294901760
        %v4341 = vsub.f32 %v2504, %v4340
        %v4342 = vand.u32 %v4341, 4294901760
        %4343 = vmatpush1.msra.mxu0 %v4342
        %v4344 = vand.u32 %v2507, 4294901760
        %v4345 = vsub.f32 %v2507, %v4344
        %v4346 = vand.u32 %v4345, 4294901760
        %4347 = vmatprep.subr.mxu0 %v4346
        %v4348 = vand.u32 %v2506, 4294901760
        %v4349 = vsub.f32 %v2506, %v4348
        %v4350 = vand.u32 %v4349, 4294901760
        %4351 = vmatpush1.msra.mxu0 %v4350
        %v4352 = vand.u32 %v2509, 4294901760
        %v4353 = vsub.f32 %v2509, %v4352
        %v4354 = vand.u32 %v4353, 4294901760
        %4355 = vmatprep.subr.mxu0 %v4354
        %v4356 = vand.u32 %v2508, 4294901760
        %v4357 = vsub.f32 %v2508, %v4356
        %v4358 = vand.u32 %v4357, 4294901760
        %4359 = vmatpush1.msra.mxu0 %v4358
        %4360 = vmatprep.subr.mxu0 0.0
        %4361 = vmatpush1.msra.mxu0 0.0
        %4362 = vmatprep.subr.mxu0 0.0
        %4363 = vmatpush1.msra.mxu0 0.0
        %4364 = vmatprep.subr.mxu0 0.0
        %4365 = vmatpush1.msra.mxu0 0.0
        %4366 = vmatprep.subr.mxu0 0.0
        %4367 = vmatpush1.msra.mxu0 0.0
        %4368 = vmatprep.subr.mxu0 0.0
        %4369 = vmatpush1.msra.mxu0 0.0
        %4370 = vmatprep.subr.mxu0 0.0
        %4371 = vmatpush1.msra.mxu0 0.0
        %4372 = vmatprep.subr.mxu0 0.0
        %4373 = vmatpush1.msra.mxu0 0.0
        %4374 = vmatprep.subr.mxu0 0.0
        %4375 = vmatpush1.msra.mxu0 0.0
        %4376 = vmatprep.subr.mxu0 0.0
        %4377 = vmatpush1.msra.mxu0 0.0
        %4378 = vmatprep.subr.mxu0 0.0
        %4379 = vmatpush1.msra.mxu0 0.0
        %4380 = vmatprep.subr.mxu0 0.0
        %4381 = vmatpush1.msra.mxu0 0.0
        %4382 = vmatprep.subr.mxu0 0.0
        %4383 = vmatpush1.msra.mxu0 0.0
        %4384 = vmatprep.subr.mxu0 0.0
        %4385 = vmatpush1.msra.mxu0 0.0
        %4386 = vmatprep.subr.mxu0 0.0
        %4387 = vmatpush1.msra.mxu0 0.0
        %4388 = vmatprep.subr.mxu0 0.0
        %4389 = vmatpush1.msra.mxu0 0.0
        %4390 = vmatprep.subr.mxu0 0.0
        %4391 = vmatpush1.msra.mxu0 0.0
        %4392 = vmatprep.mubr.f32.mxu0 0.0
        %v4393 = vand.u32 %v2062, 4294901760
        %4394 = vmatmul.mubr.f32.gmra.mrb[0].mxu0 %v4393
        %v4395 = vpop.f32.mrb[0].mxu0
        %v4396 = vadd.f32 %v4201, %v4395
        %v4397 = vpop.f32.mrb[0].mxu0
        %v4398 = vadd.f32 %v4203, %v4397
        %4399 = vmatprep.mubr.f32.mxu0 0.0
        %v4400 = vand.u32 %v2063, 4294901760
        %4401 = vmatmul.mubr.f32.gmra.mrb[0].mxu0 %v4400
        %v4402 = vpop.f32.mrb[0].mxu0
        %v4403 = vadd.f32 %v4210, %v4402
        %v4404 = vpop.f32.mrb[0].mxu0
        %v4405 = vadd.f32 %v4212, %v4404
        %4406 = vmatprep.mubr.f32.mxu0 0.0
        %v4407 = vand.u32 %v2064, 4294901760
        %4408 = vmatmul.mubr.f32.gmra.mrb[0].mxu0 %v4407
        %v4409 = vpop.f32.mrb[0].mxu0
        %v4410 = vadd.f32 %v4219, %v4409
        %v4411 = vpop.f32.mrb[0].mxu0
        %v4412 = vadd.f32 %v4221, %v4411
        %4413 = vmatprep.mubr.f32.mxu0 0.0
        %v4414 = vand.u32 %v2065, 4294901760
        %4415 = vmatmul.mubr.f32.gmra.mrb[0].mxu0 %v4414
        %v4416 = vpop.f32.mrb[0].mxu0
        %v4417 = vadd.f32 %v4228, %v4416
        %v4418 = vpop.f32.mrb[0].mxu0
        %v4419 = vadd.f32 %v4230, %v4418
        %4420 = vdwg.mxu0
        %v4421 = vand.u32 %v2479, 4294901760
        %4422 = vmatprep.subr.mxu0 %v4421
        %v4423 = vand.u32 %v2478, 4294901760
        %4424 = vmatpush1.msra.mxu0 %v4423
        %v4425 = vand.u32 %v2481, 4294901760
        %4426 = vmatprep.subr.mxu0 %v4425
        %v4427 = vand.u32 %v2480, 4294901760
        %4428 = vmatpush1.msra.mxu0 %v4427
        %v4429 = vand.u32 %v2483, 4294901760
        %4430 = vmatprep.subr.mxu0 %v4429
        %v4431 = vand.u32 %v2482, 4294901760
        %4432 = vmatpush1.msra.mxu0 %v4431
        %v4433 = vand.u32 %v2485, 4294901760
        %4434 = vmatprep.subr.mxu0 %v4433
        %v4435 = vand.u32 %v2484, 4294901760
        %4436 = vmatpush1.msra.mxu0 %v4435
        %v4437 = vand.u32 %v2487, 4294901760
        %4438 = vmatprep.subr.mxu0 %v4437
        %v4439 = vand.u32 %v2486, 4294901760
        %4440 = vmatpush1.msra.mxu0 %v4439
        %v4441 = vand.u32 %v2489, 4294901760
        %4442 = vmatprep.subr.mxu0 %v4441
        %v4443 = vand.u32 %v2488, 4294901760
        %4444 = vmatpush1.msra.mxu0 %v4443
        %v4445 = vand.u32 %v2491, 4294901760
        %4446 = vmatprep.subr.mxu0 %v4445
        %v4447 = vand.u32 %v2490, 4294901760
        %4448 = vmatpush1.msra.mxu0 %v4447
        %v4449 = vand.u32 %v2493, 4294901760
        %4450 = vmatprep.subr.mxu0 %v4449
        %v4451 = vand.u32 %v2492, 4294901760
        %4452 = vmatpush1.msra.mxu0 %v4451
        %v4453 = vand.u32 %v2495, 4294901760
        %4454 = vmatprep.subr.mxu0 %v4453
        %v4455 = vand.u32 %v2494, 4294901760
        %4456 = vmatpush1.msra.mxu0 %v4455
        %v4457 = vand.u32 %v2497, 4294901760
        %4458 = vmatprep.subr.mxu0 %v4457
        %v4459 = vand.u32 %v2496, 4294901760
        %4460 = vmatpush1.msra.mxu0 %v4459
        %v4461 = vand.u32 %v2499, 4294901760
        %4462 = vmatprep.subr.mxu0 %v4461
        %v4463 = vand.u32 %v2498, 4294901760
        %4464 = vmatpush1.msra.mxu0 %v4463
        %v4465 = vand.u32 %v2501, 4294901760
        %4466 = vmatprep.subr.mxu0 %v4465
        %v4467 = vand.u32 %v2500, 4294901760
        %4468 = vmatpush1.msra.mxu0 %v4467
        %v4469 = vand.u32 %v2503, 4294901760
        %4470 = vmatprep.subr.mxu0 %v4469
        %v4471 = vand.u32 %v2502, 4294901760
        %4472 = vmatpush1.msra.mxu0 %v4471
        %v4473 = vand.u32 %v2505, 4294901760
        %4474 = vmatprep.subr.mxu0 %v4473
        %v4475 = vand.u32 %v2504, 4294901760
        %4476 = vmatpush1.msra.mxu0 %v4475
        %v4477 = vand.u32 %v2507, 4294901760
        %4478 = vmatprep.subr.mxu0 %v4477
        %v4479 = vand.u32 %v2506, 4294901760
        %4480 = vmatpush1.msra.mxu0 %v4479
        %v4481 = vand.u32 %v2509, 4294901760
        %4482 = vmatprep.subr.mxu0 %v4481
        %v4483 = vand.u32 %v2508, 4294901760
        %4484 = vmatpush1.msra.mxu0 %v4483
        %4485 = vmatprep.subr.mxu0 0.0
        %4486 = vmatpush1.msra.mxu0 0.0
        %4487 = vmatprep.subr.mxu0 0.0
        %4488 = vmatpush1.msra.mxu0 0.0
        %4489 = vmatprep.subr.mxu0 0.0
        %4490 = vmatpush1.msra.mxu0 0.0
        %4491 = vmatprep.subr.mxu0 0.0
        %4492 = vmatpush1.msra.mxu0 0.0
        %4493 = vmatprep.subr.mxu0 0.0
        %4494 = vmatpush1.msra.mxu0 0.0
        %4495 = vmatprep.subr.mxu0 0.0
        %4496 = vmatpush1.msra.mxu0 0.0
        %4497 = vmatprep.subr.mxu0 0.0
        %4498 = vmatpush1.msra.mxu0 0.0
        %4499 = vmatprep.subr.mxu0 0.0
        %4500 = vmatpush1.msra.mxu0 0.0
        %4501 = vmatprep.subr.mxu0 0.0
        %4502 = vmatpush1.msra.mxu0 0.0
        %4503 = vmatprep.subr.mxu0 0.0
        %4504 = vmatpush1.msra.mxu0 0.0
        %4505 = vmatprep.subr.mxu0 0.0
        %4506 = vmatpush1.msra.mxu0 0.0
        %4507 = vmatprep.subr.mxu0 0.0
        %4508 = vmatpush1.msra.mxu0 0.0
        %4509 = vmatprep.subr.mxu0 0.0
        %4510 = vmatpush1.msra.mxu0 0.0
        %4511 = vmatprep.subr.mxu0 0.0
        %4512 = vmatpush1.msra.mxu0 0.0
        %4513 = vmatprep.subr.mxu0 0.0
        %4514 = vmatpush1.msra.mxu0 0.0
        %4515 = vmatprep.subr.mxu0 0.0
        %4516 = vmatpush1.msra.mxu0 0.0
        %4517 = vmatprep.mubr.f32.mxu0 0.0
        %v4518 = vand.u32 %v2062, 4294901760
        %4519 = vmatmul.mubr.f32.gmra.mrb[0].mxu0 %v4518
        %v4520 = vpop.f32.mrb[0].mxu0
        %v4521 = vadd.f32 %v4396, %v4520
        %v4522 = vpop.f32.mrb[0].mxu0
        %v4523 = vadd.f32 %v4398, %v4522
        %4524 = vmatprep.mubr.f32.mxu0 0.0
        %v4525 = vand.u32 %v2063, 4294901760
        %4526 = vmatmul.mubr.f32.gmra.mrb[0].mxu0 %v4525
        %v4527 = vpop.f32.mrb[0].mxu0
        %v4528 = vadd.f32 %v4403, %v4527
        %v4529 = vpop.f32.mrb[0].mxu0
        %v4530 = vadd.f32 %v4405, %v4529
        %4531 = vmatprep.mubr.f32.mxu0 0.0
        %v4532 = vand.u32 %v2064, 4294901760
        %4533 = vmatmul.mubr.f32.gmra.mrb[0].mxu0 %v4532
        %v4534 = vpop.f32.mrb[0].mxu0
        %v4535 = vadd.f32 %v4410, %v4534
        %v4536 = vpop.f32.mrb[0].mxu0
        %v4537 = vadd.f32 %v4412, %v4536
        %4538 = vmatprep.mubr.f32.mxu0 0.0
        %v4539 = vand.u32 %v2065, 4294901760
        %4540 = vmatmul.mubr.f32.gmra.mrb[0].mxu0 %v4539
        %v4541 = vpop.f32.mrb[0].mxu0
        %v4542 = vadd.f32 %v4417, %v4541
        %v4543 = vpop.f32.mrb[0].mxu0
        %v4544 = vadd.f32 %v4419, %v4543
        %4545 = vdwg.mxu0
        %v4546 = vld [vmem:[%s7] sm:$0x3]
        %v4548 = vlaneseq
        %v4549 = vshrl.u32 %v4548, 7
        %v4550 = vsub.s32 0, %v4549
        %v4551 = vrot.slane %v4546, %v4550
        %v4552 = vlaneseq
        %v4553 = vshrl.u32 %v4552, 7
        %v4554 = vsub.s32 1, %v4553
        %v4555 = vrot.slane %v4546, %v4554
        %v4558 = vadd.f32 %v4521, %v4551
        %v4559 = vadd.f32 %v4523, %v4555
        %v4560 = vadd.f32 %v4528, %v4551
        %v4561 = vadd.f32 %v4530, %v4555
        %v4562 = vadd.f32 %v4535, %v4551
        %v4563 = vadd.f32 %v4537, %v4555
        %v4564 = vadd.f32 %v4542, %v4551
        %v4565 = vadd.f32 %v4544, %v4555
        %v4566 = vmul.f32 %v4558, 0.5
        %v4567 = vmul.f32 %v4560, 0.5
        %v4568 = vmul.f32 %v4562, 0.5
        %v4569 = vmul.f32 %v4564, 0.5
        %v4570 = vmul.f32 %v4558, 0.70710677
        %v4571 = vmul.f32 %v4560, 0.70710677
        %v4572 = vmul.f32 %v4562, 0.70710677
        %v4573 = vmul.f32 %v4564, 0.70710677
        %v4574 = verf.f32.pop %v4570
        %v4575 = verf.f32.pop %v4571
        %v4576 = verf.f32.pop %v4572
        %v4577 = verf.f32.pop %v4573
        %v4578 = vadd.f32 %v4574, 1.0
        %v4579 = vadd.f32 %v4575, 1.0
        %v4580 = vadd.f32 %v4576, 1.0
        %v4581 = vadd.f32 %v4577, 1.0
        %v4582 = vmul.f32 %v4566, %v4578
        %v4583 = vmul.f32 %v4567, %v4579
        %v4584 = vmul.f32 %v4568, %v4580
        %v4585 = vmul.f32 %v4569, %v4581
        %v4586 = vand.u32 2147483647, %v4559
        %vm4587 = vcmp.le.f32.partialorder %v4586, 0.7853982
        %vm4588 = vcmp.lt.s32.totalorder %v4559, 0
        %v4589 = vand.u32 %v4559, 2139095040
        %v4590 = vshrl.u32 %v4589, 23
        %v4591 = vsub.s32 %v4590, 127
        %v4592 = vand.u32 2147483647, %v4559
        %v4593 = vand.u32 %v4592, 8388607
        %v4594 = vor.u32 %v4593, 8388608
        %v4595 = vsub.s32 0, %v4594
        %v4596 = vadd.s32 %v4591, 1
        %vm4597 = vcmp.gt.s32.totalorder %v4596, 0
        %v4598 = vsel %vm4597, %v4596, 0
        %v4599 = vshrl.u32 %v4598, 5
        %v4600 = vand.u32 %v4598, 31
        %v4601 = vsub.s32 32, %v4600
        %v4602 = vshrl.u32 683565275, %v4601
        %v4603 = vshll.u32 683565275, %v4600
        %v4604 = vshrl.u32 2475754826, %v4601
        %v4605 = vor.u32 %v4603, %v4604
        %v4606 = vshll.u32 2475754826, %v4600
        %v4607 = vshrl.u32 2131351028, %v4601
        %v4608 = vor.u32 %v4606, %v4607
        %v4609 = vshll.u32 2131351028, %v4600
        %v4610 = vshrl.u32 2102212464, %v4601
        %v4611 = vor.u32 %v4609, %v4610
        %v4612 = vshll.u32 2102212464, %v4600
        %v4613 = vshrl.u32 920167782, %v4601
        %v4614 = vor.u32 %v4612, %v4613
        %v4615 = vshll.u32 920167782, %v4600
        %v4616 = vshrl.u32 1326507024, %v4601
        %v4617 = vor.u32 %v4615, %v4616
        %vm4618 = vcmp.lt.s32.totalorder %v4599, 1
        %vm4619 = vcmp.lt.s32.totalorder %v4599, 2
        %vm4620 = vcmp.lt.s32.totalorder %v4599, 3
        %vm4621 = vcmp.lt.s32.totalorder %v4599, 4
        %v4622 = vsel %vm4618, %v4602, %v4605
        %v4623 = vsel %vm4621, %v4611, 2102212464
        %v4624 = vsel %vm4620, %v4608, %v4623
        %v4625 = vsel %vm4619, %v4622, %v4624
        %v4626 = vsel %vm4618, %v4605, %v4608
        %v4627 = vsel %vm4621, %v4614, 920167782
        %v4628 = vsel %vm4620, %v4611, %v4627
        %v4629 = vsel %vm4619, %v4626, %v4628
        %v4630 = vsel %vm4618, %v4608, %v4611
        %v4631 = vsel %vm4621, %v4617, 1326507024
        %v4632 = vsel %vm4620, %v4614, %v4631
        %v4633 = vsel %vm4619, %v4630, %v4632
        %v4634 = vshll.u32 %v4594, 8
        %v4635 = vmul.u32.u64.compose %v4634, %v4633
        %v4636 = vextract.low.u32 %v4635
        %v4637 = vextract.high.u32 %v4635
        %v4638 = vmul.u32.u64.compose %v4634, %v4629
        %v4639 = vextract.low.u32 %v4638
        %v4640 = vextract.high.u32 %v4638
        %v4641 = vmul.u32 %v4634, %v4625
        %v4642 = vadd.s32 %v4637, %v4639
        %vm4643 = vc.u32 %v4637, %v4639
        %v4644 = vadd.s32 %v4640, 1
        %v4645 = vsel %vm4643, %v4644, %v4640
        %v4646 = vadd.s32 %v4641, %v4645
        %v4647 = vadd.s32 %v4646, 536870912
        %v4648 = vshrl.u32 %v4647, 30
        %v4649 = vshll.u32 %v4648, 30
        %v4650 = vsub.s32 %v4646, %v4649
        %vm4651 = vcmp.lt.s32.totalorder %v4650, 0
        %v4652 = vsub.s32 0, %v4650
        %v4653 = vsel %vm4651, %v4652, %v4650
        %v4654 = vclz %v4653
        %v4655 = vsub.s32 %v4654, 2
        %vm4656 = vcmp.gt.s32.totalorder 0, %v4655
        %v4657 = vsel %vm4656, 0, %v4655
        %v4658 = vsub.s32 32, %v4657
        %v4659 = vshll.u32 %v4650, %v4657
        %v4660 = vshrl.u32 %v4642, %v4658
        %v4661 = vor.u32 %v4659, %v4660
        %v4662 = vsub.s32 4294967266, %v4657
        %v4663 = vadd.s32 %v4662, 127
        %v4664 = vshll.u32 %v4663, 23
        %v4665 = vor.u32 4788187, %v4664
        %v4666 = vand.u32 2147483647, %v4665
        %v4668 = vcvt.s32.f32 %v4661
        %v4669 = vmul.f32 %v4668, %v4666
        %v4670 = vxor.u32 %v4669, 2147483648
        %v4671 = vsel %vm4588, %v4670, %v4669
        %v4672 = vsub.s32 4, %v4648
        %v4673 = vsel %vm4588, %v4672, %v4648
        %v4674 = vsel %vm4587, %v4559, %v4671
        %v4675 = vsel %vm4587, 0, %v4673
        %v4676 = vcosq.f32.pop %v4674
        %v4677 = vsinq.f32.pop %v4674
        %vm4678 = vweird.f32 %v4559
        %v4679 = vand.u32 %v4675, 3
        %vm4680 = vcmp.lt.s32.totalorder %v4679, 2
        %vm4681 = vcmp.eq.s32.totalorder %v4679, 0
        %v4682 = vxor.u32 %v4677, 2147483648
        %v4683 = vsel %vm4681, %v4676, %v4682
        %vm4684 = vcmp.eq.s32.totalorder %v4679, 2
        %v4685 = vxor.u32 %v4676, 2147483648
        %v4686 = vsel %vm4684, %v4685, %v4677
        %v4687 = vsel %vm4680, %v4683, %v4686
        %v4688 = vsel %vm4678, nan, %v4687
        %v4689 = vand.u32 2147483647, %v4561
        %vm4690 = vcmp.le.f32.partialorder %v4689, 0.7853982
        %vm4691 = vcmp.lt.s32.totalorder %v4561, 0
        %v4692 = vand.u32 %v4561, 2139095040
        %v4693 = vshrl.u32 %v4692, 23
        %v4694 = vsub.s32 %v4693, 127
        %v4695 = vand.u32 2147483647, %v4561
        %v4696 = vand.u32 %v4695, 8388607
        %v4697 = vor.u32 %v4696, 8388608
        %v4698 = vsub.s32 0, %v4697
        %v4699 = vadd.s32 %v4694, 1
        %vm4700 = vcmp.gt.s32.totalorder %v4699, 0
        %v4701 = vsel %vm4700, %v4699, 0
        %v4702 = vshrl.u32 %v4701, 5
        %v4703 = vand.u32 %v4701, 31
        %v4704 = vsub.s32 32, %v4703
        %v4705 = vshrl.u32 683565275, %v4704
        %v4706 = vshll.u32 683565275, %v4703
        %v4707 = vshrl.u32 2475754826, %v4704
        %v4708 = vor.u32 %v4706, %v4707
        %v4709 = vshll.u32 2475754826, %v4703
        %v4710 = vshrl.u32 2131351028, %v4704
        %v4711 = vor.u32 %v4709, %v4710
        %v4712 = vshll.u32 2131351028, %v4703
        %v4713 = vshrl.u32 2102212464, %v4704
        %v4714 = vor.u32 %v4712, %v4713
        %v4715 = vshll.u32 2102212464, %v4703
        %v4716 = vshrl.u32 920167782, %v4704
        %v4717 = vor.u32 %v4715, %v4716
        %v4718 = vshll.u32 920167782, %v4703
        %v4719 = vshrl.u32 1326507024, %v4704
        %v4720 = vor.u32 %v4718, %v4719
        %vm4721 = vcmp.lt.s32.totalorder %v4702, 1
        %vm4722 = vcmp.lt.s32.totalorder %v4702, 2
        %vm4723 = vcmp.lt.s32.totalorder %v4702, 3
        %vm4724 = vcmp.lt.s32.totalorder %v4702, 4
        %v4725 = vsel %vm4721, %v4705, %v4708
        %v4726 = vsel %vm4724, %v4714, 2102212464
        %v4727 = vsel %vm4723, %v4711, %v4726
        %v4728 = vsel %vm4722, %v4725, %v4727
        %v4729 = vsel %vm4721, %v4708, %v4711
        %v4730 = vsel %vm4724, %v4717, 920167782
        %v4731 = vsel %vm4723, %v4714, %v4730
        %v4732 = vsel %vm4722, %v4729, %v4731
        %v4733 = vsel %vm4721, %v4711, %v4714
        %v4734 = vsel %vm4724, %v4720, 1326507024
        %v4735 = vsel %vm4723, %v4717, %v4734
        %v4736 = vsel %vm4722, %v4733, %v4735
        %v4737 = vshll.u32 %v4697, 8
        %v4738 = vmul.u32.u64.compose %v4737, %v4736
        %v4739 = vextract.low.u32 %v4738
        %v4740 = vextract.high.u32 %v4738
        %v4741 = vmul.u32.u64.compose %v4737, %v4732
        %v4742 = vextract.low.u32 %v4741
        %v4743 = vextract.high.u32 %v4741
        %v4744 = vmul.u32 %v4737, %v4728
        %v4745 = vadd.s32 %v4740, %v4742
        %vm4746 = vc.u32 %v4740, %v4742
        %v4747 = vadd.s32 %v4743, 1
        %v4748 = vsel %vm4746, %v4747, %v4743
        %v4749 = vadd.s32 %v4744, %v4748
        %v4750 = vadd.s32 %v4749, 536870912
        %v4751 = vshrl.u32 %v4750, 30
        %v4752 = vshll.u32 %v4751, 30
        %v4753 = vsub.s32 %v4749, %v4752
        %vm4754 = vcmp.lt.s32.totalorder %v4753, 0
        %v4755 = vsub.s32 0, %v4753
        %v4756 = vsel %vm4754, %v4755, %v4753
        %v4757 = vclz %v4756
        %v4758 = vsub.s32 %v4757, 2
        %vm4759 = vcmp.gt.s32.totalorder 0, %v4758
        %v4760 = vsel %vm4759, 0, %v4758
        %v4761 = vsub.s32 32, %v4760
        %v4762 = vshll.u32 %v4753, %v4760
        %v4763 = vshrl.u32 %v4745, %v4761
        %v4764 = vor.u32 %v4762, %v4763
        %v4765 = vsub.s32 4294967266, %v4760
        %v4766 = vadd.s32 %v4765, 127
        %v4767 = vshll.u32 %v4766, 23
        %v4768 = vor.u32 4788187, %v4767
        %v4769 = vand.u32 2147483647, %v4768
        %v4771 = vcvt.s32.f32 %v4764
        %v4772 = vmul.f32 %v4771, %v4769
        %v4773 = vxor.u32 %v4772, 2147483648
        %v4774 = vsel %vm4691, %v4773, %v4772
        %v4775 = vsub.s32 4, %v4751
        %v4776 = vsel %vm4691, %v4775, %v4751
        %v4777 = vsel %vm4690, %v4561, %v4774
        %v4778 = vsel %vm4690, 0, %v4776
        %v4779 = vcosq.f32.pop %v4777
        %v4780 = vsinq.f32.pop %v4777
        %vm4781 = vweird.f32 %v4561
        %v4782 = vand.u32 %v4778, 3
        %vm4783 = vcmp.lt.s32.totalorder %v4782, 2
        %vm4784 = vcmp.eq.s32.totalorder %v4782, 0
        %v4785 = vxor.u32 %v4780, 2147483648
        %v4786 = vsel %vm4784, %v4779, %v4785
        %vm4787 = vcmp.eq.s32.totalorder %v4782, 2
        %v4788 = vxor.u32 %v4779, 2147483648
        %v4789 = vsel %vm4787, %v4788, %v4780
        %v4790 = vsel %vm4783, %v4786, %v4789
        %v4791 = vsel %vm4781, nan, %v4790
        %v4792 = vand.u32 2147483647, %v4563
        %vm4793 = vcmp.le.f32.partialorder %v4792, 0.7853982
        %vm4794 = vcmp.lt.s32.totalorder %v4563, 0
        %v4795 = vand.u32 %v4563, 2139095040
        %v4796 = vshrl.u32 %v4795, 23
        %v4797 = vsub.s32 %v4796, 127
        %v4798 = vand.u32 2147483647, %v4563
        %v4799 = vand.u32 %v4798, 8388607
        %v4800 = vor.u32 %v4799, 8388608
        %v4801 = vsub.s32 0, %v4800
        %v4802 = vadd.s32 %v4797, 1
        %vm4803 = vcmp.gt.s32.totalorder %v4802, 0
        %v4804 = vsel %vm4803, %v4802, 0
        %v4805 = vshrl.u32 %v4804, 5
        %v4806 = vand.u32 %v4804, 31
        %v4807 = vsub.s32 32, %v4806
        %v4808 = vshrl.u32 683565275, %v4807
        %v4809 = vshll.u32 683565275, %v4806
        %v4810 = vshrl.u32 2475754826, %v4807
        %v4811 = vor.u32 %v4809, %v4810
        %v4812 = vshll.u32 2475754826, %v4806
        %v4813 = vshrl.u32 2131351028, %v4807
        %v4814 = vor.u32 %v4812, %v4813
        %v4815 = vshll.u32 2131351028, %v4806
        %v4816 = vshrl.u32 2102212464, %v4807
        %v4817 = vor.u32 %v4815, %v4816
        %v4818 = vshll.u32 2102212464, %v4806
        %v4819 = vshrl.u32 920167782, %v4807
        %v4820 = vor.u32 %v4818, %v4819
        %v4821 = vshll.u32 920167782, %v4806
        %v4822 = vshrl.u32 1326507024, %v4807
        %v4823 = vor.u32 %v4821, %v4822
        %vm4824 = vcmp.lt.s32.totalorder %v4805, 1
        %vm4825 = vcmp.lt.s32.totalorder %v4805, 2
        %vm4826 = vcmp.lt.s32.totalorder %v4805, 3
        %vm4827 = vcmp.lt.s32.totalorder %v4805, 4
        %v4828 = vsel %vm4824, %v4808, %v4811
        %v4829 = vsel %vm4827, %v4817, 2102212464
        %v4830 = vsel %vm4826, %v4814, %v4829
        %v4831 = vsel %vm4825, %v4828, %v4830
        %v4832 = vsel %vm4824, %v4811, %v4814
        %v4833 = vsel %vm4827, %v4820, 920167782
        %v4834 = vsel %vm4826, %v4817, %v4833
        %v4835 = vsel %vm4825, %v4832, %v4834
        %v4836 = vsel %vm4824, %v4814, %v4817
        %v4837 = vsel %vm4827, %v4823, 1326507024
        %v4838 = vsel %vm4826, %v4820, %v4837
        %v4839 = vsel %vm4825, %v4836, %v4838
        %v4840 = vshll.u32 %v4800, 8
        %v4841 = vmul.u32.u64.compose %v4840, %v4839
        %v4842 = vextract.low.u32 %v4841
        %v4843 = vextract.high.u32 %v4841
        %v4844 = vmul.u32.u64.compose %v4840, %v4835
        %v4845 = vextract.low.u32 %v4844
        %v4846 = vextract.high.u32 %v4844
        %v4847 = vmul.u32 %v4840, %v4831
        %v4848 = vadd.s32 %v4843, %v4845
        %vm4849 = vc.u32 %v4843, %v4845
        %v4850 = vadd.s32 %v4846, 1
        %v4851 = vsel %vm4849, %v4850, %v4846
        %v4852 = vadd.s32 %v4847, %v4851
        %v4853 = vadd.s32 %v4852, 536870912
        %v4854 = vshrl.u32 %v4853, 30
        %v4855 = vshll.u32 %v4854, 30
        %v4856 = vsub.s32 %v4852, %v4855
        %vm4857 = vcmp.lt.s32.totalorder %v4856, 0
        %v4858 = vsub.s32 0, %v4856
        %v4859 = vsel %vm4857, %v4858, %v4856
        %v4860 = vclz %v4859
        %v4861 = vsub.s32 %v4860, 2
        %vm4862 = vcmp.gt.s32.totalorder 0, %v4861
        %v4863 = vsel %vm4862, 0, %v4861
        %v4864 = vsub.s32 32, %v4863
        %v4865 = vshll.u32 %v4856, %v4863
        %v4866 = vshrl.u32 %v4848, %v4864
        %v4867 = vor.u32 %v4865, %v4866
        %v4868 = vsub.s32 4294967266, %v4863
        %v4869 = vadd.s32 %v4868, 127
        %v4870 = vshll.u32 %v4869, 23
        %v4871 = vor.u32 4788187, %v4870
        %v4872 = vand.u32 2147483647, %v4871
        %v4874 = vcvt.s32.f32 %v4867
        %v4875 = vmul.f32 %v4874, %v4872
        %v4876 = vxor.u32 %v4875, 2147483648
        %v4877 = vsel %vm4794, %v4876, %v4875
        %v4878 = vsub.s32 4, %v4854
        %v4879 = vsel %vm4794, %v4878, %v4854
        %v4880 = vsel %vm4793, %v4563, %v4877
        %v4881 = vsel %vm4793, 0, %v4879
        %v4882 = vcosq.f32.pop %v4880
        %v4883 = vsinq.f32.pop %v4880
        %vm4884 = vweird.f32 %v4563
        %v4885 = vand.u32 %v4881, 3
        %vm4886 = vcmp.lt.s32.totalorder %v4885, 2
        %vm4887 = vcmp.eq.s32.totalorder %v4885, 0
        %v4888 = vxor.u32 %v4883, 2147483648
        %v4889 = vsel %vm4887, %v4882, %v4888
        %vm4890 = vcmp.eq.s32.totalorder %v4885, 2
        %v4891 = vxor.u32 %v4882, 2147483648
        %v4892 = vsel %vm4890, %v4891, %v4883
        %v4893 = vsel %vm4886, %v4889, %v4892
        %v4894 = vsel %vm4884, nan, %v4893
        %v4895 = vand.u32 2147483647, %v4565
        %vm4896 = vcmp.le.f32.partialorder %v4895, 0.7853982
        %vm4897 = vcmp.lt.s32.totalorder %v4565, 0
        %v4898 = vand.u32 %v4565, 2139095040
        %v4899 = vshrl.u32 %v4898, 23
        %v4900 = vsub.s32 %v4899, 127
        %v4901 = vand.u32 2147483647, %v4565
        %v4902 = vand.u32 %v4901, 8388607
        %v4903 = vor.u32 %v4902, 8388608
        %v4904 = vsub.s32 0, %v4903
        %v4905 = vadd.s32 %v4900, 1
        %vm4906 = vcmp.gt.s32.totalorder %v4905, 0
        %v4907 = vsel %vm4906, %v4905, 0
        %v4908 = vshrl.u32 %v4907, 5
        %v4909 = vand.u32 %v4907, 31
        %v4910 = vsub.s32 32, %v4909
        %v4911 = vshrl.u32 683565275, %v4910
        %v4912 = vshll.u32 683565275, %v4909
        %v4913 = vshrl.u32 2475754826, %v4910
        %v4914 = vor.u32 %v4912, %v4913
        %v4915 = vshll.u32 2475754826, %v4909
        %v4916 = vshrl.u32 2131351028, %v4910
        %v4917 = vor.u32 %v4915, %v4916
        %v4918 = vshll.u32 2131351028, %v4909
        %v4919 = vshrl.u32 2102212464, %v4910
        %v4920 = vor.u32 %v4918, %v4919
        %v4921 = vshll.u32 2102212464, %v4909
        %v4922 = vshrl.u32 920167782, %v4910
        %v4923 = vor.u32 %v4921, %v4922
        %v4924 = vshll.u32 920167782, %v4909
        %v4925 = vshrl.u32 1326507024, %v4910
        %v4926 = vor.u32 %v4924, %v4925
        %vm4927 = vcmp.lt.s32.totalorder %v4908, 1
        %vm4928 = vcmp.lt.s32.totalorder %v4908, 2
        %vm4929 = vcmp.lt.s32.totalorder %v4908, 3
        %vm4930 = vcmp.lt.s32.totalorder %v4908, 4
        %v4931 = vsel %vm4927, %v4911, %v4914
        %v4932 = vsel %vm4930, %v4920, 2102212464
        %v4933 = vsel %vm4929, %v4917, %v4932
        %v4934 = vsel %vm4928, %v4931, %v4933
        %v4935 = vsel %vm4927, %v4914, %v4917
        %v4936 = vsel %vm4930, %v4923, 920167782
        %v4937 = vsel %vm4929, %v4920, %v4936
        %v4938 = vsel %vm4928, %v4935, %v4937
        %v4939 = vsel %vm4927, %v4917, %v4920
        %v4940 = vsel %vm4930, %v4926, 1326507024
        %v4941 = vsel %vm4929, %v4923, %v4940
        %v4942 = vsel %vm4928, %v4939, %v4941
        %v4943 = vshll.u32 %v4903, 8
        %v4944 = vmul.u32.u64.compose %v4943, %v4942
        %v4945 = vextract.low.u32 %v4944
        %v4946 = vextract.high.u32 %v4944
        %v4947 = vmul.u32.u64.compose %v4943, %v4938
        %v4948 = vextract.low.u32 %v4947
        %v4949 = vextract.high.u32 %v4947
        %v4950 = vmul.u32 %v4943, %v4934
        %v4951 = vadd.s32 %v4946, %v4948
        %vm4952 = vc.u32 %v4946, %v4948
        %v4953 = vadd.s32 %v4949, 1
        %v4954 = vsel %vm4952, %v4953, %v4949
        %v4955 = vadd.s32 %v4950, %v4954
        %v4956 = vadd.s32 %v4955, 536870912
        %v4957 = vshrl.u32 %v4956, 30
        %v4958 = vshll.u32 %v4957, 30
        %v4959 = vsub.s32 %v4955, %v4958
        %vm4960 = vcmp.lt.s32.totalorder %v4959, 0
        %v4961 = vsub.s32 0, %v4959
        %v4962 = vsel %vm4960, %v4961, %v4959
        %v4963 = vclz %v4962
        %v4964 = vsub.s32 %v4963, 2
        %vm4965 = vcmp.gt.s32.totalorder 0, %v4964
        %v4966 = vsel %vm4965, 0, %v4964
        %v4967 = vsub.s32 32, %v4966
        %v4968 = vshll.u32 %v4959, %v4966
        %v4969 = vshrl.u32 %v4951, %v4967
        %v4970 = vor.u32 %v4968, %v4969
        %v4971 = vsub.s32 4294967266, %v4966
        %v4972 = vadd.s32 %v4971, 127
        %v4973 = vshll.u32 %v4972, 23
        %v4974 = vor.u32 4788187, %v4973
        %v4975 = vand.u32 2147483647, %v4974
        %v4977 = vcvt.s32.f32 %v4970
        %v4978 = vmul.f32 %v4977, %v4975
        %v4979 = vxor.u32 %v4978, 2147483648
        %v4980 = vsel %vm4897, %v4979, %v4978
        %v4981 = vsub.s32 4, %v4957
        %v4982 = vsel %vm4897, %v4981, %v4957
        %v4983 = vsel %vm4896, %v4565, %v4980
        %v4984 = vsel %vm4896, 0, %v4982
        %v4985 = vcosq.f32.pop %v4983
        %v4986 = vsinq.f32.pop %v4983
        %vm4987 = vweird.f32 %v4565
        %v4988 = vand.u32 %v4984, 3
        %vm4989 = vcmp.lt.s32.totalorder %v4988, 2
        %vm4990 = vcmp.eq.s32.totalorder %v4988, 0
        %v4991 = vxor.u32 %v4986, 2147483648
        %v4992 = vsel %vm4990, %v4985, %v4991
        %vm4993 = vcmp.eq.s32.totalorder %v4988, 2
        %v4994 = vxor.u32 %v4985, 2147483648
        %v4995 = vsel %vm4993, %v4994, %v4986
        %v4996 = vsel %vm4989, %v4992, %v4995
        %v4997 = vsel %vm4987, nan, %v4996
        %v4998 = vld [vmem:[%s8] sm:$0x1]
        %v5000 = vlaneseq
        %v5001 = vshrl.u32 %v5000, 7
        %v5002 = vsub.s32 0, %v5001
        %v5003 = vrot.slane %v4998, %v5002
        %v5005 = vmul.f32 %v4582, %v5003
        %v5006 = vmul.f32 %v4583, %v5003
        %v5007 = vmul.f32 %v4584, %v5003
        %v5008 = vmul.f32 %v4585, %v5003
        %5009 = vadd.xlane.f32.xlu0 %v5005
        %v5010 = vpop.xlane.xlu0 %5009
        %5011 = vadd.xlane.f32.xlu0 %v5006
        %v5012 = vpop.xlane.xlu0 %5011
        %5013 = vadd.xlane.f32.xlu0 %v5007
        %v5014 = vpop.xlane.xlu0 %5013
        %5015 = vadd.xlane.f32.xlu0 %v5008
        %v5016 = vpop.xlane.xlu0 %5015
        %v5017 = vld [vmem:[%s9] sm:$0x1]
        %v5019 = vlaneseq
        %v5020 = vshrl.u32 %v5019, 7
        %v5021 = vsub.s32 0, %v5020
        %v5022 = vrot.slane %v5017, %v5021
        %v5024 = vmul.f32 %v4688, %v5022
        %v5025 = vmul.f32 %v4791, %v5022
        %v5026 = vmul.f32 %v4894, %v5022
        %v5027 = vmul.f32 %v4997, %v5022
        %5028 = vadd.xlane.f32.xlu0 %v5024
        %v5029 = vpop.xlane.xlu0 %5028
        %5030 = vadd.xlane.f32.xlu0 %v5025
        %v5031 = vpop.xlane.xlu0 %5030
        %5032 = vadd.xlane.f32.xlu0 %v5026
        %v5033 = vpop.xlane.xlu0 %5032
        %5034 = vadd.xlane.f32.xlu0 %v5027
        %v5035 = vpop.xlane.xlu0 %5034
        %v5036 = vadd.f32 %v5010, %v5029
        %v5037 = vadd.f32 %v5012, %v5031
        %v5038 = vadd.f32 %v5014, %v5033
        %v5039 = vadd.f32 %v5016, %v5035
        %v5040 = vld [vmem:[#allocation2] sm:$0x1]
        %v5042 = vlaneseq
        %v5043 = vshrl.u32 %v5042, 7
        %v5044 = vsub.s32 0, %v5043
        %v5045 = vrot.slane %v5040, %v5044
        %v5047 = vadd.f32 %v5036, %v5045
        %v5048 = vadd.f32 %v5037, %v5045
        %v5049 = vadd.f32 %v5038, %v5045
        %v5050 = vadd.f32 %v5039, %v5045
        %vm5051 = vcmask 7168
        %5052 = vst.msk [vmem:[%s434] sm:$0xff] %vm5051, %v5047
        %5053 = vst.msk [vmem:[%s434 + $0x8] sm:$0xff] %vm5051, %v5048
        %5054 = vst.msk [vmem:[%s434 + $0x10] sm:$0xff] %vm5051, %v5049
        %5055 = vst.msk [vmem:[%s434 + $0x18] sm:$0xff] %vm5051, %v5050
        %s5056 = smul.u32 4, %s26
        %p5057 = scmp.lt.s32.totalorder %s5056, 7
        %s5058 = scalar_select %p5057, %s5056, 7
        %s5059 = smul.addr %s5058, 8
        %s5060 = scalar_lea.vmem %s11, %s5059
        // Predicated region
        $region77: #{tpu_custom_call.1} parent=63 // pred_check
          %p5061 = pneg %p280
        $region78: #{tpu_custom_call.1} parent=63 // pred_check_branch
          %5063 = sbr.rel (%p5061) target = $region80
        $region79: #{tpu_custom_call.1} parent=63 // pred_region
          %s5064 = smul.u32 4, %s26
        $region80: #{tpu_custom_call.1} parent=63 // pred_fallthru
          _
      $region64: #{tpu_custom_call.1} parent=5 // pred_fallthru
        _
      %p5065 = scmp.le.s32.totalorder 2, %s21
      // Predicated region
      $region81: #{tpu_custom_call.1} parent=5 // pred_check
        %p5066 = pneg %p5065
      $region82: #{tpu_custom_call.1} parent=5 // pred_check_branch
        %5068 = sbr.rel (%p5066) target = $region84
      $region83: #{tpu_custom_call.1} parent=5 // pred_region
        %s5069 = ssub.s32 %s21, 2
        // Predicated region
        $region85: #{tpu_custom_call.1} parent=83 // pred_check
          %p5070 = pneg %p286
        $region86: #{tpu_custom_call.1} parent=83 // pred_check_branch
          %5072 = sbr.rel (%p5070) target = $region88
        $region87: #{tpu_custom_call.1} parent=83 // pred_region
          %s5073 = smul.u32 4, %s27
          %p5074 = scmp.lt.s32.totalorder %s5073, 7
          %s5075 = scalar_select %p5074, %s5073, 7
          %s5076 = smul.addr %s5075, 8
          %s5077 = scalar_lea.vmem %s11, %s5076
        $region88: #{tpu_custom_call.1} parent=83 // pred_fallthru
          _
      $region84: #{tpu_custom_call.1} parent=5 // pred_fallthru
        _
    $region6: #{tpu_custom_call.1} parent=1 // loop_footer
      %s25 = sadd.s32 1, %s21
    $region7: #{tpu_custom_call.1} parent=1 // loop_footer_branch
      %20 = sbr.rel target = $region3
    $region8: #{tpu_custom_call.1} parent=1 // loop_exit
      _
    %5078 = vsyncpa [#allocation4], 1
    %s5079 = scalar_lea.sflag [#allocation4], 1
    %5080 = vsyncpa %s5079, 1
    %5081 = vsyncpa [#allocation6], 1

</llo_original>
